<compile_context>
chip_gen: v7x
topology: tpu7x:2x2x1
jax: 0.10.0
libtpu: 0.0.40
codegen_flags: <defaults>
</compile_context>

<pallas_src>
import functools

import jax
import jax.numpy as jnp
from jax.experimental import pallas as pl
from jax.experimental.pallas import tpu as pltpu

# Layer widths of DQN_3.
LAYER_SIZES = [64, 512, 1024, 512, 256, 64, 3]
LANE = 128
SUBLANE = 8


def _round_up(x, m):
    return ((x + m - 1) // m) * m


def _mlp_kernel(x_ref, *refs):
    """Fused MLP forward for one batch tile.

    refs = (w1, b1, w2, b2, ..., w7, b7, out_ref)
    Weights are bf16 (or f32), biases f32.  Each matmul runs on the MXU with
    f32 accumulation; bias add + ReLU stay in f32 on the VPU; the activation
    is narrowed back to the weight dtype before the next MXU pass.
    """
    out_ref = refs[-1]
    param_refs = refs[:-1]
    n_layers = len(param_refs) // 2

    w_dtype = param_refs[0].dtype
    h = x_ref[...].astype(w_dtype)
    for layer in range(n_layers):
        w = param_refs[2 * layer][...]
        b = param_refs[2 * layer + 1][...]
        acc = jnp.dot(h, w, preferred_element_type=jnp.float32) + b
        if layer != n_layers - 1:
            h = jnp.maximum(acc, 0.0).astype(w.dtype)  # back to bf16 for next MXU pass
        else:
            h = acc                                    # final layer: keep f32, no ReLU
    out_ref[...] = h.astype(out_ref.dtype)


def prepare_params(params, *, use_bf16=True):
    """Cast weights for the MXU and lane-pad the final layer to 128 outputs.

    params: list of (W, b) with W: (in, out), b: (out,) or (1, out).
    Returns kernel-ready list of (W_k, b_k): W_k bf16/f32, b_k f32 (1, out),
    with the last layer zero-padded to a multiple of 128 output features.
    """
    compute_dtype = jnp.bfloat16 if use_bf16 else jnp.float32
    prepared = []
    n_layers = len(params)
    for li, (w, b) in enumerate(params):
        w = jnp.asarray(w)
        b = jnp.asarray(b).reshape(1, -1)
        if li == n_layers - 1:
            pad = (-w.shape[1]) % LANE
            if pad:
                w = jnp.pad(w, ((0, 0), (0, pad)))
                b = jnp.pad(b, ((0, 0), (0, pad)))
        prepared.append((w.astype(compute_dtype), b.astype(jnp.float32)))
    return prepared


def dqn3_forward(x, params, *, batch_tile=128, use_bf16=True):
    """DQN_3 forward pass with a fused Pallas TPU kernel.

    x:      (B, n_inputs) float32
    params: list of (W, b) with W: (in, out), b: (1, out) or (out,)
    Returns (B, 3) float32.
    """
    B, n_in = x.shape
    n_out = params[-1][0].shape[1]

    prepared = prepare_params(params, use_bf16=use_bf16)
    n_out_pad = prepared[-1][0].shape[1]

    # Batch tiling: use the requested tile when the batch is big enough,
    # otherwise one sublane-aligned tile (grid collapses to a single step).
    # Pad the batch with zero rows up to a tile multiple; sliced off below.
    tile = min(batch_tile, _round_up(B, SUBLANE))
    B_pad = _round_up(B, tile)

    x_k = x.astype(jnp.float32)
    if B_pad != B:
        x_k = jnp.pad(x_k, ((0, B_pad - B), (0, 0)))

    # x / out tiled over batch; weights and biases are whole-array blocks
    # (constant block index -> stay resident in VMEM across grid steps).
    flat_params = []
    in_specs = [pl.BlockSpec((tile, n_in), lambda i: (i, 0))]
    for w, b in prepared:
        flat_params += [w, b]
        in_specs.append(pl.BlockSpec(w.shape, lambda i: (0, 0)))
        in_specs.append(pl.BlockSpec(b.shape, lambda i: (0, 0)))
    out_spec = pl.BlockSpec((tile, n_out_pad), lambda i: (i, 0))

    out = pl.pallas_call(
        _mlp_kernel,
        out_shape=jax.ShapeDtypeStruct((B_pad, n_out_pad), jnp.float32),
        grid_spec=pltpu.PrefetchScalarGridSpec(
            num_scalar_prefetch=0,
            grid=(B_pad // tile,),
            in_specs=in_specs,
            out_specs=out_spec,
        ),
        compiler_params=pltpu.CompilerParams(
            dimension_semantics=("parallel",),
            vmem_limit_bytes=32 * 1024 * 1024,
        ),
    )(x_k, *flat_params)

    # Drop batch padding and the zero-padded output lanes.
    return out[:B, :n_out]


def init_params(key, n_inputs):
    """Deterministic synthetic initialization (uniform, fan-in scaled)."""
    params = []
    sizes = [n_inputs] + LAYER_SIZES
    for li in range(len(LAYER_SIZES)):
        fan_in, fan_out = sizes[li], sizes[li + 1]
        key, kw, kb = jax.random.split(key, 3)
        bound = 1.0 / jnp.sqrt(fan_in)
        w = jax.random.uniform(kw, (fan_in, fan_out), jnp.float32, -bound, bound)
        b = jax.random.uniform(kb, (1, fan_out), jnp.float32, -bound, bound)
        params.append((w, b))
    return params


def reference_forward(x, params, *, use_bf16=True):
    """Plain-JAX reference emulating the same bf16-matmul / f32-accum path."""
    cd = jnp.bfloat16 if use_bf16 else jnp.float32
    h = x.astype(cd)
    for li, (w, b) in enumerate(params):
        y = jnp.dot(h.astype(cd), w.astype(cd),
                    preferred_element_type=jnp.float32)
        y = y + b.astype(jnp.float32).reshape(1, -1)
        if li != len(params) - 1:
            y = jnp.maximum(y, 0.0)
            h = y.astype(cd)
        else:
            h = y
    return h


if __name__ == "__main__":
    key = jax.random.PRNGKey(0)
    n_inputs = 32

    kx, kp = jax.random.split(key)
    params = init_params(kp, n_inputs)

    forward = jax.jit(
        functools.partial(dqn3_forward, batch_tile=128, use_bf16=True))

    # Small inference-style batch: grid collapses to a single fused step.
    x_small = jax.random.normal(kx, (8, n_inputs), jnp.float32)
    out_small = jax.block_until_ready(forward(x_small, params))
    ref_small = reference_forward(x_small, params)
    assert out_small.shape == (8, 3), out_small.shape
    assert jnp.allclose(out_small, ref_small, atol=2e-2, rtol=2e-2), (
        "mismatch vs reference (small batch): max abs err "
        f"{float(jnp.max(jnp.abs(out_small - ref_small)))}"
    )

    # Larger batch exercising the tiled (multi-grid-step) path.
    x_big = jax.random.normal(kx, (256, n_inputs), jnp.float32)
    out_big = jax.block_until_ready(forward(x_big, params))
    ref_big = reference_forward(x_big, params)
    assert out_big.shape == (256, 3), out_big.shape
    assert jnp.allclose(out_big, ref_big, atol=2e-2, rtol=2e-2), (
        "mismatch vs reference (big batch): max abs err "
        f"{float(jnp.max(jnp.abs(out_big - ref_big)))}"
    )

    print("KERNEL_OK")
</pallas_src>

<mosaic_0001>
module attributes {stable_mosaic.version = 11 : i64} {
  func.func @_mlp_kernel(%arg0: i32, %arg1: memref<8x32xf32, #tpu.memory_space<vmem>>, %arg2: memref<32x64xbf16, #tpu.memory_space<vmem>>, %arg3: memref<1x64xf32, #tpu.memory_space<vmem>>, %arg4: memref<64x512xbf16, #tpu.memory_space<vmem>>, %arg5: memref<1x512xf32, #tpu.memory_space<vmem>>, %arg6: memref<512x1024xbf16, #tpu.memory_space<vmem>>, %arg7: memref<1x1024xf32, #tpu.memory_space<vmem>>, %arg8: memref<1024x512xbf16, #tpu.memory_space<vmem>>, %arg9: memref<1x512xf32, #tpu.memory_space<vmem>>, %arg10: memref<512x256xbf16, #tpu.memory_space<vmem>>, %arg11: memref<1x256xf32, #tpu.memory_space<vmem>>, %arg12: memref<256x64xbf16, #tpu.memory_space<vmem>>, %arg13: memref<1x64xf32, #tpu.memory_space<vmem>>, %arg14: memref<64x128xbf16, #tpu.memory_space<vmem>>, %arg15: memref<1x128xf32, #tpu.memory_space<vmem>>, %arg16: memref<8x128xf32, #tpu.memory_space<vmem>>) attributes {dimension_semantics = [#tpu.dimension_semantics<parallel>], iteration_bounds = array<i64: 1>, scalar_prefetch = 0 : i64, scratch_operands = 0 : i64, tpu.core_type = #tpu.core_type<tc>, window_params = [{transform_indices = @transform_0, window_bounds = array<i64: 8, 32>}, {pipeline_mode = #tpu.pipeline_mode<synchronous>, transform_indices = @transform_1, window_bounds = array<i64: 32, 64>}, {pipeline_mode = #tpu.pipeline_mode<synchronous>, transform_indices = @transform_2, window_bounds = array<i64: 1, 64>}, {pipeline_mode = #tpu.pipeline_mode<synchronous>, transform_indices = @transform_3, window_bounds = array<i64: 64, 512>}, {pipeline_mode = #tpu.pipeline_mode<synchronous>, transform_indices = @transform_4, window_bounds = array<i64: 1, 512>}, {pipeline_mode = #tpu.pipeline_mode<synchronous>, transform_indices = @transform_5, window_bounds = array<i64: 512, 1024>}, {pipeline_mode = #tpu.pipeline_mode<synchronous>, transform_indices = @transform_6, window_bounds = array<i64: 1, 1024>}, {pipeline_mode = #tpu.pipeline_mode<synchronous>, transform_indices = @transform_7, window_bounds = array<i64: 1024, 512>}, {pipeline_mode = #tpu.pipeline_mode<synchronous>, transform_indices = @transform_8, window_bounds = array<i64: 1, 512>}, {pipeline_mode = #tpu.pipeline_mode<synchronous>, transform_indices = @transform_9, window_bounds = array<i64: 512, 256>}, {pipeline_mode = #tpu.pipeline_mode<synchronous>, transform_indices = @transform_10, window_bounds = array<i64: 1, 256>}, {pipeline_mode = #tpu.pipeline_mode<synchronous>, transform_indices = @transform_11, window_bounds = array<i64: 256, 64>}, {pipeline_mode = #tpu.pipeline_mode<synchronous>, transform_indices = @transform_12, window_bounds = array<i64: 1, 64>}, {pipeline_mode = #tpu.pipeline_mode<synchronous>, transform_indices = @transform_13, window_bounds = array<i64: 64, 128>}, {pipeline_mode = #tpu.pipeline_mode<synchronous>, transform_indices = @transform_14, window_bounds = array<i64: 1, 128>}, {transform_indices = @transform_15, window_bounds = array<i64: 8, 128>}]} {
    %c0 = arith.constant 0 : index
    %c0_0 = arith.constant 0 : index
    %0 = vector.load %arg1[%c0, %c0_0] : memref<8x32xf32, #tpu.memory_space<vmem>>, vector<8x32xf32>
    %1 = arith.truncf %0 : vector<8x32xf32> to vector<8x32xbf16>
    %c0_1 = arith.constant 0 : index
    %c0_2 = arith.constant 0 : index
    %2 = vector.load %arg2[%c0_1, %c0_2] : memref<32x64xbf16, #tpu.memory_space<vmem>>, vector<32x64xbf16>
    %c0_3 = arith.constant 0 : index
    %c0_4 = arith.constant 0 : index
    %3 = vector.load %arg3[%c0_3, %c0_4] : memref<1x64xf32, #tpu.memory_space<vmem>>, vector<1x64xf32>
    %cst = arith.constant dense<0.000000e+00> : vector<8x64xf32>
    %4 = tpu.matmul %1, %2, %cst {dimension_numbers = #tpu.dot_dimension_numbers<[1], [0], [0], [1], [0, 0, 1, 1], [], []>} : vector<8x32xbf16>, vector<32x64xbf16>, vector<8x64xf32> -> vector<8x64xf32>
    %5 = vector.broadcast %3 : vector<1x64xf32> to vector<8x64xf32>
    %6 = arith.addf %4, %5 : vector<8x64xf32>
    %cst_5 = arith.constant 0.000000e+00 : f32
    %7 = vector.broadcast %cst_5 : f32 to vector<8x64xf32>
    %8 = arith.maximumf %6, %7 : vector<8x64xf32>
    %9 = arith.truncf %8 : vector<8x64xf32> to vector<8x64xbf16>
    %c0_6 = arith.constant 0 : index
    %c0_7 = arith.constant 0 : index
    %10 = vector.load %arg4[%c0_6, %c0_7] : memref<64x512xbf16, #tpu.memory_space<vmem>>, vector<64x512xbf16>
    %c0_8 = arith.constant 0 : index
    %c0_9 = arith.constant 0 : index
    %11 = vector.load %arg5[%c0_8, %c0_9] : memref<1x512xf32, #tpu.memory_space<vmem>>, vector<1x512xf32>
    %cst_10 = arith.constant dense<0.000000e+00> : vector<8x512xf32>
    %12 = tpu.matmul %9, %10, %cst_10 {dimension_numbers = #tpu.dot_dimension_numbers<[1], [0], [0], [1], [0, 0, 1, 1], [], []>} : vector<8x64xbf16>, vector<64x512xbf16>, vector<8x512xf32> -> vector<8x512xf32>
    %13 = vector.broadcast %11 : vector<1x512xf32> to vector<8x512xf32>
    %14 = arith.addf %12, %13 : vector<8x512xf32>
    %cst_11 = arith.constant 0.000000e+00 : f32
    %15 = vector.broadcast %cst_11 : f32 to vector<8x512xf32>
    %16 = arith.maximumf %14, %15 : vector<8x512xf32>
    %17 = arith.truncf %16 : vector<8x512xf32> to vector<8x512xbf16>
    %c0_12 = arith.constant 0 : index
    %c0_13 = arith.constant 0 : index
    %18 = vector.load %arg6[%c0_12, %c0_13] : memref<512x1024xbf16, #tpu.memory_space<vmem>>, vector<512x1024xbf16>
    %c0_14 = arith.constant 0 : index
    %c0_15 = arith.constant 0 : index
    %19 = vector.load %arg7[%c0_14, %c0_15] : memref<1x1024xf32, #tpu.memory_space<vmem>>, vector<1x1024xf32>
    %cst_16 = arith.constant dense<0.000000e+00> : vector<8x1024xf32>
    %20 = tpu.matmul %17, %18, %cst_16 {dimension_numbers = #tpu.dot_dimension_numbers<[1], [0], [0], [1], [0, 0, 1, 1], [], []>} : vector<8x512xbf16>, vector<512x1024xbf16>, vector<8x1024xf32> -> vector<8x1024xf32>
    %21 = vector.broadcast %19 : vector<1x1024xf32> to vector<8x1024xf32>
    %22 = arith.addf %20, %21 : vector<8x1024xf32>
    %cst_17 = arith.constant 0.000000e+00 : f32
    %23 = vector.broadcast %cst_17 : f32 to vector<8x1024xf32>
    %24 = arith.maximumf %22, %23 : vector<8x1024xf32>
    %25 = arith.truncf %24 : vector<8x1024xf32> to vector<8x1024xbf16>
    %c0_18 = arith.constant 0 : index
    %c0_19 = arith.constant 0 : index
    %26 = vector.load %arg8[%c0_18, %c0_19] : memref<1024x512xbf16, #tpu.memory_space<vmem>>, vector<1024x512xbf16>
    %c0_20 = arith.constant 0 : index
    %c0_21 = arith.constant 0 : index
    %27 = vector.load %arg9[%c0_20, %c0_21] : memref<1x512xf32, #tpu.memory_space<vmem>>, vector<1x512xf32>
    %cst_22 = arith.constant dense<0.000000e+00> : vector<8x512xf32>
    %28 = tpu.matmul %25, %26, %cst_22 {dimension_numbers = #tpu.dot_dimension_numbers<[1], [0], [0], [1], [0, 0, 1, 1], [], []>} : vector<8x1024xbf16>, vector<1024x512xbf16>, vector<8x512xf32> -> vector<8x512xf32>
    %29 = vector.broadcast %27 : vector<1x512xf32> to vector<8x512xf32>
    %30 = arith.addf %28, %29 : vector<8x512xf32>
    %cst_23 = arith.constant 0.000000e+00 : f32
    %31 = vector.broadcast %cst_23 : f32 to vector<8x512xf32>
    %32 = arith.maximumf %30, %31 : vector<8x512xf32>
    %33 = arith.truncf %32 : vector<8x512xf32> to vector<8x512xbf16>
    %c0_24 = arith.constant 0 : index
    %c0_25 = arith.constant 0 : index
    %34 = vector.load %arg10[%c0_24, %c0_25] : memref<512x256xbf16, #tpu.memory_space<vmem>>, vector<512x256xbf16>
    %c0_26 = arith.constant 0 : index
    %c0_27 = arith.constant 0 : index
    %35 = vector.load %arg11[%c0_26, %c0_27] : memref<1x256xf32, #tpu.memory_space<vmem>>, vector<1x256xf32>
    %cst_28 = arith.constant dense<0.000000e+00> : vector<8x256xf32>
    %36 = tpu.matmul %33, %34, %cst_28 {dimension_numbers = #tpu.dot_dimension_numbers<[1], [0], [0], [1], [0, 0, 1, 1], [], []>} : vector<8x512xbf16>, vector<512x256xbf16>, vector<8x256xf32> -> vector<8x256xf32>
    %37 = vector.broadcast %35 : vector<1x256xf32> to vector<8x256xf32>
    %38 = arith.addf %36, %37 : vector<8x256xf32>
    %cst_29 = arith.constant 0.000000e+00 : f32
    %39 = vector.broadcast %cst_29 : f32 to vector<8x256xf32>
    %40 = arith.maximumf %38, %39 : vector<8x256xf32>
    %41 = arith.truncf %40 : vector<8x256xf32> to vector<8x256xbf16>
    %c0_30 = arith.constant 0 : index
    %c0_31 = arith.constant 0 : index
    %42 = vector.load %arg12[%c0_30, %c0_31] : memref<256x64xbf16, #tpu.memory_space<vmem>>, vector<256x64xbf16>
    %c0_32 = arith.constant 0 : index
    %c0_33 = arith.constant 0 : index
    %43 = vector.load %arg13[%c0_32, %c0_33] : memref<1x64xf32, #tpu.memory_space<vmem>>, vector<1x64xf32>
    %cst_34 = arith.constant dense<0.000000e+00> : vector<8x64xf32>
    %44 = tpu.matmul %41, %42, %cst_34 {dimension_numbers = #tpu.dot_dimension_numbers<[1], [0], [0], [1], [0, 0, 1, 1], [], []>} : vector<8x256xbf16>, vector<256x64xbf16>, vector<8x64xf32> -> vector<8x64xf32>
    %45 = vector.broadcast %43 : vector<1x64xf32> to vector<8x64xf32>
    %46 = arith.addf %44, %45 : vector<8x64xf32>
    %cst_35 = arith.constant 0.000000e+00 : f32
    %47 = vector.broadcast %cst_35 : f32 to vector<8x64xf32>
    %48 = arith.maximumf %46, %47 : vector<8x64xf32>
    %49 = arith.truncf %48 : vector<8x64xf32> to vector<8x64xbf16>
    %c0_36 = arith.constant 0 : index
    %c0_37 = arith.constant 0 : index
    %50 = vector.load %arg14[%c0_36, %c0_37] : memref<64x128xbf16, #tpu.memory_space<vmem>>, vector<64x128xbf16>
    %c0_38 = arith.constant 0 : index
    %c0_39 = arith.constant 0 : index
    %51 = vector.load %arg15[%c0_38, %c0_39] : memref<1x128xf32, #tpu.memory_space<vmem>>, vector<1x128xf32>
    %cst_40 = arith.constant dense<0.000000e+00> : vector<8x128xf32>
    %52 = tpu.matmul %49, %50, %cst_40 {dimension_numbers = #tpu.dot_dimension_numbers<[1], [0], [0], [1], [0, 0, 1, 1], [], []>} : vector<8x64xbf16>, vector<64x128xbf16>, vector<8x128xf32> -> vector<8x128xf32>
    %53 = vector.broadcast %51 : vector<1x128xf32> to vector<8x128xf32>
    %54 = arith.addf %52, %53 : vector<8x128xf32>
    %c0_41 = arith.constant 0 : index
    %c0_42 = arith.constant 0 : index
    %55 = vector.load %arg16[%c0_41, %c0_42] : memref<8x128xf32, #tpu.memory_space<vmem>>, vector<8x128xf32>
    tpu.vector_store %arg16[%c0_41, %c0_42], %54 {strides = array<i32>} : memref<8x128xf32, #tpu.memory_space<vmem>>, vector<8x128xf32>,
    return
  }
  func.func @transform_0(%arg0: i32) -> (i32, i32) {
    %c0_i32 = arith.constant 0 : i32
    %c0_i32_0 = arith.constant 0 : i32
    return %arg0, %c0_i32 : i32, i32
  }
  func.func @transform_1(%arg0: i32) -> (i32, i32) {
    %c0_i32 = arith.constant 0 : i32
    %c0_i32_0 = arith.constant 0 : i32
    %c0_i32_1 = arith.constant 0 : i32
    return %c0_i32, %c0_i32_0 : i32, i32
  }
  func.func @transform_2(%arg0: i32) -> (i32, i32) {
    %c0_i32 = arith.constant 0 : i32
    %c0_i32_0 = arith.constant 0 : i32
    %c0_i32_1 = arith.constant 0 : i32
    return %c0_i32, %c0_i32_0 : i32, i32
  }
  func.func @transform_3(%arg0: i32) -> (i32, i32) {
    %c0_i32 = arith.constant 0 : i32
    %c0_i32_0 = arith.constant 0 : i32
    %c0_i32_1 = arith.constant 0 : i32
    return %c0_i32, %c0_i32_0 : i32, i32
  }
  func.func @transform_4(%arg0: i32) -> (i32, i32) {
    %c0_i32 = arith.constant 0 : i32
    %c0_i32_0 = arith.constant 0 : i32
    %c0_i32_1 = arith.constant 0 : i32
    return %c0_i32, %c0_i32_0 : i32, i32
  }
  func.func @transform_5(%arg0: i32) -> (i32, i32) {
    %c0_i32 = arith.constant 0 : i32
    %c0_i32_0 = arith.constant 0 : i32
    %c0_i32_1 = arith.constant 0 : i32
    return %c0_i32, %c0_i32_0 : i32, i32
  }
  func.func @transform_6(%arg0: i32) -> (i32, i32) {
    %c0_i32 = arith.constant 0 : i32
    %c0_i32_0 = arith.constant 0 : i32
    %c0_i32_1 = arith.constant 0 : i32
    return %c0_i32, %c0_i32_0 : i32, i32
  }
  func.func @transform_7(%arg0: i32) -> (i32, i32) {
    %c0_i32 = arith.constant 0 : i32
    %c0_i32_0 = arith.constant 0 : i32
    %c0_i32_1 = arith.constant 0 : i32
    return %c0_i32, %c0_i32_0 : i32, i32
  }
  func.func @transform_8(%arg0: i32) -> (i32, i32) {
    %c0_i32 = arith.constant 0 : i32
    %c0_i32_0 = arith.constant 0 : i32
    %c0_i32_1 = arith.constant 0 : i32
    return %c0_i32, %c0_i32_0 : i32, i32
  }
  func.func @transform_9(%arg0: i32) -> (i32, i32) {
    %c0_i32 = arith.constant 0 : i32
    %c0_i32_0 = arith.constant 0 : i32
    %c0_i32_1 = arith.constant 0 : i32
    return %c0_i32, %c0_i32_0 : i32, i32
  }
  func.func @transform_10(%arg0: i32) -> (i32, i32) {
    %c0_i32 = arith.constant 0 : i32
    %c0_i32_0 = arith.constant 0 : i32
    %c0_i32_1 = arith.constant 0 : i32
    return %c0_i32, %c0_i32_0 : i32, i32
  }
  func.func @transform_11(%arg0: i32) -> (i32, i32) {
    %c0_i32 = arith.constant 0 : i32
    %c0_i32_0 = arith.constant 0 : i32
    %c0_i32_1 = arith.constant 0 : i32
    return %c0_i32, %c0_i32_0 : i32, i32
  }
  func.func @transform_12(%arg0: i32) -> (i32, i32) {
    %c0_i32 = arith.constant 0 : i32
    %c0_i32_0 = arith.constant 0 : i32
    %c0_i32_1 = arith.constant 0 : i32
    return %c0_i32, %c0_i32_0 : i32, i32
  }
  func.func @transform_13(%arg0: i32) -> (i32, i32) {
    %c0_i32 = arith.constant 0 : i32
    %c0_i32_0 = arith.constant 0 : i32
    %c0_i32_1 = arith.constant 0 : i32
    return %c0_i32, %c0_i32_0 : i32, i32
  }
  func.func @transform_14(%arg0: i32) -> (i32, i32) {
    %c0_i32 = arith.constant 0 : i32
    %c0_i32_0 = arith.constant 0 : i32
    %c0_i32_1 = arith.constant 0 : i32
    return %c0_i32, %c0_i32_0 : i32, i32
  }
  func.func @transform_15(%arg0: i32) -> (i32, i32) {
    %c0_i32 = arith.constant 0 : i32
    %c0_i32_0 = arith.constant 0 : i32
    return %arg0, %c0_i32 : i32, i32
  }
}

</mosaic_0001>

<llo_original>
// kernel: dqn3_forward.1
$region0: #{dqn3_forward.1}
  #allocation0 [shape = 'u32[]', space=smem, size = 0x4, offset = 0x4, fixed_abs, tag = 'smem constant byte address 0x4 - core index']
  #allocation1 [shape = 'u32[144,128]{1,0:T(1,128)}', space=vmem, size = 0x12000, scoped, tag = 'internal scratch']
  %s0 = inlined_call_operand.vmem [shape: f32[8,32], index: 0, kind: input, shape index: {}]
  %s1 = inlined_call_operand.vmem [shape: bf16[32,64], index: 1, kind: input, shape index: {}]
  %s2 = inlined_call_operand.vmem [shape: f32[1,64], index: 2, kind: input, shape index: {}]
  %s3 = inlined_call_operand.vmem [shape: bf16[64,512], index: 3, kind: input, shape index: {}]
  %s4 = inlined_call_operand.vmem [shape: f32[1,512], index: 4, kind: input, shape index: {}]
  %s5 = inlined_call_operand.vmem [shape: bf16[512,1024], index: 5, kind: input, shape index: {}]
  %s6 = inlined_call_operand.vmem [shape: f32[1,1024], index: 6, kind: input, shape index: {}]
  %s7 = inlined_call_operand.vmem [shape: bf16[1024,512], index: 7, kind: input, shape index: {}]
  %s8 = inlined_call_operand.vmem [shape: f32[1,512], index: 8, kind: input, shape index: {}]
  %s9 = inlined_call_operand.vmem [shape: bf16[512,256], index: 9, kind: input, shape index: {}]
  %s10 = inlined_call_operand.vmem [shape: f32[1,256], index: 10, kind: input, shape index: {}]
  %s11 = inlined_call_operand.vmem [shape: bf16[256,64], index: 11, kind: input, shape index: {}]
  %s12 = inlined_call_operand.vmem [shape: f32[1,64], index: 12, kind: input, shape index: {}]
  %s13 = inlined_call_operand.vmem [shape: bf16[64,128], index: 13, kind: input, shape index: {}]
  %s14 = inlined_call_operand.vmem [shape: f32[1,128], index: 14, kind: input, shape index: {}]
  %s15 = inlined_call_operand.vmem [shape: f32[8,128], index: 15, kind: output, shape index: {}]
  %s16 = sld [smem:[#allocation0]]
  $region70: #{dqn3_forward.1} parent=0
    _
  %s18 = ssub.s32 1, %s16
  %s19 = scalar_select 0, %s18, %s16
  // Predicated region
  $region2: #{dqn3_forward.1} parent=0 // pred_check
    _
  $region3: #{dqn3_forward.1} parent=0 // pred_check_branch
    %21 = sbr.rel (0) target = $region5
  $region4: #{dqn3_forward.1} parent=0 // pred_region
    _
  $region5: #{dqn3_forward.1} parent=0 // pred_fallthru
    _
  // Predicated region
  $region6: #{dqn3_forward.1} parent=0 // pred_check
    _
  $region7: #{dqn3_forward.1} parent=0 // pred_check_branch
    %23 = sbr.rel (0) target = $region9
  $region8: #{dqn3_forward.1} parent=0 // pred_region
    _
  $region9: #{dqn3_forward.1} parent=0 // pred_fallthru
    _
  // Predicated region
  $region10: #{dqn3_forward.1} parent=0 // pred_check
    _
  $region11: #{dqn3_forward.1} parent=0 // pred_check_branch
    %25 = sbr.rel (0) target = $region13
  $region12: #{dqn3_forward.1} parent=0 // pred_region
    _
  $region13: #{dqn3_forward.1} parent=0 // pred_fallthru
    _
  // Predicated region
  $region14: #{dqn3_forward.1} parent=0 // pred_check
    _
  $region15: #{dqn3_forward.1} parent=0 // pred_check_branch
    %27 = sbr.rel (0) target = $region17
  $region16: #{dqn3_forward.1} parent=0 // pred_region
    _
  $region17: #{dqn3_forward.1} parent=0 // pred_fallthru
    _
  // Predicated region
  $region18: #{dqn3_forward.1} parent=0 // pred_check
    _
  $region19: #{dqn3_forward.1} parent=0 // pred_check_branch
    %29 = sbr.rel (0) target = $region21
  $region20: #{dqn3_forward.1} parent=0 // pred_region
    _
  $region21: #{dqn3_forward.1} parent=0 // pred_fallthru
    _
  // Predicated region
  $region22: #{dqn3_forward.1} parent=0 // pred_check
    _
  $region23: #{dqn3_forward.1} parent=0 // pred_check_branch
    %31 = sbr.rel (0) target = $region25
  $region24: #{dqn3_forward.1} parent=0 // pred_region
    _
  $region25: #{dqn3_forward.1} parent=0 // pred_fallthru
    _
  // Predicated region
  $region26: #{dqn3_forward.1} parent=0 // pred_check
    _
  $region27: #{dqn3_forward.1} parent=0 // pred_check_branch
    %33 = sbr.rel (0) target = $region29
  $region28: #{dqn3_forward.1} parent=0 // pred_region
    _
  $region29: #{dqn3_forward.1} parent=0 // pred_fallthru
    _
  // Predicated region
  $region30: #{dqn3_forward.1} parent=0 // pred_check
    _
  $region31: #{dqn3_forward.1} parent=0 // pred_check_branch
    %35 = sbr.rel (0) target = $region33
  $region32: #{dqn3_forward.1} parent=0 // pred_region
    _
  $region33: #{dqn3_forward.1} parent=0 // pred_fallthru
    _
  // Predicated region
  $region34: #{dqn3_forward.1} parent=0 // pred_check
    _
  $region35: #{dqn3_forward.1} parent=0 // pred_check_branch
    %37 = sbr.rel (0) target = $region37
  $region36: #{dqn3_forward.1} parent=0 // pred_region
    _
  $region37: #{dqn3_forward.1} parent=0 // pred_fallthru
    _
  // Predicated region
  $region38: #{dqn3_forward.1} parent=0 // pred_check
    _
  $region39: #{dqn3_forward.1} parent=0 // pred_check_branch
    %39 = sbr.rel (0) target = $region41
  $region40: #{dqn3_forward.1} parent=0 // pred_region
    _
  $region41: #{dqn3_forward.1} parent=0 // pred_fallthru
    _
  // Predicated region
  $region42: #{dqn3_forward.1} parent=0 // pred_check
    _
  $region43: #{dqn3_forward.1} parent=0 // pred_check_branch
    %41 = sbr.rel (0) target = $region45
  $region44: #{dqn3_forward.1} parent=0 // pred_region
    _
  $region45: #{dqn3_forward.1} parent=0 // pred_fallthru
    _
  // Predicated region
  $region46: #{dqn3_forward.1} parent=0 // pred_check
    _
  $region47: #{dqn3_forward.1} parent=0 // pred_check_branch
    %43 = sbr.rel (0) target = $region49
  $region48: #{dqn3_forward.1} parent=0 // pred_region
    _
  $region49: #{dqn3_forward.1} parent=0 // pred_fallthru
    _
  // Predicated region
  $region50: #{dqn3_forward.1} parent=0 // pred_check
    _
  $region51: #{dqn3_forward.1} parent=0 // pred_check_branch
    %45 = sbr.rel (0) target = $region53
  $region52: #{dqn3_forward.1} parent=0 // pred_region
    _
  $region53: #{dqn3_forward.1} parent=0 // pred_fallthru
    _
  // Predicated region
  $region54: #{dqn3_forward.1} parent=0 // pred_check
    _
  $region55: #{dqn3_forward.1} parent=0 // pred_check_branch
    %47 = sbr.rel (0) target = $region57
  $region56: #{dqn3_forward.1} parent=0 // pred_region
    _
  $region57: #{dqn3_forward.1} parent=0 // pred_fallthru
    _
  // Predicated region
  $region58: #{dqn3_forward.1} parent=0 // pred_check
    _
  $region59: #{dqn3_forward.1} parent=0 // pred_check_branch
    %49 = sbr.rel (0) target = $region61
  $region60: #{dqn3_forward.1} parent=0 // pred_region
    _
  $region61: #{dqn3_forward.1} parent=0 // pred_fallthru
    _
  %v51 = vld [vmem:[%s0] sm:$0xff]
  %v52 = vpack.c.bf16 %v51, %v51
  %v53 = vld [vmem:[%s1] sm:$0xf]
  %v54 = vld [vmem:[%s1 + $0x4] sm:$0xf]
  %v55 = vld [vmem:[%s1 + $0x8] sm:$0xf]
  %v56 = vld [vmem:[%s1 + $0xc] sm:$0xf]
  %v57 = vld [vmem:[%s2] sm:$0x1]
  %v59 = vlaneseq
  %v60 = vshrl.u32 %v59, 7
  %v61 = vsub.s32 0, %v60
  %v62 = vrot.slane %v57, %v61
  %v68 = vunpack.c.l.b16 %v53
  %v69 = vunpack.c.l.b16 %v54
  %v70 = vunpack.c.l.b16 %v55
  %v71 = vunpack.c.l.b16 %v56
  %v72 = vpack.c.b16 %v69, %v68
  %v73 = vpack.c.b16 %v71, %v70
  %vm76 = vcmask 261120
  %v78 = vsel %vm76, %v52, 0
  %80 = vmatprep.subr.bf16.mxu0 0
  %81 = vmatpush1.bf16.msra.mxu0 %v72
  %82 = vmatprep.subr.bf16.mxu0 0
  %83 = vmatpush1.bf16.msra.mxu0 %v73
  %84 = vmatprep.subr.bf16.mxu0 0
  %85 = vmatpush1.bf16.msra.mxu0 0
  %86 = vmatprep.subr.bf16.mxu0 0
  %87 = vmatpush1.bf16.msra.mxu0 0
  %88 = vmatprep.subr.bf16.mxu0 0
  %89 = vmatpush1.bf16.msra.mxu0 0
  %90 = vmatprep.subr.bf16.mxu0 0
  %91 = vmatpush1.bf16.msra.mxu0 0
  %92 = vmatprep.subr.bf16.mxu0 0
  %93 = vmatpush1.bf16.msra.mxu0 0
  %94 = vmatprep.subr.bf16.mxu0 0
  %95 = vmatpush1.bf16.msra.mxu0 0
  %96 = vmatprep.subr.bf16.mxu0 0
  %97 = vmatpush1.bf16.msra.mxu0 0
  %98 = vmatprep.subr.bf16.mxu0 0
  %99 = vmatpush1.bf16.msra.mxu0 0
  %100 = vmatprep.subr.bf16.mxu0 0
  %101 = vmatpush1.bf16.msra.mxu0 0
  %102 = vmatprep.subr.bf16.mxu0 0
  %103 = vmatpush1.bf16.msra.mxu0 0
  %104 = vmatprep.subr.bf16.mxu0 0
  %105 = vmatpush1.bf16.msra.mxu0 0
  %106 = vmatprep.subr.bf16.mxu0 0
  %107 = vmatpush1.bf16.msra.mxu0 0
  %108 = vmatprep.subr.bf16.mxu0 0
  %109 = vmatpush1.bf16.msra.mxu0 0
  %110 = vmatprep.subr.bf16.mxu0 0
  %111 = vmatpush1.bf16.msra.mxu0 0
  %112 = vmatprep.mubr.bf16.mxu0 0
  %113 = vmatmul.mubr.bf16.gmra.mrb[0].mxu0 %v78
  %v114 = vpop.f32.mrb[0].mxu0
  %v115 = vadd.f32 %v62, %v114
  %v116 = vpop.f32.mrb[0].mxu0
  %v117 = vpop.f32.mrb[0].mxu0
  %v118 = vpop.f32.mrb[0].mxu0
  %119 = vdwg.mxu0
  %v120 = vmax.f32 %v115, 0.0
  %v121 = vpack.c.bf16 %v120, %v120
  %v122 = vld [vmem:[%s3] sm:$0xff]
  %v123 = vld [vmem:[%s3 + $0x8] sm:$0xff]
  %v124 = vld [vmem:[%s3 + $0x10] sm:$0xff]
  %v125 = vld [vmem:[%s3 + $0x18] sm:$0xff]
  %v126 = vld [vmem:[%s3 + $0x20] sm:$0xff]
  %v127 = vld [vmem:[%s3 + $0x28] sm:$0xff]
  %v128 = vld [vmem:[%s3 + $0x30] sm:$0xff]
  %v129 = vld [vmem:[%s3 + $0x38] sm:$0xff]
  %v130 = vld [vmem:[%s3 + $0x40] sm:$0xff]
  %v131 = vld [vmem:[%s3 + $0x48] sm:$0xff]
  %v132 = vld [vmem:[%s3 + $0x50] sm:$0xff]
  %v133 = vld [vmem:[%s3 + $0x58] sm:$0xff]
  %v134 = vld [vmem:[%s3 + $0x60] sm:$0xff]
  %v135 = vld [vmem:[%s3 + $0x68] sm:$0xff]
  %v136 = vld [vmem:[%s3 + $0x70] sm:$0xff]
  %v137 = vld [vmem:[%s3 + $0x78] sm:$0xff]
  %v138 = vld [vmem:[%s4] sm:$0xf]
  %v140 = vlaneseq
  %v141 = vshrl.u32 %v140, 7
  %v142 = vsub.s32 0, %v141
  %v143 = vrot.slane %v138, %v142
  %v144 = vlaneseq
  %v145 = vshrl.u32 %v144, 7
  %v146 = vsub.s32 1, %v145
  %v147 = vrot.slane %v138, %v146
  %v148 = vlaneseq
  %v149 = vshrl.u32 %v148, 7
  %v150 = vsub.s32 2, %v149
  %v151 = vrot.slane %v138, %v150
  %v152 = vlaneseq
  %v153 = vshrl.u32 %v152, 7
  %v154 = vsub.s32 3, %v153
  %v155 = vrot.slane %v138, %v154
  %v176 = vunpack.c.l.b16 %v122
  %v177 = vunpack.c.h.b16 %v122
  %v178 = vunpack.c.l.b16 %v123
  %v179 = vunpack.c.h.b16 %v123
  %v180 = vunpack.c.l.b16 %v124
  %v181 = vunpack.c.h.b16 %v124
  %v182 = vunpack.c.l.b16 %v125
  %v183 = vunpack.c.h.b16 %v125
  %v184 = vunpack.c.l.b16 %v126
  %v185 = vunpack.c.h.b16 %v126
  %v186 = vunpack.c.l.b16 %v127
  %v187 = vunpack.c.h.b16 %v127
  %v188 = vunpack.c.l.b16 %v128
  %v189 = vunpack.c.h.b16 %v128
  %v190 = vunpack.c.l.b16 %v129
  %v191 = vunpack.c.h.b16 %v129
  %v192 = vunpack.c.l.b16 %v130
  %v193 = vunpack.c.h.b16 %v130
  %v194 = vunpack.c.l.b16 %v131
  %v195 = vunpack.c.h.b16 %v131
  %v196 = vunpack.c.l.b16 %v132
  %v197 = vunpack.c.h.b16 %v132
  %v198 = vunpack.c.l.b16 %v133
  %v199 = vunpack.c.h.b16 %v133
  %v200 = vunpack.c.l.b16 %v134
  %v201 = vunpack.c.h.b16 %v134
  %v202 = vunpack.c.l.b16 %v135
  %v203 = vunpack.c.h.b16 %v135
  %v204 = vunpack.c.l.b16 %v136
  %v205 = vunpack.c.h.b16 %v136
  %v206 = vunpack.c.l.b16 %v137
  %v207 = vunpack.c.h.b16 %v137
  %v208 = vpack.c.b16 %v180, %v176
  %v209 = vpack.c.b16 %v181, %v177
  %v210 = vpack.c.b16 %v182, %v178
  %v211 = vpack.c.b16 %v183, %v179
  %v212 = vpack.c.b16 %v188, %v184
  %v213 = vpack.c.b16 %v189, %v185
  %v214 = vpack.c.b16 %v190, %v186
  %v215 = vpack.c.b16 %v191, %v187
  %v216 = vpack.c.b16 %v196, %v192
  %v217 = vpack.c.b16 %v197, %v193
  %v218 = vpack.c.b16 %v198, %v194
  %v219 = vpack.c.b16 %v199, %v195
  %v220 = vpack.c.b16 %v204, %v200
  %v221 = vpack.c.b16 %v205, %v201
  %v222 = vpack.c.b16 %v206, %v202
  %v223 = vpack.c.b16 %v207, %v203
  %vm240 = vcmask 523264
  %v242 = vsel %vm240, %v121, 0
  %244 = vmatprep.subr.bf16.mxu0 %v209
  %245 = vmatpush1.bf16.msra.mxu0 %v208
  %246 = vmatprep.subr.bf16.mxu0 %v213
  %247 = vmatpush1.bf16.msra.mxu0 %v212
  %248 = vmatprep.subr.bf16.mxu0 %v217
  %249 = vmatpush1.bf16.msra.mxu0 %v216
  %250 = vmatprep.subr.bf16.mxu0 %v221
  %251 = vmatpush1.bf16.msra.mxu0 %v220
  %252 = vmatprep.subr.bf16.mxu0 0
  %253 = vmatpush1.bf16.msra.mxu0 0
  %254 = vmatprep.subr.bf16.mxu0 0
  %255 = vmatpush1.bf16.msra.mxu0 0
  %256 = vmatprep.subr.bf16.mxu0 0
  %257 = vmatpush1.bf16.msra.mxu0 0
  %258 = vmatprep.subr.bf16.mxu0 0
  %259 = vmatpush1.bf16.msra.mxu0 0
  %260 = vmatprep.subr.bf16.mxu0 0
  %261 = vmatpush1.bf16.msra.mxu0 0
  %262 = vmatprep.subr.bf16.mxu0 0
  %263 = vmatpush1.bf16.msra.mxu0 0
  %264 = vmatprep.subr.bf16.mxu0 0
  %265 = vmatpush1.bf16.msra.mxu0 0
  %266 = vmatprep.subr.bf16.mxu0 0
  %267 = vmatpush1.bf16.msra.mxu0 0
  %268 = vmatprep.subr.bf16.mxu0 0
  %269 = vmatpush1.bf16.msra.mxu0 0
  %270 = vmatprep.subr.bf16.mxu0 0
  %271 = vmatpush1.bf16.msra.mxu0 0
  %272 = vmatprep.subr.bf16.mxu0 0
  %273 = vmatpush1.bf16.msra.mxu0 0
  %274 = vmatprep.subr.bf16.mxu0 0
  %275 = vmatpush1.bf16.msra.mxu0 0
  %276 = vmatprep.mubr.bf16.mxu0 0
  %277 = vmatmul.mubr.bf16.gmra.mrb[0].mxu0 %v242
  %v278 = vpop.f32.mrb[0].mxu0
  %v279 = vadd.f32 %v143, %v278
  %v280 = vpop.f32.mrb[0].mxu0
  %v281 = vadd.f32 %v147, %v280
  %v282 = vpop.f32.mrb[0].mxu0
  %v283 = vpop.f32.mrb[0].mxu0
  %284 = vdwg.mxu0
  %285 = vmatprep.subr.bf16.mxu0 %v211
  %286 = vmatpush1.bf16.msra.mxu0 %v210
  %287 = vmatprep.subr.bf16.mxu0 %v215
  %288 = vmatpush1.bf16.msra.mxu0 %v214
  %289 = vmatprep.subr.bf16.mxu0 %v219
  %290 = vmatpush1.bf16.msra.mxu0 %v218
  %291 = vmatprep.subr.bf16.mxu0 %v223
  %292 = vmatpush1.bf16.msra.mxu0 %v222
  %293 = vmatprep.subr.bf16.mxu0 0
  %294 = vmatpush1.bf16.msra.mxu0 0
  %295 = vmatprep.subr.bf16.mxu0 0
  %296 = vmatpush1.bf16.msra.mxu0 0
  %297 = vmatprep.subr.bf16.mxu0 0
  %298 = vmatpush1.bf16.msra.mxu0 0
  %299 = vmatprep.subr.bf16.mxu0 0
  %300 = vmatpush1.bf16.msra.mxu0 0
  %301 = vmatprep.subr.bf16.mxu0 0
  %302 = vmatpush1.bf16.msra.mxu0 0
  %303 = vmatprep.subr.bf16.mxu0 0
  %304 = vmatpush1.bf16.msra.mxu0 0
  %305 = vmatprep.subr.bf16.mxu0 0
  %306 = vmatpush1.bf16.msra.mxu0 0
  %307 = vmatprep.subr.bf16.mxu0 0
  %308 = vmatpush1.bf16.msra.mxu0 0
  %309 = vmatprep.subr.bf16.mxu0 0
  %310 = vmatpush1.bf16.msra.mxu0 0
  %311 = vmatprep.subr.bf16.mxu0 0
  %312 = vmatpush1.bf16.msra.mxu0 0
  %313 = vmatprep.subr.bf16.mxu0 0
  %314 = vmatpush1.bf16.msra.mxu0 0
  %315 = vmatprep.subr.bf16.mxu0 0
  %316 = vmatpush1.bf16.msra.mxu0 0
  %317 = vmatprep.mubr.bf16.mxu0 0
  %318 = vmatmul.mubr.bf16.gmra.mrb[0].mxu0 %v242
  %v319 = vpop.f32.mrb[0].mxu0
  %v320 = vadd.f32 %v151, %v319
  %v321 = vpop.f32.mrb[0].mxu0
  %v322 = vadd.f32 %v155, %v321
  %v323 = vpop.f32.mrb[0].mxu0
  %v324 = vpop.f32.mrb[0].mxu0
  %325 = vdwg.mxu0
  %v326 = vmax.f32 %v279, 0.0
  %v327 = vmax.f32 %v281, 0.0
  %v328 = vmax.f32 %v320, 0.0
  %v329 = vmax.f32 %v322, 0.0
  %v330 = vpack.c.bf16 %v326, %v326
  %v331 = vpack.c.bf16 %v327, %v327
  %v332 = vpack.c.bf16 %v328, %v328
  %v333 = vpack.c.bf16 %v329, %v329
  %v334 = vld [vmem:[%s5] sm:$0xff]
  %v335 = vld [vmem:[%s5 + $0x8] sm:$0xff]
  %v336 = vld [vmem:[%s5 + $0x10] sm:$0xff]
  %v337 = vld [vmem:[%s5 + $0x18] sm:$0xff]
  %v338 = vld [vmem:[%s5 + $0x20] sm:$0xff]
  %v339 = vld [vmem:[%s5 + $0x28] sm:$0xff]
  %v340 = vld [vmem:[%s5 + $0x30] sm:$0xff]
  %v341 = vld [vmem:[%s5 + $0x38] sm:$0xff]
  %v342 = vld [vmem:[%s5 + $0x40] sm:$0xff]
  %v343 = vld [vmem:[%s5 + $0x48] sm:$0xff]
  %v344 = vld [vmem:[%s5 + $0x50] sm:$0xff]
  %v345 = vld [vmem:[%s5 + $0x58] sm:$0xff]
  %v346 = vld [vmem:[%s5 + $0x60] sm:$0xff]
  %v347 = vld [vmem:[%s5 + $0x68] sm:$0xff]
  %v348 = vld [vmem:[%s5 + $0x70] sm:$0xff]
  %v349 = vld [vmem:[%s5 + $0x78] sm:$0xff]
  %v350 = vld [vmem:[%s5 + $0x80] sm:$0xff]
  %v351 = vld [vmem:[%s5 + $0x88] sm:$0xff]
  %v352 = vld [vmem:[%s5 + $0x90] sm:$0xff]
  %v353 = vld [vmem:[%s5 + $0x98] sm:$0xff]
  %v354 = vld [vmem:[%s5 + $0xa0] sm:$0xff]
  %v355 = vld [vmem:[%s5 + $0xa8] sm:$0xff]
  %v356 = vld [vmem:[%s5 + $0xb0] sm:$0xff]
  %v357 = vld [vmem:[%s5 + $0xb8] sm:$0xff]
  %v358 = vld [vmem:[%s5 + $0xc0] sm:$0xff]
  %v359 = vld [vmem:[%s5 + $0xc8] sm:$0xff]
  %v360 = vld [vmem:[%s5 + $0xd0] sm:$0xff]
  %v361 = vld [vmem:[%s5 + $0xd8] sm:$0xff]
  %v362 = vld [vmem:[%s5 + $0xe0] sm:$0xff]
  %v363 = vld [vmem:[%s5 + $0xe8] sm:$0xff]
  %v364 = vld [vmem:[%s5 + $0xf0] sm:$0xff]
  %v365 = vld [vmem:[%s5 + $0xf8] sm:$0xff]
  %v366 = vld [vmem:[%s5 + $0x100] sm:$0xff]
  %v367 = vld [vmem:[%s5 + $0x108] sm:$0xff]
  %v368 = vld [vmem:[%s5 + $0x110] sm:$0xff]
  %v369 = vld [vmem:[%s5 + $0x118] sm:$0xff]
  %v370 = vld [vmem:[%s5 + $0x120] sm:$0xff]
  %v371 = vld [vmem:[%s5 + $0x128] sm:$0xff]
  %v372 = vld [vmem:[%s5 + $0x130] sm:$0xff]
  %v373 = vld [vmem:[%s5 + $0x138] sm:$0xff]
  %v374 = vld [vmem:[%s5 + $0x140] sm:$0xff]
  %v375 = vld [vmem:[%s5 + $0x148] sm:$0xff]
  %v376 = vld [vmem:[%s5 + $0x150] sm:$0xff]
  %v377 = vld [vmem:[%s5 + $0x158] sm:$0xff]
  %v378 = vld [vmem:[%s5 + $0x160] sm:$0xff]
  %v379 = vld [vmem:[%s5 + $0x168] sm:$0xff]
  %v380 = vld [vmem:[%s5 + $0x170] sm:$0xff]
  %v381 = vld [vmem:[%s5 + $0x178] sm:$0xff]
  %v382 = vld [vmem:[%s5 + $0x180] sm:$0xff]
  %v383 = vld [vmem:[%s5 + $0x188] sm:$0xff]
  %v384 = vld [vmem:[%s5 + $0x190] sm:$0xff]
  %v385 = vld [vmem:[%s5 + $0x198] sm:$0xff]
  %v386 = vld [vmem:[%s5 + $0x1a0] sm:$0xff]
  %v387 = vld [vmem:[%s5 + $0x1a8] sm:$0xff]
  %v388 = vld [vmem:[%s5 + $0x1b0] sm:$0xff]
  %v389 = vld [vmem:[%s5 + $0x1b8] sm:$0xff]
  %v390 = vld [vmem:[%s5 + $0x1c0] sm:$0xff]
  %v391 = vld [vmem:[%s5 + $0x1c8] sm:$0xff]
  %v392 = vld [vmem:[%s5 + $0x1d0] sm:$0xff]
  %v393 = vld [vmem:[%s5 + $0x1d8] sm:$0xff]
  %v394 = vld [vmem:[%s5 + $0x1e0] sm:$0xff]
  %v395 = vld [vmem:[%s5 + $0x1e8] sm:$0xff]
  %v396 = vld [vmem:[%s5 + $0x1f0] sm:$0xff]
  %v397 = vld [vmem:[%s5 + $0x1f8] sm:$0xff]
  %v398 = vld [vmem:[%s5 + $0x200] sm:$0xff]
  %v399 = vld [vmem:[%s5 + $0x208] sm:$0xff]
  %v400 = vld [vmem:[%s5 + $0x210] sm:$0xff]
  %v401 = vld [vmem:[%s5 + $0x218] sm:$0xff]
  %v402 = vld [vmem:[%s5 + $0x220] sm:$0xff]
  %v403 = vld [vmem:[%s5 + $0x228] sm:$0xff]
  %v404 = vld [vmem:[%s5 + $0x230] sm:$0xff]
  %v405 = vld [vmem:[%s5 + $0x238] sm:$0xff]
  %v406 = vld [vmem:[%s5 + $0x240] sm:$0xff]
  %v407 = vld [vmem:[%s5 + $0x248] sm:$0xff]
  %v408 = vld [vmem:[%s5 + $0x250] sm:$0xff]
  %v409 = vld [vmem:[%s5 + $0x258] sm:$0xff]
  %v410 = vld [vmem:[%s5 + $0x260] sm:$0xff]
  %v411 = vld [vmem:[%s5 + $0x268] sm:$0xff]
  %v412 = vld [vmem:[%s5 + $0x270] sm:$0xff]
  %v413 = vld [vmem:[%s5 + $0x278] sm:$0xff]
  %v414 = vld [vmem:[%s5 + $0x280] sm:$0xff]
  %v415 = vld [vmem:[%s5 + $0x288] sm:$0xff]
  %v416 = vld [vmem:[%s5 + $0x290] sm:$0xff]
  %v417 = vld [vmem:[%s5 + $0x298] sm:$0xff]
  %v418 = vld [vmem:[%s5 + $0x2a0] sm:$0xff]
  %v419 = vld [vmem:[%s5 + $0x2a8] sm:$0xff]
  %v420 = vld [vmem:[%s5 + $0x2b0] sm:$0xff]
  %v421 = vld [vmem:[%s5 + $0x2b8] sm:$0xff]
  %v422 = vld [vmem:[%s5 + $0x2c0] sm:$0xff]
  %v423 = vld [vmem:[%s5 + $0x2c8] sm:$0xff]
  %v424 = vld [vmem:[%s5 + $0x2d0] sm:$0xff]
  %v425 = vld [vmem:[%s5 + $0x2d8] sm:$0xff]
  %v426 = vld [vmem:[%s5 + $0x2e0] sm:$0xff]
  %v427 = vld [vmem:[%s5 + $0x2e8] sm:$0xff]
  %v428 = vld [vmem:[%s5 + $0x2f0] sm:$0xff]
  %v429 = vld [vmem:[%s5 + $0x2f8] sm:$0xff]
  %v430 = vld [vmem:[%s5 + $0x300] sm:$0xff]
  %v431 = vld [vmem:[%s5 + $0x308] sm:$0xff]
  %v432 = vld [vmem:[%s5 + $0x310] sm:$0xff]
  %v433 = vld [vmem:[%s5 + $0x318] sm:$0xff]
  %v434 = vld [vmem:[%s5 + $0x320] sm:$0xff]
  %v435 = vld [vmem:[%s5 + $0x328] sm:$0xff]
  %v436 = vld [vmem:[%s5 + $0x330] sm:$0xff]
  %v437 = vld [vmem:[%s5 + $0x338] sm:$0xff]
  %v438 = vld [vmem:[%s5 + $0x340] sm:$0xff]
  %v439 = vld [vmem:[%s5 + $0x348] sm:$0xff]
  %v440 = vld [vmem:[%s5 + $0x350] sm:$0xff]
  %v441 = vld [vmem:[%s5 + $0x358] sm:$0xff]
  %v442 = vld [vmem:[%s5 + $0x360] sm:$0xff]
  %v443 = vld [vmem:[%s5 + $0x368] sm:$0xff]
  %v444 = vld [vmem:[%s5 + $0x370] sm:$0xff]
  %v445 = vld [vmem:[%s5 + $0x378] sm:$0xff]
  %v446 = vld [vmem:[%s5 + $0x380] sm:$0xff]
  %v447 = vld [vmem:[%s5 + $0x388] sm:$0xff]
  %v448 = vld [vmem:[%s5 + $0x390] sm:$0xff]
  %v449 = vld [vmem:[%s5 + $0x398] sm:$0xff]
  %v450 = vld [vmem:[%s5 + $0x3a0] sm:$0xff]
  %v451 = vld [vmem:[%s5 + $0x3a8] sm:$0xff]
  %v452 = vld [vmem:[%s5 + $0x3b0] sm:$0xff]
  %v453 = vld [vmem:[%s5 + $0x3b8] sm:$0xff]
  %v454 = vld [vmem:[%s5 + $0x3c0] sm:$0xff]
  %v455 = vld [vmem:[%s5 + $0x3c8] sm:$0xff]
  %v456 = vld [vmem:[%s5 + $0x3d0] sm:$0xff]
  %v457 = vld [vmem:[%s5 + $0x3d8] sm:$0xff]
  %v458 = vld [vmem:[%s5 + $0x3e0] sm:$0xff]
  %v459 = vld [vmem:[%s5 + $0x3e8] sm:$0xff]
  %v460 = vld [vmem:[%s5 + $0x3f0] sm:$0xff]
  %v461 = vld [vmem:[%s5 + $0x3f8] sm:$0xff]
  %v462 = vld [vmem:[%s5 + $0x400] sm:$0xff]
  %v463 = vld [vmem:[%s5 + $0x408] sm:$0xff]
  %v464 = vld [vmem:[%s5 + $0x410] sm:$0xff]
  %v465 = vld [vmem:[%s5 + $0x418] sm:$0xff]
  %v466 = vld [vmem:[%s5 + $0x420] sm:$0xff]
  %v467 = vld [vmem:[%s5 + $0x428] sm:$0xff]
  %v468 = vld [vmem:[%s5 + $0x430] sm:$0xff]
  %v469 = vld [vmem:[%s5 + $0x438] sm:$0xff]
  %v470 = vld [vmem:[%s5 + $0x440] sm:$0xff]
  %v471 = vld [vmem:[%s5 + $0x448] sm:$0xff]
  %v472 = vld [vmem:[%s5 + $0x450] sm:$0xff]
  %v473 = vld [vmem:[%s5 + $0x458] sm:$0xff]
  %v474 = vld [vmem:[%s5 + $0x460] sm:$0xff]
  %v475 = vld [vmem:[%s5 + $0x468] sm:$0xff]
  %v476 = vld [vmem:[%s5 + $0x470] sm:$0xff]
  %v477 = vld [vmem:[%s5 + $0x478] sm:$0xff]
  %v478 = vld [vmem:[%s5 + $0x480] sm:$0xff]
  %v479 = vld [vmem:[%s5 + $0x488] sm:$0xff]
  %v480 = vld [vmem:[%s5 + $0x490] sm:$0xff]
  %v481 = vld [vmem:[%s5 + $0x498] sm:$0xff]
  %v482 = vld [vmem:[%s5 + $0x4a0] sm:$0xff]
  %v483 = vld [vmem:[%s5 + $0x4a8] sm:$0xff]
  %v484 = vld [vmem:[%s5 + $0x4b0] sm:$0xff]
  %v485 = vld [vmem:[%s5 + $0x4b8] sm:$0xff]
  %v486 = vld [vmem:[%s5 + $0x4c0] sm:$0xff]
  %v487 = vld [vmem:[%s5 + $0x4c8] sm:$0xff]
  %v488 = vld [vmem:[%s5 + $0x4d0] sm:$0xff]
  %v489 = vld [vmem:[%s5 + $0x4d8] sm:$0xff]
  %v490 = vld [vmem:[%s5 + $0x4e0] sm:$0xff]
  %v491 = vld [vmem:[%s5 + $0x4e8] sm:$0xff]
  %v492 = vld [vmem:[%s5 + $0x4f0] sm:$0xff]
  %v493 = vld [vmem:[%s5 + $0x4f8] sm:$0xff]
  %v494 = vld [vmem:[%s5 + $0x500] sm:$0xff]
  %v495 = vld [vmem:[%s5 + $0x508] sm:$0xff]
  %v496 = vld [vmem:[%s5 + $0x510] sm:$0xff]
  %v497 = vld [vmem:[%s5 + $0x518] sm:$0xff]
  %v498 = vld [vmem:[%s5 + $0x520] sm:$0xff]
  %v499 = vld [vmem:[%s5 + $0x528] sm:$0xff]
  %v500 = vld [vmem:[%s5 + $0x530] sm:$0xff]
  %v501 = vld [vmem:[%s5 + $0x538] sm:$0xff]
  %v502 = vld [vmem:[%s5 + $0x540] sm:$0xff]
  %v503 = vld [vmem:[%s5 + $0x548] sm:$0xff]
  %v504 = vld [vmem:[%s5 + $0x550] sm:$0xff]
  %v505 = vld [vmem:[%s5 + $0x558] sm:$0xff]
  %v506 = vld [vmem:[%s5 + $0x560] sm:$0xff]
  %v507 = vld [vmem:[%s5 + $0x568] sm:$0xff]
  %v508 = vld [vmem:[%s5 + $0x570] sm:$0xff]
  %v509 = vld [vmem:[%s5 + $0x578] sm:$0xff]
  %v510 = vld [vmem:[%s5 + $0x580] sm:$0xff]
  %v511 = vld [vmem:[%s5 + $0x588] sm:$0xff]
  %v512 = vld [vmem:[%s5 + $0x590] sm:$0xff]
  %v513 = vld [vmem:[%s5 + $0x598] sm:$0xff]
  %v514 = vld [vmem:[%s5 + $0x5a0] sm:$0xff]
  %v515 = vld [vmem:[%s5 + $0x5a8] sm:$0xff]
  %v516 = vld [vmem:[%s5 + $0x5b0] sm:$0xff]
  %v517 = vld [vmem:[%s5 + $0x5b8] sm:$0xff]
  %v518 = vld [vmem:[%s5 + $0x5c0] sm:$0xff]
  %v519 = vld [vmem:[%s5 + $0x5c8] sm:$0xff]
  %v520 = vld [vmem:[%s5 + $0x5d0] sm:$0xff]
  %v521 = vld [vmem:[%s5 + $0x5d8] sm:$0xff]
  %v522 = vld [vmem:[%s5 + $0x5e0] sm:$0xff]
  %v523 = vld [vmem:[%s5 + $0x5e8] sm:$0xff]
  %v524 = vld [vmem:[%s5 + $0x5f0] sm:$0xff]
  %v525 = vld [vmem:[%s5 + $0x5f8] sm:$0xff]
  %v526 = vld [vmem:[%s5 + $0x600] sm:$0xff]
  %v527 = vld [vmem:[%s5 + $0x608] sm:$0xff]
  %v528 = vld [vmem:[%s5 + $0x610] sm:$0xff]
  %v529 = vld [vmem:[%s5 + $0x618] sm:$0xff]
  %v530 = vld [vmem:[%s5 + $0x620] sm:$0xff]
  %v531 = vld [vmem:[%s5 + $0x628] sm:$0xff]
  %v532 = vld [vmem:[%s5 + $0x630] sm:$0xff]
  %v533 = vld [vmem:[%s5 + $0x638] sm:$0xff]
  %v534 = vld [vmem:[%s5 + $0x640] sm:$0xff]
  %v535 = vld [vmem:[%s5 + $0x648] sm:$0xff]
  %v536 = vld [vmem:[%s5 + $0x650] sm:$0xff]
  %v537 = vld [vmem:[%s5 + $0x658] sm:$0xff]
  %v538 = vld [vmem:[%s5 + $0x660] sm:$0xff]
  %v539 = vld [vmem:[%s5 + $0x668] sm:$0xff]
  %v540 = vld [vmem:[%s5 + $0x670] sm:$0xff]
  %v541 = vld [vmem:[%s5 + $0x678] sm:$0xff]
  %v542 = vld [vmem:[%s5 + $0x680] sm:$0xff]
  %v543 = vld [vmem:[%s5 + $0x688] sm:$0xff]
  %v544 = vld [vmem:[%s5 + $0x690] sm:$0xff]
  %v545 = vld [vmem:[%s5 + $0x698] sm:$0xff]
  %v546 = vld [vmem:[%s5 + $0x6a0] sm:$0xff]
  %v547 = vld [vmem:[%s5 + $0x6a8] sm:$0xff]
  %v548 = vld [vmem:[%s5 + $0x6b0] sm:$0xff]
  %v549 = vld [vmem:[%s5 + $0x6b8] sm:$0xff]
  %v550 = vld [vmem:[%s5 + $0x6c0] sm:$0xff]
  %v551 = vld [vmem:[%s5 + $0x6c8] sm:$0xff]
  %v552 = vld [vmem:[%s5 + $0x6d0] sm:$0xff]
  %v553 = vld [vmem:[%s5 + $0x6d8] sm:$0xff]
  %v554 = vld [vmem:[%s5 + $0x6e0] sm:$0xff]
  %v555 = vld [vmem:[%s5 + $0x6e8] sm:$0xff]
  %v556 = vld [vmem:[%s5 + $0x6f0] sm:$0xff]
  %v557 = vld [vmem:[%s5 + $0x6f8] sm:$0xff]
  %v558 = vld [vmem:[%s5 + $0x700] sm:$0xff]
  %v559 = vld [vmem:[%s5 + $0x708] sm:$0xff]
  %v560 = vld [vmem:[%s5 + $0x710] sm:$0xff]
  %v561 = vld [vmem:[%s5 + $0x718] sm:$0xff]
  %v562 = vld [vmem:[%s5 + $0x720] sm:$0xff]
  %v563 = vld [vmem:[%s5 + $0x728] sm:$0xff]
  %v564 = vld [vmem:[%s5 + $0x730] sm:$0xff]
  %v565 = vld [vmem:[%s5 + $0x738] sm:$0xff]
  %v566 = vld [vmem:[%s5 + $0x740] sm:$0xff]
  %v567 = vld [vmem:[%s5 + $0x748] sm:$0xff]
  %v568 = vld [vmem:[%s5 + $0x750] sm:$0xff]
  %v569 = vld [vmem:[%s5 + $0x758] sm:$0xff]
  %v570 = vld [vmem:[%s5 + $0x760] sm:$0xff]
  %v571 = vld [vmem:[%s5 + $0x768] sm:$0xff]
  %v572 = vld [vmem:[%s5 + $0x770] sm:$0xff]
  %v573 = vld [vmem:[%s5 + $0x778] sm:$0xff]
  %v574 = vld [vmem:[%s5 + $0x780] sm:$0xff]
  %v575 = vld [vmem:[%s5 + $0x788] sm:$0xff]
  %v576 = vld [vmem:[%s5 + $0x790] sm:$0xff]
  %v577 = vld [vmem:[%s5 + $0x798] sm:$0xff]
  %v578 = vld [vmem:[%s5 + $0x7a0] sm:$0xff]
  %v579 = vld [vmem:[%s5 + $0x7a8] sm:$0xff]
  %v580 = vld [vmem:[%s5 + $0x7b0] sm:$0xff]
  %v581 = vld [vmem:[%s5 + $0x7b8] sm:$0xff]
  %v582 = vld [vmem:[%s5 + $0x7c0] sm:$0xff]
  %v583 = vld [vmem:[%s5 + $0x7c8] sm:$0xff]
  %v584 = vld [vmem:[%s5 + $0x7d0] sm:$0xff]
  %v585 = vld [vmem:[%s5 + $0x7d8] sm:$0xff]
  %v586 = vld [vmem:[%s5 + $0x7e0] sm:$0xff]
  %v587 = vld [vmem:[%s5 + $0x7e8] sm:$0xff]
  %v588 = vld [vmem:[%s5 + $0x7f0] sm:$0xff]
  %v589 = vld [vmem:[%s5 + $0x7f8] sm:$0xff]
  %v590 = vld [vmem:[%s6] sm:$0xff]
  %v592 = vlaneseq
  %v593 = vshrl.u32 %v592, 7
  %v594 = vsub.s32 0, %v593
  %v595 = vrot.slane %v590, %v594
  %v596 = vlaneseq
  %v597 = vshrl.u32 %v596, 7
  %v598 = vsub.s32 1, %v597
  %v599 = vrot.slane %v590, %v598
  %v600 = vlaneseq
  %v601 = vshrl.u32 %v600, 7
  %v602 = vsub.s32 2, %v601
  %v603 = vrot.slane %v590, %v602
  %v604 = vlaneseq
  %v605 = vshrl.u32 %v604, 7
  %v606 = vsub.s32 3, %v605
  %v607 = vrot.slane %v590, %v606
  %v608 = vlaneseq
  %v609 = vshrl.u32 %v608, 7
  %v610 = vsub.s32 4, %v609
  %v611 = vrot.slane %v590, %v610
  %v612 = vlaneseq
  %v613 = vshrl.u32 %v612, 7
  %v614 = vsub.s32 5, %v613
  %v615 = vrot.slane %v590, %v614
  %v616 = vlaneseq
  %v617 = vshrl.u32 %v616, 7
  %v618 = vsub.s32 6, %v617
  %v619 = vrot.slane %v590, %v618
  %v620 = vlaneseq
  %v621 = vshrl.u32 %v620, 7
  %v622 = vsub.s32 7, %v621
  %v623 = vrot.slane %v590, %v622
  %v888 = vunpack.c.l.b16 %v334
  %v889 = vunpack.c.h.b16 %v334
  %v890 = vunpack.c.l.b16 %v335
  %v891 = vunpack.c.h.b16 %v335
  %v892 = vunpack.c.l.b16 %v336
  %v893 = vunpack.c.h.b16 %v336
  %v894 = vunpack.c.l.b16 %v337
  %v895 = vunpack.c.h.b16 %v337
  %v896 = vunpack.c.l.b16 %v338
  %v897 = vunpack.c.h.b16 %v338
  %v898 = vunpack.c.l.b16 %v339
  %v899 = vunpack.c.h.b16 %v339
  %v900 = vunpack.c.l.b16 %v340
  %v901 = vunpack.c.h.b16 %v340
  %v902 = vunpack.c.l.b16 %v341
  %v903 = vunpack.c.h.b16 %v341
  %v904 = vunpack.c.l.b16 %v342
  %v905 = vunpack.c.h.b16 %v342
  %v906 = vunpack.c.l.b16 %v343
  %v907 = vunpack.c.h.b16 %v343
  %v908 = vunpack.c.l.b16 %v344
  %v909 = vunpack.c.h.b16 %v344
  %v910 = vunpack.c.l.b16 %v345
  %v911 = vunpack.c.h.b16 %v345
  %v912 = vunpack.c.l.b16 %v346
  %v913 = vunpack.c.h.b16 %v346
  %v914 = vunpack.c.l.b16 %v347
  %v915 = vunpack.c.h.b16 %v347
  %v916 = vunpack.c.l.b16 %v348
  %v917 = vunpack.c.h.b16 %v348
  %v918 = vunpack.c.l.b16 %v349
  %v919 = vunpack.c.h.b16 %v349
  %v920 = vunpack.c.l.b16 %v350
  %v921 = vunpack.c.h.b16 %v350
  %v922 = vunpack.c.l.b16 %v351
  %v923 = vunpack.c.h.b16 %v351
  %v924 = vunpack.c.l.b16 %v352
  %v925 = vunpack.c.h.b16 %v352
  %v926 = vunpack.c.l.b16 %v353
  %v927 = vunpack.c.h.b16 %v353
  %v928 = vunpack.c.l.b16 %v354
  %v929 = vunpack.c.h.b16 %v354
  %v930 = vunpack.c.l.b16 %v355
  %v931 = vunpack.c.h.b16 %v355
  %v932 = vunpack.c.l.b16 %v356
  %v933 = vunpack.c.h.b16 %v356
  %v934 = vunpack.c.l.b16 %v357
  %v935 = vunpack.c.h.b16 %v357
  %v936 = vunpack.c.l.b16 %v358
  %v937 = vunpack.c.h.b16 %v358
  %v938 = vunpack.c.l.b16 %v359
  %v939 = vunpack.c.h.b16 %v359
  %v940 = vunpack.c.l.b16 %v360
  %v941 = vunpack.c.h.b16 %v360
  %v942 = vunpack.c.l.b16 %v361
  %v943 = vunpack.c.h.b16 %v361
  %v944 = vunpack.c.l.b16 %v362
  %v945 = vunpack.c.h.b16 %v362
  %v946 = vunpack.c.l.b16 %v363
  %v947 = vunpack.c.h.b16 %v363
  %v948 = vunpack.c.l.b16 %v364
  %v949 = vunpack.c.h.b16 %v364
  %v950 = vunpack.c.l.b16 %v365
  %v951 = vunpack.c.h.b16 %v365
  %v952 = vunpack.c.l.b16 %v366
  %v953 = vunpack.c.h.b16 %v366
  %v954 = vunpack.c.l.b16 %v367
  %v955 = vunpack.c.h.b16 %v367
  %v956 = vunpack.c.l.b16 %v368
  %v957 = vunpack.c.h.b16 %v368
  %v958 = vunpack.c.l.b16 %v369
  %v959 = vunpack.c.h.b16 %v369
  %v960 = vunpack.c.l.b16 %v370
  %v961 = vunpack.c.h.b16 %v370
  %v962 = vunpack.c.l.b16 %v371
  %v963 = vunpack.c.h.b16 %v371
  %v964 = vunpack.c.l.b16 %v372
  %v965 = vunpack.c.h.b16 %v372
  %v966 = vunpack.c.l.b16 %v373
  %v967 = vunpack.c.h.b16 %v373
  %v968 = vunpack.c.l.b16 %v374
  %v969 = vunpack.c.h.b16 %v374
  %v970 = vunpack.c.l.b16 %v375
  %v971 = vunpack.c.h.b16 %v375
  %v972 = vunpack.c.l.b16 %v376
  %v973 = vunpack.c.h.b16 %v376
  %v974 = vunpack.c.l.b16 %v377
  %v975 = vunpack.c.h.b16 %v377
  %v976 = vunpack.c.l.b16 %v378
  %v977 = vunpack.c.h.b16 %v378
  %v978 = vunpack.c.l.b16 %v379
  %v979 = vunpack.c.h.b16 %v379
  %v980 = vunpack.c.l.b16 %v380
  %v981 = vunpack.c.h.b16 %v380
  %v982 = vunpack.c.l.b16 %v381
  %v983 = vunpack.c.h.b16 %v381
  %v984 = vunpack.c.l.b16 %v382
  %v985 = vunpack.c.h.b16 %v382
  %v986 = vunpack.c.l.b16 %v383
  %v987 = vunpack.c.h.b16 %v383
  %v988 = vunpack.c.l.b16 %v384
  %v989 = vunpack.c.h.b16 %v384
  %v990 = vunpack.c.l.b16 %v385
  %v991 = vunpack.c.h.b16 %v385
  %v992 = vunpack.c.l.b16 %v386
  %v993 = vunpack.c.h.b16 %v386
  %v994 = vunpack.c.l.b16 %v387
  %v995 = vunpack.c.h.b16 %v387
  %v996 = vunpack.c.l.b16 %v388
  %v997 = vunpack.c.h.b16 %v388
  %v998 = vunpack.c.l.b16 %v389
  %v999 = vunpack.c.h.b16 %v389
  %v1000 = vunpack.c.l.b16 %v390
  %v1001 = vunpack.c.h.b16 %v390
  %v1002 = vunpack.c.l.b16 %v391
  %v1003 = vunpack.c.h.b16 %v391
  %v1004 = vunpack.c.l.b16 %v392
  %v1005 = vunpack.c.h.b16 %v392
  %v1006 = vunpack.c.l.b16 %v393
  %v1007 = vunpack.c.h.b16 %v393
  %v1008 = vunpack.c.l.b16 %v394
  %v1009 = vunpack.c.h.b16 %v394
  %v1010 = vunpack.c.l.b16 %v395
  %v1011 = vunpack.c.h.b16 %v395
  %v1012 = vunpack.c.l.b16 %v396
  %v1013 = vunpack.c.h.b16 %v396
  %v1014 = vunpack.c.l.b16 %v397
  %v1015 = vunpack.c.h.b16 %v397
  %v1016 = vunpack.c.l.b16 %v398
  %v1017 = vunpack.c.h.b16 %v398
  %v1018 = vunpack.c.l.b16 %v399
  %v1019 = vunpack.c.h.b16 %v399
  %v1020 = vunpack.c.l.b16 %v400
  %v1021 = vunpack.c.h.b16 %v400
  %v1022 = vunpack.c.l.b16 %v401
  %v1023 = vunpack.c.h.b16 %v401
  %v1024 = vunpack.c.l.b16 %v402
  %v1025 = vunpack.c.h.b16 %v402
  %v1026 = vunpack.c.l.b16 %v403
  %v1027 = vunpack.c.h.b16 %v403
  %v1028 = vunpack.c.l.b16 %v404
  %v1029 = vunpack.c.h.b16 %v404
  %v1030 = vunpack.c.l.b16 %v405
  %v1031 = vunpack.c.h.b16 %v405
  %v1032 = vunpack.c.l.b16 %v406
  %v1033 = vunpack.c.h.b16 %v406
  %v1034 = vunpack.c.l.b16 %v407
  %v1035 = vunpack.c.h.b16 %v407
  %v1036 = vunpack.c.l.b16 %v408
  %v1037 = vunpack.c.h.b16 %v408
  %v1038 = vunpack.c.l.b16 %v409
  %v1039 = vunpack.c.h.b16 %v409
  %v1040 = vunpack.c.l.b16 %v410
  %v1041 = vunpack.c.h.b16 %v410
  %v1042 = vunpack.c.l.b16 %v411
  %v1043 = vunpack.c.h.b16 %v411
  %v1044 = vunpack.c.l.b16 %v412
  %v1045 = vunpack.c.h.b16 %v412
  %v1046 = vunpack.c.l.b16 %v413
  %v1047 = vunpack.c.h.b16 %v413
  %v1048 = vunpack.c.l.b16 %v414
  %v1049 = vunpack.c.h.b16 %v414
  %v1050 = vunpack.c.l.b16 %v415
  %v1051 = vunpack.c.h.b16 %v415
  %v1052 = vunpack.c.l.b16 %v416
  %v1053 = vunpack.c.h.b16 %v416
  %v1054 = vunpack.c.l.b16 %v417
  %v1055 = vunpack.c.h.b16 %v417
  %v1056 = vunpack.c.l.b16 %v418
  %v1057 = vunpack.c.h.b16 %v418
  %v1058 = vunpack.c.l.b16 %v419
  %v1059 = vunpack.c.h.b16 %v419
  %v1060 = vunpack.c.l.b16 %v420
  %v1061 = vunpack.c.h.b16 %v420
  %v1062 = vunpack.c.l.b16 %v421
  %v1063 = vunpack.c.h.b16 %v421
  %v1064 = vunpack.c.l.b16 %v422
  %v1065 = vunpack.c.h.b16 %v422
  %v1066 = vunpack.c.l.b16 %v423
  %v1067 = vunpack.c.h.b16 %v423
  %v1068 = vunpack.c.l.b16 %v424
  %v1069 = vunpack.c.h.b16 %v424
  %v1070 = vunpack.c.l.b16 %v425
  %v1071 = vunpack.c.h.b16 %v425
  %v1072 = vunpack.c.l.b16 %v426
  %v1073 = vunpack.c.h.b16 %v426
  %v1074 = vunpack.c.l.b16 %v427
  %v1075 = vunpack.c.h.b16 %v427
  %v1076 = vunpack.c.l.b16 %v428
  %v1077 = vunpack.c.h.b16 %v428
  %v1078 = vunpack.c.l.b16 %v429
  %v1079 = vunpack.c.h.b16 %v429
  %v1080 = vunpack.c.l.b16 %v430
  %v1081 = vunpack.c.h.b16 %v430
  %v1082 = vunpack.c.l.b16 %v431
  %v1083 = vunpack.c.h.b16 %v431
  %v1084 = vunpack.c.l.b16 %v432
  %v1085 = vunpack.c.h.b16 %v432
  %v1086 = vunpack.c.l.b16 %v433
  %v1087 = vunpack.c.h.b16 %v433
  %v1088 = vunpack.c.l.b16 %v434
  %v1089 = vunpack.c.h.b16 %v434
  %v1090 = vunpack.c.l.b16 %v435
  %v1091 = vunpack.c.h.b16 %v435
  %v1092 = vunpack.c.l.b16 %v436
  %v1093 = vunpack.c.h.b16 %v436
  %v1094 = vunpack.c.l.b16 %v437
  %v1095 = vunpack.c.h.b16 %v437
  %v1096 = vunpack.c.l.b16 %v438
  %v1097 = vunpack.c.h.b16 %v438
  %v1098 = vunpack.c.l.b16 %v439
  %v1099 = vunpack.c.h.b16 %v439
  %v1100 = vunpack.c.l.b16 %v440
  %v1101 = vunpack.c.h.b16 %v440
  %v1102 = vunpack.c.l.b16 %v441
  %v1103 = vunpack.c.h.b16 %v441
  %v1104 = vunpack.c.l.b16 %v442
  %v1105 = vunpack.c.h.b16 %v442
  %v1106 = vunpack.c.l.b16 %v443
  %v1107 = vunpack.c.h.b16 %v443
  %v1108 = vunpack.c.l.b16 %v444
  %v1109 = vunpack.c.h.b16 %v444
  %v1110 = vunpack.c.l.b16 %v445
  %v1111 = vunpack.c.h.b16 %v445
  %v1112 = vunpack.c.l.b16 %v446
  %v1113 = vunpack.c.h.b16 %v446
  %v1114 = vunpack.c.l.b16 %v447
  %v1115 = vunpack.c.h.b16 %v447
  %v1116 = vunpack.c.l.b16 %v448
  %v1117 = vunpack.c.h.b16 %v448
  %v1118 = vunpack.c.l.b16 %v449
  %v1119 = vunpack.c.h.b16 %v449
  %v1120 = vunpack.c.l.b16 %v450
  %v1121 = vunpack.c.h.b16 %v450
  %v1122 = vunpack.c.l.b16 %v451
  %v1123 = vunpack.c.h.b16 %v451
  %v1124 = vunpack.c.l.b16 %v452
  %v1125 = vunpack.c.h.b16 %v452
  %v1126 = vunpack.c.l.b16 %v453
  %v1127 = vunpack.c.h.b16 %v453
  %v1128 = vunpack.c.l.b16 %v454
  %v1129 = vunpack.c.h.b16 %v454
  %v1130 = vunpack.c.l.b16 %v455
  %v1131 = vunpack.c.h.b16 %v455
  %v1132 = vunpack.c.l.b16 %v456
  %v1133 = vunpack.c.h.b16 %v456
  %v1134 = vunpack.c.l.b16 %v457
  %v1135 = vunpack.c.h.b16 %v457
  %v1136 = vunpack.c.l.b16 %v458
  %v1137 = vunpack.c.h.b16 %v458
  %v1138 = vunpack.c.l.b16 %v459
  %v1139 = vunpack.c.h.b16 %v459
  %v1140 = vunpack.c.l.b16 %v460
  %v1141 = vunpack.c.h.b16 %v460
  %v1142 = vunpack.c.l.b16 %v461
  %v1143 = vunpack.c.h.b16 %v461
  %v1144 = vunpack.c.l.b16 %v462
  %v1145 = vunpack.c.h.b16 %v462
  %v1146 = vunpack.c.l.b16 %v463
  %v1147 = vunpack.c.h.b16 %v463
  %v1148 = vunpack.c.l.b16 %v464
  %v1149 = vunpack.c.h.b16 %v464
  %v1150 = vunpack.c.l.b16 %v465
  %v1151 = vunpack.c.h.b16 %v465
  %v1152 = vunpack.c.l.b16 %v466
  %v1153 = vunpack.c.h.b16 %v466
  %v1154 = vunpack.c.l.b16 %v467
  %v1155 = vunpack.c.h.b16 %v467
  %v1156 = vunpack.c.l.b16 %v468
  %v1157 = vunpack.c.h.b16 %v468
  %v1158 = vunpack.c.l.b16 %v469
  %v1159 = vunpack.c.h.b16 %v469
  %v1160 = vunpack.c.l.b16 %v470
  %v1161 = vunpack.c.h.b16 %v470
  %v1162 = vunpack.c.l.b16 %v471
  %v1163 = vunpack.c.h.b16 %v471
  %v1164 = vunpack.c.l.b16 %v472
  %v1165 = vunpack.c.h.b16 %v472
  %v1166 = vunpack.c.l.b16 %v473
  %v1167 = vunpack.c.h.b16 %v473
  %v1168 = vunpack.c.l.b16 %v474
  %v1169 = vunpack.c.h.b16 %v474
  %v1170 = vunpack.c.l.b16 %v475
  %v1171 = vunpack.c.h.b16 %v475
  %v1172 = vunpack.c.l.b16 %v476
  %v1173 = vunpack.c.h.b16 %v476
  %v1174 = vunpack.c.l.b16 %v477
  %v1175 = vunpack.c.h.b16 %v477
  %v1176 = vunpack.c.l.b16 %v478
  %v1177 = vunpack.c.h.b16 %v478
  %v1178 = vunpack.c.l.b16 %v479
  %v1179 = vunpack.c.h.b16 %v479
  %v1180 = vunpack.c.l.b16 %v480
  %v1181 = vunpack.c.h.b16 %v480
  %v1182 = vunpack.c.l.b16 %v481
  %v1183 = vunpack.c.h.b16 %v481
  %v1184 = vunpack.c.l.b16 %v482
  %v1185 = vunpack.c.h.b16 %v482
  %v1186 = vunpack.c.l.b16 %v483
  %v1187 = vunpack.c.h.b16 %v483
  %v1188 = vunpack.c.l.b16 %v484
  %v1189 = vunpack.c.h.b16 %v484
  %v1190 = vunpack.c.l.b16 %v485
  %v1191 = vunpack.c.h.b16 %v485
  %v1192 = vunpack.c.l.b16 %v486
  %v1193 = vunpack.c.h.b16 %v486
  %v1194 = vunpack.c.l.b16 %v487
  %v1195 = vunpack.c.h.b16 %v487
  %v1196 = vunpack.c.l.b16 %v488
  %v1197 = vunpack.c.h.b16 %v488
  %v1198 = vunpack.c.l.b16 %v489
  %v1199 = vunpack.c.h.b16 %v489
  %v1200 = vunpack.c.l.b16 %v490
  %v1201 = vunpack.c.h.b16 %v490
  %v1202 = vunpack.c.l.b16 %v491
  %v1203 = vunpack.c.h.b16 %v491
  %v1204 = vunpack.c.l.b16 %v492
  %v1205 = vunpack.c.h.b16 %v492
  %v1206 = vunpack.c.l.b16 %v493
  %v1207 = vunpack.c.h.b16 %v493
  %v1208 = vunpack.c.l.b16 %v494
  %v1209 = vunpack.c.h.b16 %v494
  %v1210 = vunpack.c.l.b16 %v495
  %v1211 = vunpack.c.h.b16 %v495
  %v1212 = vunpack.c.l.b16 %v496
  %v1213 = vunpack.c.h.b16 %v496
  %v1214 = vunpack.c.l.b16 %v497
  %v1215 = vunpack.c.h.b16 %v497
  %v1216 = vunpack.c.l.b16 %v498
  %v1217 = vunpack.c.h.b16 %v498
  %v1218 = vunpack.c.l.b16 %v499
  %v1219 = vunpack.c.h.b16 %v499
  %v1220 = vunpack.c.l.b16 %v500
  %v1221 = vunpack.c.h.b16 %v500
  %v1222 = vunpack.c.l.b16 %v501
  %v1223 = vunpack.c.h.b16 %v501
  %v1224 = vunpack.c.l.b16 %v502
  %v1225 = vunpack.c.h.b16 %v502
  %v1226 = vunpack.c.l.b16 %v503
  %v1227 = vunpack.c.h.b16 %v503
  %v1228 = vunpack.c.l.b16 %v504
  %v1229 = vunpack.c.h.b16 %v504
  %v1230 = vunpack.c.l.b16 %v505
  %v1231 = vunpack.c.h.b16 %v505
  %v1232 = vunpack.c.l.b16 %v506
  %v1233 = vunpack.c.h.b16 %v506
  %v1234 = vunpack.c.l.b16 %v507
  %v1235 = vunpack.c.h.b16 %v507
  %v1236 = vunpack.c.l.b16 %v508
  %v1237 = vunpack.c.h.b16 %v508
  %v1238 = vunpack.c.l.b16 %v509
  %v1239 = vunpack.c.h.b16 %v509
  %v1240 = vunpack.c.l.b16 %v510
  %v1241 = vunpack.c.h.b16 %v510
  %v1242 = vunpack.c.l.b16 %v511
  %v1243 = vunpack.c.h.b16 %v511
  %v1244 = vunpack.c.l.b16 %v512
  %v1245 = vunpack.c.h.b16 %v512
  %v1246 = vunpack.c.l.b16 %v513
  %v1247 = vunpack.c.h.b16 %v513
  %v1248 = vunpack.c.l.b16 %v514
  %v1249 = vunpack.c.h.b16 %v514
  %v1250 = vunpack.c.l.b16 %v515
  %v1251 = vunpack.c.h.b16 %v515
  %v1252 = vunpack.c.l.b16 %v516
  %v1253 = vunpack.c.h.b16 %v516
  %v1254 = vunpack.c.l.b16 %v517
  %v1255 = vunpack.c.h.b16 %v517
  %v1256 = vunpack.c.l.b16 %v518
  %v1257 = vunpack.c.h.b16 %v518
  %v1258 = vunpack.c.l.b16 %v519
  %v1259 = vunpack.c.h.b16 %v519
  %v1260 = vunpack.c.l.b16 %v520
  %v1261 = vunpack.c.h.b16 %v520
  %v1262 = vunpack.c.l.b16 %v521
  %v1263 = vunpack.c.h.b16 %v521
  %v1264 = vunpack.c.l.b16 %v522
  %v1265 = vunpack.c.h.b16 %v522
  %v1266 = vunpack.c.l.b16 %v523
  %v1267 = vunpack.c.h.b16 %v523
  %v1268 = vunpack.c.l.b16 %v524
  %v1269 = vunpack.c.h.b16 %v524
  %v1270 = vunpack.c.l.b16 %v525
  %v1271 = vunpack.c.h.b16 %v525
  %v1272 = vunpack.c.l.b16 %v526
  %v1273 = vunpack.c.h.b16 %v526
  %v1274 = vunpack.c.l.b16 %v527
  %v1275 = vunpack.c.h.b16 %v527
  %v1276 = vunpack.c.l.b16 %v528
  %v1277 = vunpack.c.h.b16 %v528
  %v1278 = vunpack.c.l.b16 %v529
  %v1279 = vunpack.c.h.b16 %v529
  %v1280 = vunpack.c.l.b16 %v530
  %v1281 = vunpack.c.h.b16 %v530
  %v1282 = vunpack.c.l.b16 %v531
  %v1283 = vunpack.c.h.b16 %v531
  %v1284 = vunpack.c.l.b16 %v532
  %v1285 = vunpack.c.h.b16 %v532
  %v1286 = vunpack.c.l.b16 %v533
  %v1287 = vunpack.c.h.b16 %v533
  %v1288 = vunpack.c.l.b16 %v534
  %v1289 = vunpack.c.h.b16 %v534
  %v1290 = vunpack.c.l.b16 %v535
  %v1291 = vunpack.c.h.b16 %v535
  %v1292 = vunpack.c.l.b16 %v536
  %v1293 = vunpack.c.h.b16 %v536
  %v1294 = vunpack.c.l.b16 %v537
  %v1295 = vunpack.c.h.b16 %v537
  %v1296 = vunpack.c.l.b16 %v538
  %v1297 = vunpack.c.h.b16 %v538
  %v1298 = vunpack.c.l.b16 %v539
  %v1299 = vunpack.c.h.b16 %v539
  %v1300 = vunpack.c.l.b16 %v540
  %v1301 = vunpack.c.h.b16 %v540
  %v1302 = vunpack.c.l.b16 %v541
  %v1303 = vunpack.c.h.b16 %v541
  %v1304 = vunpack.c.l.b16 %v542
  %v1305 = vunpack.c.h.b16 %v542
  %v1306 = vunpack.c.l.b16 %v543
  %v1307 = vunpack.c.h.b16 %v543
  %v1308 = vunpack.c.l.b16 %v544
  %v1309 = vunpack.c.h.b16 %v544
  %v1310 = vunpack.c.l.b16 %v545
  %v1311 = vunpack.c.h.b16 %v545
  %v1312 = vunpack.c.l.b16 %v546
  %v1313 = vunpack.c.h.b16 %v546
  %v1314 = vunpack.c.l.b16 %v547
  %v1315 = vunpack.c.h.b16 %v547
  %v1316 = vunpack.c.l.b16 %v548
  %v1317 = vunpack.c.h.b16 %v548
  %v1318 = vunpack.c.l.b16 %v549
  %v1319 = vunpack.c.h.b16 %v549
  %v1320 = vunpack.c.l.b16 %v550
  %v1321 = vunpack.c.h.b16 %v550
  %v1322 = vunpack.c.l.b16 %v551
  %v1323 = vunpack.c.h.b16 %v551
  %v1324 = vunpack.c.l.b16 %v552
  %v1325 = vunpack.c.h.b16 %v552
  %v1326 = vunpack.c.l.b16 %v553
  %v1327 = vunpack.c.h.b16 %v553
  %v1328 = vunpack.c.l.b16 %v554
  %v1329 = vunpack.c.h.b16 %v554
  %v1330 = vunpack.c.l.b16 %v555
  %v1331 = vunpack.c.h.b16 %v555
  %v1332 = vunpack.c.l.b16 %v556
  %v1333 = vunpack.c.h.b16 %v556
  %v1334 = vunpack.c.l.b16 %v557
  %v1335 = vunpack.c.h.b16 %v557
  %v1336 = vunpack.c.l.b16 %v558
  %v1337 = vunpack.c.h.b16 %v558
  %v1338 = vunpack.c.l.b16 %v559
  %v1339 = vunpack.c.h.b16 %v559
  %v1340 = vunpack.c.l.b16 %v560
  %v1341 = vunpack.c.h.b16 %v560
  %v1342 = vunpack.c.l.b16 %v561
  %v1343 = vunpack.c.h.b16 %v561
  %v1344 = vunpack.c.l.b16 %v562
  %v1345 = vunpack.c.h.b16 %v562
  %v1346 = vunpack.c.l.b16 %v563
  %v1347 = vunpack.c.h.b16 %v563
  %v1348 = vunpack.c.l.b16 %v564
  %v1349 = vunpack.c.h.b16 %v564
  %v1350 = vunpack.c.l.b16 %v565
  %v1351 = vunpack.c.h.b16 %v565
  %v1352 = vunpack.c.l.b16 %v566
  %v1353 = vunpack.c.h.b16 %v566
  %v1354 = vunpack.c.l.b16 %v567
  %v1355 = vunpack.c.h.b16 %v567
  %v1356 = vunpack.c.l.b16 %v568
  %v1357 = vunpack.c.h.b16 %v568
  %v1358 = vunpack.c.l.b16 %v569
  %v1359 = vunpack.c.h.b16 %v569
  %v1360 = vunpack.c.l.b16 %v570
  %v1361 = vunpack.c.h.b16 %v570
  %v1362 = vunpack.c.l.b16 %v571
  %v1363 = vunpack.c.h.b16 %v571
  %v1364 = vunpack.c.l.b16 %v572
  %v1365 = vunpack.c.h.b16 %v572
  %v1366 = vunpack.c.l.b16 %v573
  %v1367 = vunpack.c.h.b16 %v573
  %v1368 = vunpack.c.l.b16 %v574
  %v1369 = vunpack.c.h.b16 %v574
  %v1370 = vunpack.c.l.b16 %v575
  %v1371 = vunpack.c.h.b16 %v575
  %v1372 = vunpack.c.l.b16 %v576
  %v1373 = vunpack.c.h.b16 %v576
  %v1374 = vunpack.c.l.b16 %v577
  %v1375 = vunpack.c.h.b16 %v577
  %v1376 = vunpack.c.l.b16 %v578
  %v1377 = vunpack.c.h.b16 %v578
  %v1378 = vunpack.c.l.b16 %v579
  %v1379 = vunpack.c.h.b16 %v579
  %v1380 = vunpack.c.l.b16 %v580
  %v1381 = vunpack.c.h.b16 %v580
  %v1382 = vunpack.c.l.b16 %v581
  %v1383 = vunpack.c.h.b16 %v581
  %v1384 = vunpack.c.l.b16 %v582
  %v1385 = vunpack.c.h.b16 %v582
  %v1386 = vunpack.c.l.b16 %v583
  %v1387 = vunpack.c.h.b16 %v583
  %v1388 = vunpack.c.l.b16 %v584
  %v1389 = vunpack.c.h.b16 %v584
  %v1390 = vunpack.c.l.b16 %v585
  %v1391 = vunpack.c.h.b16 %v585
  %v1392 = vunpack.c.l.b16 %v586
  %v1393 = vunpack.c.h.b16 %v586
  %v1394 = vunpack.c.l.b16 %v587
  %v1395 = vunpack.c.h.b16 %v587
  %v1396 = vunpack.c.l.b16 %v588
  %v1397 = vunpack.c.h.b16 %v588
  %v1398 = vunpack.c.l.b16 %v589
  %v1399 = vunpack.c.h.b16 %v589
  %v1400 = vpack.c.b16 %v896, %v888
  %v1401 = vpack.c.b16 %v897, %v889
  %v1402 = vpack.c.b16 %v898, %v890
  %v1403 = vpack.c.b16 %v899, %v891
  %v1404 = vpack.c.b16 %v900, %v892
  %v1405 = vpack.c.b16 %v901, %v893
  %v1406 = vpack.c.b16 %v902, %v894
  %v1407 = vpack.c.b16 %v903, %v895
  %v1408 = vpack.c.b16 %v912, %v904
  %v1409 = vpack.c.b16 %v913, %v905
  %v1410 = vpack.c.b16 %v914, %v906
  %v1411 = vpack.c.b16 %v915, %v907
  %v1412 = vpack.c.b16 %v916, %v908
  %v1413 = vpack.c.b16 %v917, %v909
  %v1414 = vpack.c.b16 %v918, %v910
  %v1415 = vpack.c.b16 %v919, %v911
  %v1416 = vpack.c.b16 %v928, %v920
  %v1417 = vpack.c.b16 %v929, %v921
  %v1418 = vpack.c.b16 %v930, %v922
  %v1419 = vpack.c.b16 %v931, %v923
  %v1420 = vpack.c.b16 %v932, %v924
  %v1421 = vpack.c.b16 %v933, %v925
  %v1422 = vpack.c.b16 %v934, %v926
  %v1423 = vpack.c.b16 %v935, %v927
  %v1424 = vpack.c.b16 %v944, %v936
  %v1425 = vpack.c.b16 %v945, %v937
  %v1426 = vpack.c.b16 %v946, %v938
  %v1427 = vpack.c.b16 %v947, %v939
  %v1428 = vpack.c.b16 %v948, %v940
  %v1429 = vpack.c.b16 %v949, %v941
  %v1430 = vpack.c.b16 %v950, %v942
  %v1431 = vpack.c.b16 %v951, %v943
  %v1432 = vpack.c.b16 %v960, %v952
  %v1433 = vpack.c.b16 %v961, %v953
  %v1434 = vpack.c.b16 %v962, %v954
  %v1435 = vpack.c.b16 %v963, %v955
  %v1436 = vpack.c.b16 %v964, %v956
  %v1437 = vpack.c.b16 %v965, %v957
  %v1438 = vpack.c.b16 %v966, %v958
  %v1439 = vpack.c.b16 %v967, %v959
  %v1440 = vpack.c.b16 %v976, %v968
  %v1441 = vpack.c.b16 %v977, %v969
  %v1442 = vpack.c.b16 %v978, %v970
  %v1443 = vpack.c.b16 %v979, %v971
  %v1444 = vpack.c.b16 %v980, %v972
  %v1445 = vpack.c.b16 %v981, %v973
  %v1446 = vpack.c.b16 %v982, %v974
  %v1447 = vpack.c.b16 %v983, %v975
  %v1448 = vpack.c.b16 %v992, %v984
  %v1449 = vpack.c.b16 %v993, %v985
  %v1450 = vpack.c.b16 %v994, %v986
  %v1451 = vpack.c.b16 %v995, %v987
  %v1452 = vpack.c.b16 %v996, %v988
  %v1453 = vpack.c.b16 %v997, %v989
  %v1454 = vpack.c.b16 %v998, %v990
  %v1455 = vpack.c.b16 %v999, %v991
  %v1456 = vpack.c.b16 %v1008, %v1000
  %v1457 = vpack.c.b16 %v1009, %v1001
  %v1458 = vpack.c.b16 %v1010, %v1002
  %v1459 = vpack.c.b16 %v1011, %v1003
  %v1460 = vpack.c.b16 %v1012, %v1004
  %v1461 = vpack.c.b16 %v1013, %v1005
  %v1462 = vpack.c.b16 %v1014, %v1006
  %v1463 = vpack.c.b16 %v1015, %v1007
  %v1464 = vpack.c.b16 %v1024, %v1016
  %v1465 = vpack.c.b16 %v1025, %v1017
  %v1466 = vpack.c.b16 %v1026, %v1018
  %v1467 = vpack.c.b16 %v1027, %v1019
  %v1468 = vpack.c.b16 %v1028, %v1020
  %v1469 = vpack.c.b16 %v1029, %v1021
  %v1470 = vpack.c.b16 %v1030, %v1022
  %v1471 = vpack.c.b16 %v1031, %v1023
  %v1472 = vpack.c.b16 %v1040, %v1032
  %v1473 = vpack.c.b16 %v1041, %v1033
  %v1474 = vpack.c.b16 %v1042, %v1034
  %v1475 = vpack.c.b16 %v1043, %v1035
  %v1476 = vpack.c.b16 %v1044, %v1036
  %v1477 = vpack.c.b16 %v1045, %v1037
  %v1478 = vpack.c.b16 %v1046, %v1038
  %v1479 = vpack.c.b16 %v1047, %v1039
  %v1480 = vpack.c.b16 %v1056, %v1048
  %v1481 = vpack.c.b16 %v1057, %v1049
  %v1482 = vpack.c.b16 %v1058, %v1050
  %v1483 = vpack.c.b16 %v1059, %v1051
  %v1484 = vpack.c.b16 %v1060, %v1052
  %v1485 = vpack.c.b16 %v1061, %v1053
  %v1486 = vpack.c.b16 %v1062, %v1054
  %v1487 = vpack.c.b16 %v1063, %v1055
  %v1488 = vpack.c.b16 %v1072, %v1064
  %v1489 = vpack.c.b16 %v1073, %v1065
  %v1490 = vpack.c.b16 %v1074, %v1066
  %v1491 = vpack.c.b16 %v1075, %v1067
  %v1492 = vpack.c.b16 %v1076, %v1068
  %v1493 = vpack.c.b16 %v1077, %v1069
  %v1494 = vpack.c.b16 %v1078, %v1070
  %v1495 = vpack.c.b16 %v1079, %v1071
  %v1496 = vpack.c.b16 %v1088, %v1080
  %v1497 = vpack.c.b16 %v1089, %v1081
  %v1498 = vpack.c.b16 %v1090, %v1082
  %v1499 = vpack.c.b16 %v1091, %v1083
  %v1500 = vpack.c.b16 %v1092, %v1084
  %v1501 = vpack.c.b16 %v1093, %v1085
  %v1502 = vpack.c.b16 %v1094, %v1086
  %v1503 = vpack.c.b16 %v1095, %v1087
  %v1504 = vpack.c.b16 %v1104, %v1096
  %v1505 = vpack.c.b16 %v1105, %v1097
  %v1506 = vpack.c.b16 %v1106, %v1098
  %v1507 = vpack.c.b16 %v1107, %v1099
  %v1508 = vpack.c.b16 %v1108, %v1100
  %v1509 = vpack.c.b16 %v1109, %v1101
  %v1510 = vpack.c.b16 %v1110, %v1102
  %v1511 = vpack.c.b16 %v1111, %v1103
  %v1512 = vpack.c.b16 %v1120, %v1112
  %v1513 = vpack.c.b16 %v1121, %v1113
  %v1514 = vpack.c.b16 %v1122, %v1114
  %v1515 = vpack.c.b16 %v1123, %v1115
  %v1516 = vpack.c.b16 %v1124, %v1116
  %v1517 = vpack.c.b16 %v1125, %v1117
  %v1518 = vpack.c.b16 %v1126, %v1118
  %v1519 = vpack.c.b16 %v1127, %v1119
  %v1520 = vpack.c.b16 %v1136, %v1128
  %v1521 = vpack.c.b16 %v1137, %v1129
  %v1522 = vpack.c.b16 %v1138, %v1130
  %v1523 = vpack.c.b16 %v1139, %v1131
  %v1524 = vpack.c.b16 %v1140, %v1132
  %v1525 = vpack.c.b16 %v1141, %v1133
  %v1526 = vpack.c.b16 %v1142, %v1134
  %v1527 = vpack.c.b16 %v1143, %v1135
  %v1528 = vpack.c.b16 %v1152, %v1144
  %v1529 = vpack.c.b16 %v1153, %v1145
  %v1530 = vpack.c.b16 %v1154, %v1146
  %v1531 = vpack.c.b16 %v1155, %v1147
  %v1532 = vpack.c.b16 %v1156, %v1148
  %v1533 = vpack.c.b16 %v1157, %v1149
  %v1534 = vpack.c.b16 %v1158, %v1150
  %v1535 = vpack.c.b16 %v1159, %v1151
  %v1536 = vpack.c.b16 %v1168, %v1160
  %v1537 = vpack.c.b16 %v1169, %v1161
  %v1538 = vpack.c.b16 %v1170, %v1162
  %v1539 = vpack.c.b16 %v1171, %v1163
  %v1540 = vpack.c.b16 %v1172, %v1164
  %v1541 = vpack.c.b16 %v1173, %v1165
  %v1542 = vpack.c.b16 %v1174, %v1166
  %v1543 = vpack.c.b16 %v1175, %v1167
  %v1544 = vpack.c.b16 %v1184, %v1176
  %v1545 = vpack.c.b16 %v1185, %v1177
  %v1546 = vpack.c.b16 %v1186, %v1178
  %v1547 = vpack.c.b16 %v1187, %v1179
  %v1548 = vpack.c.b16 %v1188, %v1180
  %v1549 = vpack.c.b16 %v1189, %v1181
  %v1550 = vpack.c.b16 %v1190, %v1182
  %v1551 = vpack.c.b16 %v1191, %v1183
  %v1552 = vpack.c.b16 %v1200, %v1192
  %v1553 = vpack.c.b16 %v1201, %v1193
  %v1554 = vpack.c.b16 %v1202, %v1194
  %v1555 = vpack.c.b16 %v1203, %v1195
  %v1556 = vpack.c.b16 %v1204, %v1196
  %v1557 = vpack.c.b16 %v1205, %v1197
  %v1558 = vpack.c.b16 %v1206, %v1198
  %v1559 = vpack.c.b16 %v1207, %v1199
  %v1560 = vpack.c.b16 %v1216, %v1208
  %v1561 = vpack.c.b16 %v1217, %v1209
  %v1562 = vpack.c.b16 %v1218, %v1210
  %v1563 = vpack.c.b16 %v1219, %v1211
  %v1564 = vpack.c.b16 %v1220, %v1212
  %v1565 = vpack.c.b16 %v1221, %v1213
  %v1566 = vpack.c.b16 %v1222, %v1214
  %v1567 = vpack.c.b16 %v1223, %v1215
  %v1568 = vpack.c.b16 %v1232, %v1224
  %v1569 = vpack.c.b16 %v1233, %v1225
  %v1570 = vpack.c.b16 %v1234, %v1226
  %v1571 = vpack.c.b16 %v1235, %v1227
  %v1572 = vpack.c.b16 %v1236, %v1228
  %v1573 = vpack.c.b16 %v1237, %v1229
  %v1574 = vpack.c.b16 %v1238, %v1230
  %v1575 = vpack.c.b16 %v1239, %v1231
  %v1576 = vpack.c.b16 %v1248, %v1240
  %v1577 = vpack.c.b16 %v1249, %v1241
  %v1578 = vpack.c.b16 %v1250, %v1242
  %v1579 = vpack.c.b16 %v1251, %v1243
  %v1580 = vpack.c.b16 %v1252, %v1244
  %v1581 = vpack.c.b16 %v1253, %v1245
  %v1582 = vpack.c.b16 %v1254, %v1246
  %v1583 = vpack.c.b16 %v1255, %v1247
  %v1584 = vpack.c.b16 %v1264, %v1256
  %v1585 = vpack.c.b16 %v1265, %v1257
  %v1586 = vpack.c.b16 %v1266, %v1258
  %v1587 = vpack.c.b16 %v1267, %v1259
  %v1588 = vpack.c.b16 %v1268, %v1260
  %v1589 = vpack.c.b16 %v1269, %v1261
  %v1590 = vpack.c.b16 %v1270, %v1262
  %v1591 = vpack.c.b16 %v1271, %v1263
  %v1592 = vpack.c.b16 %v1280, %v1272
  %v1593 = vpack.c.b16 %v1281, %v1273
  %v1594 = vpack.c.b16 %v1282, %v1274
  %v1595 = vpack.c.b16 %v1283, %v1275
  %v1596 = vpack.c.b16 %v1284, %v1276
  %v1597 = vpack.c.b16 %v1285, %v1277
  %v1598 = vpack.c.b16 %v1286, %v1278
  %v1599 = vpack.c.b16 %v1287, %v1279
  %v1600 = vpack.c.b16 %v1296, %v1288
  %v1601 = vpack.c.b16 %v1297, %v1289
  %v1602 = vpack.c.b16 %v1298, %v1290
  %v1603 = vpack.c.b16 %v1299, %v1291
  %v1604 = vpack.c.b16 %v1300, %v1292
  %v1605 = vpack.c.b16 %v1301, %v1293
  %v1606 = vpack.c.b16 %v1302, %v1294
  %v1607 = vpack.c.b16 %v1303, %v1295
  %v1608 = vpack.c.b16 %v1312, %v1304
  %v1609 = vpack.c.b16 %v1313, %v1305
  %v1610 = vpack.c.b16 %v1314, %v1306
  %v1611 = vpack.c.b16 %v1315, %v1307
  %v1612 = vpack.c.b16 %v1316, %v1308
  %v1613 = vpack.c.b16 %v1317, %v1309
  %v1614 = vpack.c.b16 %v1318, %v1310
  %v1615 = vpack.c.b16 %v1319, %v1311
  %v1616 = vpack.c.b16 %v1328, %v1320
  %v1617 = vpack.c.b16 %v1329, %v1321
  %v1618 = vpack.c.b16 %v1330, %v1322
  %v1619 = vpack.c.b16 %v1331, %v1323
  %v1620 = vpack.c.b16 %v1332, %v1324
  %v1621 = vpack.c.b16 %v1333, %v1325
  %v1622 = vpack.c.b16 %v1334, %v1326
  %v1623 = vpack.c.b16 %v1335, %v1327
  %v1624 = vpack.c.b16 %v1344, %v1336
  %v1625 = vpack.c.b16 %v1345, %v1337
  %v1626 = vpack.c.b16 %v1346, %v1338
  %v1627 = vpack.c.b16 %v1347, %v1339
  %v1628 = vpack.c.b16 %v1348, %v1340
  %v1629 = vpack.c.b16 %v1349, %v1341
  %v1630 = vpack.c.b16 %v1350, %v1342
  %v1631 = vpack.c.b16 %v1351, %v1343
  %v1632 = vpack.c.b16 %v1360, %v1352
  %v1633 = vpack.c.b16 %v1361, %v1353
  %v1634 = vpack.c.b16 %v1362, %v1354
  %v1635 = vpack.c.b16 %v1363, %v1355
  %v1636 = vpack.c.b16 %v1364, %v1356
  %v1637 = vpack.c.b16 %v1365, %v1357
  %v1638 = vpack.c.b16 %v1366, %v1358
  %v1639 = vpack.c.b16 %v1367, %v1359
  %v1640 = vpack.c.b16 %v1376, %v1368
  %v1641 = vpack.c.b16 %v1377, %v1369
  %v1642 = vpack.c.b16 %v1378, %v1370
  %v1643 = vpack.c.b16 %v1379, %v1371
  %v1644 = vpack.c.b16 %v1380, %v1372
  %v1645 = vpack.c.b16 %v1381, %v1373
  %v1646 = vpack.c.b16 %v1382, %v1374
  %v1647 = vpack.c.b16 %v1383, %v1375
  %v1648 = vpack.c.b16 %v1392, %v1384
  %v1649 = vpack.c.b16 %v1393, %v1385
  %v1650 = vpack.c.b16 %v1394, %v1386
  %v1651 = vpack.c.b16 %v1395, %v1387
  %v1652 = vpack.c.b16 %v1396, %v1388
  %v1653 = vpack.c.b16 %v1397, %v1389
  %v1654 = vpack.c.b16 %v1398, %v1390
  %v1655 = vpack.c.b16 %v1399, %v1391
  %1912 = vmatprep.subr.bf16.mxu0 %v1401
  %1913 = vmatpush1.bf16.msra.mxu0 %v1400
  %1914 = vmatprep.subr.bf16.mxu0 %v1409
  %1915 = vmatpush1.bf16.msra.mxu0 %v1408
  %1916 = vmatprep.subr.bf16.mxu0 %v1417
  %1917 = vmatpush1.bf16.msra.mxu0 %v1416
  %1918 = vmatprep.subr.bf16.mxu0 %v1425
  %1919 = vmatpush1.bf16.msra.mxu0 %v1424
  %1920 = vmatprep.subr.bf16.mxu0 %v1433
  %1921 = vmatpush1.bf16.msra.mxu0 %v1432
  %1922 = vmatprep.subr.bf16.mxu0 %v1441
  %1923 = vmatpush1.bf16.msra.mxu0 %v1440
  %1924 = vmatprep.subr.bf16.mxu0 %v1449
  %1925 = vmatpush1.bf16.msra.mxu0 %v1448
  %1926 = vmatprep.subr.bf16.mxu0 %v1457
  %1927 = vmatpush1.bf16.msra.mxu0 %v1456
  %1928 = vmatprep.subr.bf16.mxu0 %v1465
  %1929 = vmatpush1.bf16.msra.mxu0 %v1464
  %1930 = vmatprep.subr.bf16.mxu0 %v1473
  %1931 = vmatpush1.bf16.msra.mxu0 %v1472
  %1932 = vmatprep.subr.bf16.mxu0 %v1481
  %1933 = vmatpush1.bf16.msra.mxu0 %v1480
  %1934 = vmatprep.subr.bf16.mxu0 %v1489
  %1935 = vmatpush1.bf16.msra.mxu0 %v1488
  %1936 = vmatprep.subr.bf16.mxu0 %v1497
  %1937 = vmatpush1.bf16.msra.mxu0 %v1496
  %1938 = vmatprep.subr.bf16.mxu0 %v1505
  %1939 = vmatpush1.bf16.msra.mxu0 %v1504
  %1940 = vmatprep.subr.bf16.mxu0 %v1513
  %1941 = vmatpush1.bf16.msra.mxu0 %v1512
  %1942 = vmatprep.subr.bf16.mxu0 %v1521
  %1943 = vmatpush1.bf16.msra.mxu0 %v1520
  %1944 = vmatprep.mubr.bf16.mxu0 %v331
  %1945 = vmatmul.mubr.bf16.gmra.mrb[0].mxu0 %v330
  %v1946 = vpop.f32.mrb[0].mxu0
  %v1947 = vadd.f32 %v595, %v1946
  %v1948 = vpop.f32.mrb[0].mxu0
  %v1949 = vadd.f32 %v599, %v1948
  %v1950 = vpop.f32.mrb[0].mxu0
  %v1951 = vpop.f32.mrb[0].mxu0
  %1952 = vdwg.mxu0
  %1953 = vmatprep.subr.bf16.mxu0 %v1529
  %1954 = vmatpush1.bf16.msra.mxu0 %v1528
  %1955 = vmatprep.subr.bf16.mxu0 %v1537
  %1956 = vmatpush1.bf16.msra.mxu0 %v1536
  %1957 = vmatprep.subr.bf16.mxu0 %v1545
  %1958 = vmatpush1.bf16.msra.mxu0 %v1544
  %1959 = vmatprep.subr.bf16.mxu0 %v1553
  %1960 = vmatpush1.bf16.msra.mxu0 %v1552
  %1961 = vmatprep.subr.bf16.mxu0 %v1561
  %1962 = vmatpush1.bf16.msra.mxu0 %v1560
  %1963 = vmatprep.subr.bf16.mxu0 %v1569
  %1964 = vmatpush1.bf16.msra.mxu0 %v1568
  %1965 = vmatprep.subr.bf16.mxu0 %v1577
  %1966 = vmatpush1.bf16.msra.mxu0 %v1576
  %1967 = vmatprep.subr.bf16.mxu0 %v1585
  %1968 = vmatpush1.bf16.msra.mxu0 %v1584
  %1969 = vmatprep.subr.bf16.mxu0 %v1593
  %1970 = vmatpush1.bf16.msra.mxu0 %v1592
  %1971 = vmatprep.subr.bf16.mxu0 %v1601
  %1972 = vmatpush1.bf16.msra.mxu0 %v1600
  %1973 = vmatprep.subr.bf16.mxu0 %v1609
  %1974 = vmatpush1.bf16.msra.mxu0 %v1608
  %1975 = vmatprep.subr.bf16.mxu0 %v1617
  %1976 = vmatpush1.bf16.msra.mxu0 %v1616
  %1977 = vmatprep.subr.bf16.mxu0 %v1625
  %1978 = vmatpush1.bf16.msra.mxu0 %v1624
  %1979 = vmatprep.subr.bf16.mxu0 %v1633
  %1980 = vmatpush1.bf16.msra.mxu0 %v1632
  %1981 = vmatprep.subr.bf16.mxu0 %v1641
  %1982 = vmatpush1.bf16.msra.mxu0 %v1640
  %1983 = vmatprep.subr.bf16.mxu0 %v1649
  %1984 = vmatpush1.bf16.msra.mxu0 %v1648
  %1985 = vmatprep.mubr.bf16.mxu0 %v333
  %1986 = vmatmul.mubr.bf16.gmra.mrb[0].mxu0 %v332
  %v1987 = vpop.f32.mrb[0].mxu0
  %v1988 = vadd.f32 %v1947, %v1987
  %v1989 = vpop.f32.mrb[0].mxu0
  %v1990 = vadd.f32 %v1949, %v1989
  %v1991 = vpop.f32.mrb[0].mxu0
  %v1992 = vpop.f32.mrb[0].mxu0
  %1993 = vdwg.mxu0
  %1994 = vmatprep.subr.bf16.mxu0 %v1403
  %1995 = vmatpush1.bf16.msra.mxu0 %v1402
  %1996 = vmatprep.subr.bf16.mxu0 %v1411
  %1997 = vmatpush1.bf16.msra.mxu0 %v1410
  %1998 = vmatprep.subr.bf16.mxu0 %v1419
  %1999 = vmatpush1.bf16.msra.mxu0 %v1418
  %2000 = vmatprep.subr.bf16.mxu0 %v1427
  %2001 = vmatpush1.bf16.msra.mxu0 %v1426
  %2002 = vmatprep.subr.bf16.mxu0 %v1435
  %2003 = vmatpush1.bf16.msra.mxu0 %v1434
  %2004 = vmatprep.subr.bf16.mxu0 %v1443
  %2005 = vmatpush1.bf16.msra.mxu0 %v1442
  %2006 = vmatprep.subr.bf16.mxu0 %v1451
  %2007 = vmatpush1.bf16.msra.mxu0 %v1450
  %2008 = vmatprep.subr.bf16.mxu0 %v1459
  %2009 = vmatpush1.bf16.msra.mxu0 %v1458
  %2010 = vmatprep.subr.bf16.mxu0 %v1467
  %2011 = vmatpush1.bf16.msra.mxu0 %v1466
  %2012 = vmatprep.subr.bf16.mxu0 %v1475
  %2013 = vmatpush1.bf16.msra.mxu0 %v1474
  %2014 = vmatprep.subr.bf16.mxu0 %v1483
  %2015 = vmatpush1.bf16.msra.mxu0 %v1482
  %2016 = vmatprep.subr.bf16.mxu0 %v1491
  %2017 = vmatpush1.bf16.msra.mxu0 %v1490
  %2018 = vmatprep.subr.bf16.mxu0 %v1499
  %2019 = vmatpush1.bf16.msra.mxu0 %v1498
  %2020 = vmatprep.subr.bf16.mxu0 %v1507
  %2021 = vmatpush1.bf16.msra.mxu0 %v1506
  %2022 = vmatprep.subr.bf16.mxu0 %v1515
  %2023 = vmatpush1.bf16.msra.mxu0 %v1514
  %2024 = vmatprep.subr.bf16.mxu0 %v1523
  %2025 = vmatpush1.bf16.msra.mxu0 %v1522
  %2026 = vmatprep.mubr.bf16.mxu0 %v331
  %2027 = vmatmul.mubr.bf16.gmra.mrb[0].mxu0 %v330
  %v2028 = vpop.f32.mrb[0].mxu0
  %v2029 = vadd.f32 %v603, %v2028
  %v2030 = vpop.f32.mrb[0].mxu0
  %v2031 = vadd.f32 %v607, %v2030
  %v2032 = vpop.f32.mrb[0].mxu0
  %v2033 = vpop.f32.mrb[0].mxu0
  %2034 = vdwg.mxu0
  %2035 = vmatprep.subr.bf16.mxu0 %v1531
  %2036 = vmatpush1.bf16.msra.mxu0 %v1530
  %2037 = vmatprep.subr.bf16.mxu0 %v1539
  %2038 = vmatpush1.bf16.msra.mxu0 %v1538
  %2039 = vmatprep.subr.bf16.mxu0 %v1547
  %2040 = vmatpush1.bf16.msra.mxu0 %v1546
  %2041 = vmatprep.subr.bf16.mxu0 %v1555
  %2042 = vmatpush1.bf16.msra.mxu0 %v1554
  %2043 = vmatprep.subr.bf16.mxu0 %v1563
  %2044 = vmatpush1.bf16.msra.mxu0 %v1562
  %2045 = vmatprep.subr.bf16.mxu0 %v1571
  %2046 = vmatpush1.bf16.msra.mxu0 %v1570
  %2047 = vmatprep.subr.bf16.mxu0 %v1579
  %2048 = vmatpush1.bf16.msra.mxu0 %v1578
  %2049 = vmatprep.subr.bf16.mxu0 %v1587
  %2050 = vmatpush1.bf16.msra.mxu0 %v1586
  %2051 = vmatprep.subr.bf16.mxu0 %v1595
  %2052 = vmatpush1.bf16.msra.mxu0 %v1594
  %2053 = vmatprep.subr.bf16.mxu0 %v1603
  %2054 = vmatpush1.bf16.msra.mxu0 %v1602
  %2055 = vmatprep.subr.bf16.mxu0 %v1611
  %2056 = vmatpush1.bf16.msra.mxu0 %v1610
  %2057 = vmatprep.subr.bf16.mxu0 %v1619
  %2058 = vmatpush1.bf16.msra.mxu0 %v1618
  %2059 = vmatprep.subr.bf16.mxu0 %v1627
  %2060 = vmatpush1.bf16.msra.mxu0 %v1626
  %2061 = vmatprep.subr.bf16.mxu0 %v1635
  %2062 = vmatpush1.bf16.msra.mxu0 %v1634
  %2063 = vmatprep.subr.bf16.mxu0 %v1643
  %2064 = vmatpush1.bf16.msra.mxu0 %v1642
  %2065 = vmatprep.subr.bf16.mxu0 %v1651
  %2066 = vmatpush1.bf16.msra.mxu0 %v1650
  %2067 = vmatprep.mubr.bf16.mxu0 %v333
  %2068 = vmatmul.mubr.bf16.gmra.mrb[0].mxu0 %v332
  %v2069 = vpop.f32.mrb[0].mxu0
  %v2070 = vadd.f32 %v2029, %v2069
  %v2071 = vpop.f32.mrb[0].mxu0
  %v2072 = vadd.f32 %v2031, %v2071
  %v2073 = vpop.f32.mrb[0].mxu0
  %v2074 = vpop.f32.mrb[0].mxu0
  %2075 = vdwg.mxu0
  %2076 = vmatprep.subr.bf16.mxu0 %v1405
  %2077 = vmatpush1.bf16.msra.mxu0 %v1404
  %2078 = vmatprep.subr.bf16.mxu0 %v1413
  %2079 = vmatpush1.bf16.msra.mxu0 %v1412
  %2080 = vmatprep.subr.bf16.mxu0 %v1421
  %2081 = vmatpush1.bf16.msra.mxu0 %v1420
  %2082 = vmatprep.subr.bf16.mxu0 %v1429
  %2083 = vmatpush1.bf16.msra.mxu0 %v1428
  %2084 = vmatprep.subr.bf16.mxu0 %v1437
  %2085 = vmatpush1.bf16.msra.mxu0 %v1436
  %2086 = vmatprep.subr.bf16.mxu0 %v1445
  %2087 = vmatpush1.bf16.msra.mxu0 %v1444
  %2088 = vmatprep.subr.bf16.mxu0 %v1453
  %2089 = vmatpush1.bf16.msra.mxu0 %v1452
  %2090 = vmatprep.subr.bf16.mxu0 %v1461
  %2091 = vmatpush1.bf16.msra.mxu0 %v1460
  %2092 = vmatprep.subr.bf16.mxu0 %v1469
  %2093 = vmatpush1.bf16.msra.mxu0 %v1468
  %2094 = vmatprep.subr.bf16.mxu0 %v1477
  %2095 = vmatpush1.bf16.msra.mxu0 %v1476
  %2096 = vmatprep.subr.bf16.mxu0 %v1485
  %2097 = vmatpush1.bf16.msra.mxu0 %v1484
  %2098 = vmatprep.subr.bf16.mxu0 %v1493
  %2099 = vmatpush1.bf16.msra.mxu0 %v1492
  %2100 = vmatprep.subr.bf16.mxu0 %v1501
  %2101 = vmatpush1.bf16.msra.mxu0 %v1500
  %2102 = vmatprep.subr.bf16.mxu0 %v1509
  %2103 = vmatpush1.bf16.msra.mxu0 %v1508
  %2104 = vmatprep.subr.bf16.mxu0 %v1517
  %2105 = vmatpush1.bf16.msra.mxu0 %v1516
  %2106 = vmatprep.subr.bf16.mxu0 %v1525
  %2107 = vmatpush1.bf16.msra.mxu0 %v1524
  %2108 = vmatprep.mubr.bf16.mxu0 %v331
  %2109 = vmatmul.mubr.bf16.gmra.mrb[0].mxu0 %v330
  %v2110 = vpop.f32.mrb[0].mxu0
  %v2111 = vadd.f32 %v611, %v2110
  %v2112 = vpop.f32.mrb[0].mxu0
  %v2113 = vadd.f32 %v615, %v2112
  %v2114 = vpop.f32.mrb[0].mxu0
  %v2115 = vpop.f32.mrb[0].mxu0
  %2116 = vdwg.mxu0
  %2117 = vmatprep.subr.bf16.mxu0 %v1533
  %2118 = vmatpush1.bf16.msra.mxu0 %v1532
  %2119 = vmatprep.subr.bf16.mxu0 %v1541
  %2120 = vmatpush1.bf16.msra.mxu0 %v1540
  %2121 = vmatprep.subr.bf16.mxu0 %v1549
  %2122 = vmatpush1.bf16.msra.mxu0 %v1548
  %2123 = vmatprep.subr.bf16.mxu0 %v1557
  %2124 = vmatpush1.bf16.msra.mxu0 %v1556
  %2125 = vmatprep.subr.bf16.mxu0 %v1565
  %2126 = vmatpush1.bf16.msra.mxu0 %v1564
  %2127 = vmatprep.subr.bf16.mxu0 %v1573
  %2128 = vmatpush1.bf16.msra.mxu0 %v1572
  %2129 = vmatprep.subr.bf16.mxu0 %v1581
  %2130 = vmatpush1.bf16.msra.mxu0 %v1580
  %2131 = vmatprep.subr.bf16.mxu0 %v1589
  %2132 = vmatpush1.bf16.msra.mxu0 %v1588
  %2133 = vmatprep.subr.bf16.mxu0 %v1597
  %2134 = vmatpush1.bf16.msra.mxu0 %v1596
  %2135 = vmatprep.subr.bf16.mxu0 %v1605
  %2136 = vmatpush1.bf16.msra.mxu0 %v1604
  %2137 = vmatprep.subr.bf16.mxu0 %v1613
  %2138 = vmatpush1.bf16.msra.mxu0 %v1612
  %2139 = vmatprep.subr.bf16.mxu0 %v1621
  %2140 = vmatpush1.bf16.msra.mxu0 %v1620
  %2141 = vmatprep.subr.bf16.mxu0 %v1629
  %2142 = vmatpush1.bf16.msra.mxu0 %v1628
  %2143 = vmatprep.subr.bf16.mxu0 %v1637
  %2144 = vmatpush1.bf16.msra.mxu0 %v1636
  %2145 = vmatprep.subr.bf16.mxu0 %v1645
  %2146 = vmatpush1.bf16.msra.mxu0 %v1644
  %2147 = vmatprep.subr.bf16.mxu0 %v1653
  %2148 = vmatpush1.bf16.msra.mxu0 %v1652
  %2149 = vmatprep.mubr.bf16.mxu0 %v333
  %2150 = vmatmul.mubr.bf16.gmra.mrb[0].mxu0 %v332
  %v2151 = vpop.f32.mrb[0].mxu0
  %v2152 = vadd.f32 %v2111, %v2151
  %v2153 = vpop.f32.mrb[0].mxu0
  %v2154 = vadd.f32 %v2113, %v2153
  %v2155 = vpop.f32.mrb[0].mxu0
  %v2156 = vpop.f32.mrb[0].mxu0
  %2157 = vdwg.mxu0
  %2158 = vmatprep.subr.bf16.mxu0 %v1407
  %2159 = vmatpush1.bf16.msra.mxu0 %v1406
  %2160 = vmatprep.subr.bf16.mxu0 %v1415
  %2161 = vmatpush1.bf16.msra.mxu0 %v1414
  %2162 = vmatprep.subr.bf16.mxu0 %v1423
  %2163 = vmatpush1.bf16.msra.mxu0 %v1422
  %2164 = vmatprep.subr.bf16.mxu0 %v1431
  %2165 = vmatpush1.bf16.msra.mxu0 %v1430
  %2166 = vmatprep.subr.bf16.mxu0 %v1439
  %2167 = vmatpush1.bf16.msra.mxu0 %v1438
  %2168 = vmatprep.subr.bf16.mxu0 %v1447
  %2169 = vmatpush1.bf16.msra.mxu0 %v1446
  %2170 = vmatprep.subr.bf16.mxu0 %v1455
  %2171 = vmatpush1.bf16.msra.mxu0 %v1454
  %2172 = vmatprep.subr.bf16.mxu0 %v1463
  %2173 = vmatpush1.bf16.msra.mxu0 %v1462
  %2174 = vmatprep.subr.bf16.mxu0 %v1471
  %2175 = vmatpush1.bf16.msra.mxu0 %v1470
  %2176 = vmatprep.subr.bf16.mxu0 %v1479
  %2177 = vmatpush1.bf16.msra.mxu0 %v1478
  %2178 = vmatprep.subr.bf16.mxu0 %v1487
  %2179 = vmatpush1.bf16.msra.mxu0 %v1486
  %2180 = vmatprep.subr.bf16.mxu0 %v1495
  %2181 = vmatpush1.bf16.msra.mxu0 %v1494
  %2182 = vmatprep.subr.bf16.mxu0 %v1503
  %2183 = vmatpush1.bf16.msra.mxu0 %v1502
  %2184 = vmatprep.subr.bf16.mxu0 %v1511
  %2185 = vmatpush1.bf16.msra.mxu0 %v1510
  %2186 = vmatprep.subr.bf16.mxu0 %v1519
  %2187 = vmatpush1.bf16.msra.mxu0 %v1518
  %2188 = vmatprep.subr.bf16.mxu0 %v1527
  %2189 = vmatpush1.bf16.msra.mxu0 %v1526
  %2190 = vmatprep.mubr.bf16.mxu0 %v331
  %2191 = vmatmul.mubr.bf16.gmra.mrb[0].mxu0 %v330
  %v2192 = vpop.f32.mrb[0].mxu0
  %v2193 = vadd.f32 %v619, %v2192
  %v2194 = vpop.f32.mrb[0].mxu0
  %v2195 = vadd.f32 %v623, %v2194
  %v2196 = vpop.f32.mrb[0].mxu0
  %v2197 = vpop.f32.mrb[0].mxu0
  %2198 = vdwg.mxu0
  %2199 = vmatprep.subr.bf16.mxu0 %v1535
  %2200 = vmatpush1.bf16.msra.mxu0 %v1534
  %2201 = vmatprep.subr.bf16.mxu0 %v1543
  %2202 = vmatpush1.bf16.msra.mxu0 %v1542
  %2203 = vmatprep.subr.bf16.mxu0 %v1551
  %2204 = vmatpush1.bf16.msra.mxu0 %v1550
  %2205 = vmatprep.subr.bf16.mxu0 %v1559
  %2206 = vmatpush1.bf16.msra.mxu0 %v1558
  %2207 = vmatprep.subr.bf16.mxu0 %v1567
  %2208 = vmatpush1.bf16.msra.mxu0 %v1566
  %2209 = vmatprep.subr.bf16.mxu0 %v1575
  %2210 = vmatpush1.bf16.msra.mxu0 %v1574
  %2211 = vmatprep.subr.bf16.mxu0 %v1583
  %2212 = vmatpush1.bf16.msra.mxu0 %v1582
  %2213 = vmatprep.subr.bf16.mxu0 %v1591
  %2214 = vmatpush1.bf16.msra.mxu0 %v1590
  %2215 = vmatprep.subr.bf16.mxu0 %v1599
  %2216 = vmatpush1.bf16.msra.mxu0 %v1598
  %2217 = vmatprep.subr.bf16.mxu0 %v1607
  %2218 = vmatpush1.bf16.msra.mxu0 %v1606
  %2219 = vmatprep.subr.bf16.mxu0 %v1615
  %2220 = vmatpush1.bf16.msra.mxu0 %v1614
  %2221 = vmatprep.subr.bf16.mxu0 %v1623
  %2222 = vmatpush1.bf16.msra.mxu0 %v1622
  %2223 = vmatprep.subr.bf16.mxu0 %v1631
  %2224 = vmatpush1.bf16.msra.mxu0 %v1630
  %2225 = vmatprep.subr.bf16.mxu0 %v1639
  %2226 = vmatpush1.bf16.msra.mxu0 %v1638
  %2227 = vmatprep.subr.bf16.mxu0 %v1647
  %2228 = vmatpush1.bf16.msra.mxu0 %v1646
  %2229 = vmatprep.subr.bf16.mxu0 %v1655
  %2230 = vmatpush1.bf16.msra.mxu0 %v1654
  %2231 = vmatprep.mubr.bf16.mxu0 %v333
  %2232 = vmatmul.mubr.bf16.gmra.mrb[0].mxu0 %v332
  %v2233 = vpop.f32.mrb[0].mxu0
  %v2234 = vadd.f32 %v2193, %v2233
  %v2235 = vpop.f32.mrb[0].mxu0
  %v2236 = vadd.f32 %v2195, %v2235
  %v2237 = vpop.f32.mrb[0].mxu0
  %v2238 = vpop.f32.mrb[0].mxu0
  %2239 = vdwg.mxu0
  %v2240 = vmax.f32 %v1988, 0.0
  %v2241 = vmax.f32 %v1990, 0.0
  %v2242 = vmax.f32 %v2070, 0.0
  %v2243 = vmax.f32 %v2072, 0.0
  %v2244 = vmax.f32 %v2152, 0.0
  %v2245 = vmax.f32 %v2154, 0.0
  %v2246 = vmax.f32 %v2234, 0.0
  %v2247 = vmax.f32 %v2236, 0.0
  %v2248 = vpack.c.bf16 %v2240, %v2240
  %v2249 = vpack.c.bf16 %v2241, %v2241
  %v2250 = vpack.c.bf16 %v2242, %v2242
  %v2251 = vpack.c.bf16 %v2243, %v2243
  %v2252 = vpack.c.bf16 %v2244, %v2244
  %v2253 = vpack.c.bf16 %v2245, %v2245
  %v2254 = vpack.c.bf16 %v2246, %v2246
  %v2255 = vpack.c.bf16 %v2247, %v2247
  %v2256 = vld [vmem:[%s7] sm:$0xff]
  %v2257 = vld [vmem:[%s7 + $0x8] sm:$0xff]
  %v2258 = vld [vmem:[%s7 + $0x10] sm:$0xff]
  %v2259 = vld [vmem:[%s7 + $0x18] sm:$0xff]
  %v2260 = vld [vmem:[%s7 + $0x20] sm:$0xff]
  %v2261 = vld [vmem:[%s7 + $0x28] sm:$0xff]
  %v2262 = vld [vmem:[%s7 + $0x30] sm:$0xff]
  %v2263 = vld [vmem:[%s7 + $0x38] sm:$0xff]
  %v2264 = vld [vmem:[%s7 + $0x40] sm:$0xff]
  %v2265 = vld [vmem:[%s7 + $0x48] sm:$0xff]
  %v2266 = vld [vmem:[%s7 + $0x50] sm:$0xff]
  %v2267 = vld [vmem:[%s7 + $0x58] sm:$0xff]
  %v2268 = vld [vmem:[%s7 + $0x60] sm:$0xff]
  %v2269 = vld [vmem:[%s7 + $0x68] sm:$0xff]
  %v2270 = vld [vmem:[%s7 + $0x70] sm:$0xff]
  %v2271 = vld [vmem:[%s7 + $0x78] sm:$0xff]
  %v2272 = vld [vmem:[%s7 + $0x80] sm:$0xff]
  %v2273 = vld [vmem:[%s7 + $0x88] sm:$0xff]
  %v2274 = vld [vmem:[%s7 + $0x90] sm:$0xff]
  %v2275 = vld [vmem:[%s7 + $0x98] sm:$0xff]
  %v2276 = vld [vmem:[%s7 + $0xa0] sm:$0xff]
  %v2277 = vld [vmem:[%s7 + $0xa8] sm:$0xff]
  %v2278 = vld [vmem:[%s7 + $0xb0] sm:$0xff]
  %v2279 = vld [vmem:[%s7 + $0xb8] sm:$0xff]
  %v2280 = vld [vmem:[%s7 + $0xc0] sm:$0xff]
  %v2281 = vld [vmem:[%s7 + $0xc8] sm:$0xff]
  %v2282 = vld [vmem:[%s7 + $0xd0] sm:$0xff]
  %v2283 = vld [vmem:[%s7 + $0xd8] sm:$0xff]
  %v2284 = vld [vmem:[%s7 + $0xe0] sm:$0xff]
  %v2285 = vld [vmem:[%s7 + $0xe8] sm:$0xff]
  %v2286 = vld [vmem:[%s7 + $0xf0] sm:$0xff]
  %v2287 = vld [vmem:[%s7 + $0xf8] sm:$0xff]
  %v2288 = vld [vmem:[%s7 + $0x100] sm:$0xff]
  %v2289 = vld [vmem:[%s7 + $0x108] sm:$0xff]
  %v2290 = vld [vmem:[%s7 + $0x110] sm:$0xff]
  %v2291 = vld [vmem:[%s7 + $0x118] sm:$0xff]
  %v2292 = vld [vmem:[%s7 + $0x120] sm:$0xff]
  %v2293 = vld [vmem:[%s7 + $0x128] sm:$0xff]
  %v2294 = vld [vmem:[%s7 + $0x130] sm:$0xff]
  %v2295 = vld [vmem:[%s7 + $0x138] sm:$0xff]
  %v2296 = vld [vmem:[%s7 + $0x140] sm:$0xff]
  %v2297 = vld [vmem:[%s7 + $0x148] sm:$0xff]
  %v2298 = vld [vmem:[%s7 + $0x150] sm:$0xff]
  %v2299 = vld [vmem:[%s7 + $0x158] sm:$0xff]
  %v2300 = vld [vmem:[%s7 + $0x160] sm:$0xff]
  %v2301 = vld [vmem:[%s7 + $0x168] sm:$0xff]
  %v2302 = vld [vmem:[%s7 + $0x170] sm:$0xff]
  %v2303 = vld [vmem:[%s7 + $0x178] sm:$0xff]
  %v2304 = vld [vmem:[%s7 + $0x180] sm:$0xff]
  %v2305 = vld [vmem:[%s7 + $0x188] sm:$0xff]
  %v2306 = vld [vmem:[%s7 + $0x190] sm:$0xff]
  %v2307 = vld [vmem:[%s7 + $0x198] sm:$0xff]
  %v2308 = vld [vmem:[%s7 + $0x1a0] sm:$0xff]
  %v2309 = vld [vmem:[%s7 + $0x1a8] sm:$0xff]
  %v2310 = vld [vmem:[%s7 + $0x1b0] sm:$0xff]
  %v2311 = vld [vmem:[%s7 + $0x1b8] sm:$0xff]
  %v2312 = vld [vmem:[%s7 + $0x1c0] sm:$0xff]
  %v2313 = vld [vmem:[%s7 + $0x1c8] sm:$0xff]
  %v2314 = vld [vmem:[%s7 + $0x1d0] sm:$0xff]
  %v2315 = vld [vmem:[%s7 + $0x1d8] sm:$0xff]
  %v2316 = vld [vmem:[%s7 + $0x1e0] sm:$0xff]
  %v2317 = vld [vmem:[%s7 + $0x1e8] sm:$0xff]
  %v2318 = vld [vmem:[%s7 + $0x1f0] sm:$0xff]
  %v2319 = vld [vmem:[%s7 + $0x1f8] sm:$0xff]
  %v2320 = vld [vmem:[%s7 + $0x200] sm:$0xff]
  %v2321 = vld [vmem:[%s7 + $0x208] sm:$0xff]
  %v2322 = vld [vmem:[%s7 + $0x210] sm:$0xff]
  %v2323 = vld [vmem:[%s7 + $0x218] sm:$0xff]
  %v2324 = vld [vmem:[%s7 + $0x220] sm:$0xff]
  %v2325 = vld [vmem:[%s7 + $0x228] sm:$0xff]
  %v2326 = vld [vmem:[%s7 + $0x230] sm:$0xff]
  %v2327 = vld [vmem:[%s7 + $0x238] sm:$0xff]
  %v2328 = vld [vmem:[%s7 + $0x240] sm:$0xff]
  %v2329 = vld [vmem:[%s7 + $0x248] sm:$0xff]
  %v2330 = vld [vmem:[%s7 + $0x250] sm:$0xff]
  %v2331 = vld [vmem:[%s7 + $0x258] sm:$0xff]
  %v2332 = vld [vmem:[%s7 + $0x260] sm:$0xff]
  %v2333 = vld [vmem:[%s7 + $0x268] sm:$0xff]
  %v2334 = vld [vmem:[%s7 + $0x270] sm:$0xff]
  %v2335 = vld [vmem:[%s7 + $0x278] sm:$0xff]
  %v2336 = vld [vmem:[%s7 + $0x280] sm:$0xff]
  %v2337 = vld [vmem:[%s7 + $0x288] sm:$0xff]
  %v2338 = vld [vmem:[%s7 + $0x290] sm:$0xff]
  %v2339 = vld [vmem:[%s7 + $0x298] sm:$0xff]
  %v2340 = vld [vmem:[%s7 + $0x2a0] sm:$0xff]
  %v2341 = vld [vmem:[%s7 + $0x2a8] sm:$0xff]
  %v2342 = vld [vmem:[%s7 + $0x2b0] sm:$0xff]
  %v2343 = vld [vmem:[%s7 + $0x2b8] sm:$0xff]
  %v2344 = vld [vmem:[%s7 + $0x2c0] sm:$0xff]
  %v2345 = vld [vmem:[%s7 + $0x2c8] sm:$0xff]
  %v2346 = vld [vmem:[%s7 + $0x2d0] sm:$0xff]
  %v2347 = vld [vmem:[%s7 + $0x2d8] sm:$0xff]
  %v2348 = vld [vmem:[%s7 + $0x2e0] sm:$0xff]
  %v2349 = vld [vmem:[%s7 + $0x2e8] sm:$0xff]
  %v2350 = vld [vmem:[%s7 + $0x2f0] sm:$0xff]
  %v2351 = vld [vmem:[%s7 + $0x2f8] sm:$0xff]
  %v2352 = vld [vmem:[%s7 + $0x300] sm:$0xff]
  %v2353 = vld [vmem:[%s7 + $0x308] sm:$0xff]
  %v2354 = vld [vmem:[%s7 + $0x310] sm:$0xff]
  %v2355 = vld [vmem:[%s7 + $0x318] sm:$0xff]
  %v2356 = vld [vmem:[%s7 + $0x320] sm:$0xff]
  %v2357 = vld [vmem:[%s7 + $0x328] sm:$0xff]
  %v2358 = vld [vmem:[%s7 + $0x330] sm:$0xff]
  %v2359 = vld [vmem:[%s7 + $0x338] sm:$0xff]
  %v2360 = vld [vmem:[%s7 + $0x340] sm:$0xff]
  %v2361 = vld [vmem:[%s7 + $0x348] sm:$0xff]
  %v2362 = vld [vmem:[%s7 + $0x350] sm:$0xff]
  %v2363 = vld [vmem:[%s7 + $0x358] sm:$0xff]
  %v2364 = vld [vmem:[%s7 + $0x360] sm:$0xff]
  %v2365 = vld [vmem:[%s7 + $0x368] sm:$0xff]
  %v2366 = vld [vmem:[%s7 + $0x370] sm:$0xff]
  %v2367 = vld [vmem:[%s7 + $0x378] sm:$0xff]
  %v2368 = vld [vmem:[%s7 + $0x380] sm:$0xff]
  %v2369 = vld [vmem:[%s7 + $0x388] sm:$0xff]
  %v2370 = vld [vmem:[%s7 + $0x390] sm:$0xff]
  %v2371 = vld [vmem:[%s7 + $0x398] sm:$0xff]
  %v2372 = vld [vmem:[%s7 + $0x3a0] sm:$0xff]
  %v2373 = vld [vmem:[%s7 + $0x3a8] sm:$0xff]
  %v2374 = vld [vmem:[%s7 + $0x3b0] sm:$0xff]
  %v2375 = vld [vmem:[%s7 + $0x3b8] sm:$0xff]
  %v2376 = vld [vmem:[%s7 + $0x3c0] sm:$0xff]
  %v2377 = vld [vmem:[%s7 + $0x3c8] sm:$0xff]
  %v2378 = vld [vmem:[%s7 + $0x3d0] sm:$0xff]
  %v2379 = vld [vmem:[%s7 + $0x3d8] sm:$0xff]
  %v2380 = vld [vmem:[%s7 + $0x3e0] sm:$0xff]
  %v2381 = vld [vmem:[%s7 + $0x3e8] sm:$0xff]
  %v2382 = vld [vmem:[%s7 + $0x3f0] sm:$0xff]
  %v2383 = vld [vmem:[%s7 + $0x3f8] sm:$0xff]
  %v2384 = vld [vmem:[%s7 + $0x400] sm:$0xff]
  %v2385 = vld [vmem:[%s7 + $0x408] sm:$0xff]
  %v2386 = vld [vmem:[%s7 + $0x410] sm:$0xff]
  %v2387 = vld [vmem:[%s7 + $0x418] sm:$0xff]
  %v2388 = vld [vmem:[%s7 + $0x420] sm:$0xff]
  %v2389 = vld [vmem:[%s7 + $0x428] sm:$0xff]
  %v2390 = vld [vmem:[%s7 + $0x430] sm:$0xff]
  %v2391 = vld [vmem:[%s7 + $0x438] sm:$0xff]
  %v2392 = vld [vmem:[%s7 + $0x440] sm:$0xff]
  %v2393 = vld [vmem:[%s7 + $0x448] sm:$0xff]
  %v2394 = vld [vmem:[%s7 + $0x450] sm:$0xff]
  %v2395 = vld [vmem:[%s7 + $0x458] sm:$0xff]
  %v2396 = vld [vmem:[%s7 + $0x460] sm:$0xff]
  %v2397 = vld [vmem:[%s7 + $0x468] sm:$0xff]
  %v2398 = vld [vmem:[%s7 + $0x470] sm:$0xff]
  %v2399 = vld [vmem:[%s7 + $0x478] sm:$0xff]
  %v2400 = vld [vmem:[%s7 + $0x480] sm:$0xff]
  %v2401 = vld [vmem:[%s7 + $0x488] sm:$0xff]
  %v2402 = vld [vmem:[%s7 + $0x490] sm:$0xff]
  %v2403 = vld [vmem:[%s7 + $0x498] sm:$0xff]
  %v2404 = vld [vmem:[%s7 + $0x4a0] sm:$0xff]
  %v2405 = vld [vmem:[%s7 + $0x4a8] sm:$0xff]
  %v2406 = vld [vmem:[%s7 + $0x4b0] sm:$0xff]
  %v2407 = vld [vmem:[%s7 + $0x4b8] sm:$0xff]
  %v2408 = vld [vmem:[%s7 + $0x4c0] sm:$0xff]
  %v2409 = vld [vmem:[%s7 + $0x4c8] sm:$0xff]
  %v2410 = vld [vmem:[%s7 + $0x4d0] sm:$0xff]
  %v2411 = vld [vmem:[%s7 + $0x4d8] sm:$0xff]
  %v2412 = vld [vmem:[%s7 + $0x4e0] sm:$0xff]
  %v2413 = vld [vmem:[%s7 + $0x4e8] sm:$0xff]
  %v2414 = vld [vmem:[%s7 + $0x4f0] sm:$0xff]
  %v2415 = vld [vmem:[%s7 + $0x4f8] sm:$0xff]
  %v2416 = vld [vmem:[%s7 + $0x500] sm:$0xff]
  %v2417 = vld [vmem:[%s7 + $0x508] sm:$0xff]
  %v2418 = vld [vmem:[%s7 + $0x510] sm:$0xff]
  %v2419 = vld [vmem:[%s7 + $0x518] sm:$0xff]
  %v2420 = vld [vmem:[%s7 + $0x520] sm:$0xff]
  %v2421 = vld [vmem:[%s7 + $0x528] sm:$0xff]
  %v2422 = vld [vmem:[%s7 + $0x530] sm:$0xff]
  %v2423 = vld [vmem:[%s7 + $0x538] sm:$0xff]
  %v2424 = vld [vmem:[%s7 + $0x540] sm:$0xff]
  %v2425 = vld [vmem:[%s7 + $0x548] sm:$0xff]
  %v2426 = vld [vmem:[%s7 + $0x550] sm:$0xff]
  %v2427 = vld [vmem:[%s7 + $0x558] sm:$0xff]
  %v2428 = vld [vmem:[%s7 + $0x560] sm:$0xff]
  %v2429 = vld [vmem:[%s7 + $0x568] sm:$0xff]
  %v2430 = vld [vmem:[%s7 + $0x570] sm:$0xff]
  %v2431 = vld [vmem:[%s7 + $0x578] sm:$0xff]
  %v2432 = vld [vmem:[%s7 + $0x580] sm:$0xff]
  %v2433 = vld [vmem:[%s7 + $0x588] sm:$0xff]
  %v2434 = vld [vmem:[%s7 + $0x590] sm:$0xff]
  %v2435 = vld [vmem:[%s7 + $0x598] sm:$0xff]
  %v2436 = vld [vmem:[%s7 + $0x5a0] sm:$0xff]
  %v2437 = vld [vmem:[%s7 + $0x5a8] sm:$0xff]
  %v2438 = vld [vmem:[%s7 + $0x5b0] sm:$0xff]
  %v2439 = vld [vmem:[%s7 + $0x5b8] sm:$0xff]
  %v2440 = vld [vmem:[%s7 + $0x5c0] sm:$0xff]
  %v2441 = vld [vmem:[%s7 + $0x5c8] sm:$0xff]
  %v2442 = vld [vmem:[%s7 + $0x5d0] sm:$0xff]
  %v2443 = vld [vmem:[%s7 + $0x5d8] sm:$0xff]
  %v2444 = vld [vmem:[%s7 + $0x5e0] sm:$0xff]
  %v2445 = vld [vmem:[%s7 + $0x5e8] sm:$0xff]
  %v2446 = vld [vmem:[%s7 + $0x5f0] sm:$0xff]
  %v2447 = vld [vmem:[%s7 + $0x5f8] sm:$0xff]
  %v2448 = vld [vmem:[%s7 + $0x600] sm:$0xff]
  %v2449 = vld [vmem:[%s7 + $0x608] sm:$0xff]
  %v2450 = vld [vmem:[%s7 + $0x610] sm:$0xff]
  %v2451 = vld [vmem:[%s7 + $0x618] sm:$0xff]
  %v2452 = vld [vmem:[%s7 + $0x620] sm:$0xff]
  %v2453 = vld [vmem:[%s7 + $0x628] sm:$0xff]
  %v2454 = vld [vmem:[%s7 + $0x630] sm:$0xff]
  %v2455 = vld [vmem:[%s7 + $0x638] sm:$0xff]
  %v2456 = vld [vmem:[%s7 + $0x640] sm:$0xff]
  %v2457 = vld [vmem:[%s7 + $0x648] sm:$0xff]
  %v2458 = vld [vmem:[%s7 + $0x650] sm:$0xff]
  %v2459 = vld [vmem:[%s7 + $0x658] sm:$0xff]
  %v2460 = vld [vmem:[%s7 + $0x660] sm:$0xff]
  %v2461 = vld [vmem:[%s7 + $0x668] sm:$0xff]
  %v2462 = vld [vmem:[%s7 + $0x670] sm:$0xff]
  %v2463 = vld [vmem:[%s7 + $0x678] sm:$0xff]
  %v2464 = vld [vmem:[%s7 + $0x680] sm:$0xff]
  %v2465 = vld [vmem:[%s7 + $0x688] sm:$0xff]
  %v2466 = vld [vmem:[%s7 + $0x690] sm:$0xff]
  %v2467 = vld [vmem:[%s7 + $0x698] sm:$0xff]
  %v2468 = vld [vmem:[%s7 + $0x6a0] sm:$0xff]
  %v2469 = vld [vmem:[%s7 + $0x6a8] sm:$0xff]
  %v2470 = vld [vmem:[%s7 + $0x6b0] sm:$0xff]
  %v2471 = vld [vmem:[%s7 + $0x6b8] sm:$0xff]
  %v2472 = vld [vmem:[%s7 + $0x6c0] sm:$0xff]
  %v2473 = vld [vmem:[%s7 + $0x6c8] sm:$0xff]
  %v2474 = vld [vmem:[%s7 + $0x6d0] sm:$0xff]
  %v2475 = vld [vmem:[%s7 + $0x6d8] sm:$0xff]
  %v2476 = vld [vmem:[%s7 + $0x6e0] sm:$0xff]
  %v2477 = vld [vmem:[%s7 + $0x6e8] sm:$0xff]
  %v2478 = vld [vmem:[%s7 + $0x6f0] sm:$0xff]
  %v2479 = vld [vmem:[%s7 + $0x6f8] sm:$0xff]
  %v2480 = vld [vmem:[%s7 + $0x700] sm:$0xff]
  %v2481 = vld [vmem:[%s7 + $0x708] sm:$0xff]
  %v2482 = vld [vmem:[%s7 + $0x710] sm:$0xff]
  %v2483 = vld [vmem:[%s7 + $0x718] sm:$0xff]
  %v2484 = vld [vmem:[%s7 + $0x720] sm:$0xff]
  %v2485 = vld [vmem:[%s7 + $0x728] sm:$0xff]
  %v2486 = vld [vmem:[%s7 + $0x730] sm:$0xff]
  %v2487 = vld [vmem:[%s7 + $0x738] sm:$0xff]
  %v2488 = vld [vmem:[%s7 + $0x740] sm:$0xff]
  %v2489 = vld [vmem:[%s7 + $0x748] sm:$0xff]
  %v2490 = vld [vmem:[%s7 + $0x750] sm:$0xff]
  %v2491 = vld [vmem:[%s7 + $0x758] sm:$0xff]
  %v2492 = vld [vmem:[%s7 + $0x760] sm:$0xff]
  %v2493 = vld [vmem:[%s7 + $0x768] sm:$0xff]
  %v2494 = vld [vmem:[%s7 + $0x770] sm:$0xff]
  %v2495 = vld [vmem:[%s7 + $0x778] sm:$0xff]
  %v2496 = vld [vmem:[%s7 + $0x780] sm:$0xff]
  %v2497 = vld [vmem:[%s7 + $0x788] sm:$0xff]
  %v2498 = vld [vmem:[%s7 + $0x790] sm:$0xff]
  %v2499 = vld [vmem:[%s7 + $0x798] sm:$0xff]
  %v2500 = vld [vmem:[%s7 + $0x7a0] sm:$0xff]
  %v2501 = vld [vmem:[%s7 + $0x7a8] sm:$0xff]
  %v2502 = vld [vmem:[%s7 + $0x7b0] sm:$0xff]
  %v2503 = vld [vmem:[%s7 + $0x7b8] sm:$0xff]
  %v2504 = vld [vmem:[%s7 + $0x7c0] sm:$0xff]
  %v2505 = vld [vmem:[%s7 + $0x7c8] sm:$0xff]
  %v2506 = vld [vmem:[%s7 + $0x7d0] sm:$0xff]
  %v2507 = vld [vmem:[%s7 + $0x7d8] sm:$0xff]
  %v2508 = vld [vmem:[%s7 + $0x7e0] sm:$0xff]
  %v2509 = vld [vmem:[%s7 + $0x7e8] sm:$0xff]
  %v2510 = vld [vmem:[%s7 + $0x7f0] sm:$0xff]
  %v2511 = vld [vmem:[%s7 + $0x7f8] sm:$0xff]
  %v2512 = vld [vmem:[%s8] sm:$0xf]
  %v2514 = vlaneseq
  %v2515 = vshrl.u32 %v2514, 7
  %v2516 = vsub.s32 0, %v2515
  %v2517 = vrot.slane %v2512, %v2516
  %v2518 = vlaneseq
  %v2519 = vshrl.u32 %v2518, 7
  %v2520 = vsub.s32 1, %v2519
  %v2521 = vrot.slane %v2512, %v2520
  %v2522 = vlaneseq
  %v2523 = vshrl.u32 %v2522, 7
  %v2524 = vsub.s32 2, %v2523
  %v2525 = vrot.slane %v2512, %v2524
  %v2526 = vlaneseq
  %v2527 = vshrl.u32 %v2526, 7
  %v2528 = vsub.s32 3, %v2527
  %v2529 = vrot.slane %v2512, %v2528
  %v2790 = vunpack.c.l.b16 %v2256
  %v2791 = vunpack.c.h.b16 %v2256
  %v2792 = vunpack.c.l.b16 %v2257
  %v2793 = vunpack.c.h.b16 %v2257
  %v2794 = vunpack.c.l.b16 %v2258
  %v2795 = vunpack.c.h.b16 %v2258
  %v2796 = vunpack.c.l.b16 %v2259
  %v2797 = vunpack.c.h.b16 %v2259
  %v2798 = vunpack.c.l.b16 %v2260
  %v2799 = vunpack.c.h.b16 %v2260
  %v2800 = vunpack.c.l.b16 %v2261
  %v2801 = vunpack.c.h.b16 %v2261
  %v2802 = vunpack.c.l.b16 %v2262
  %v2803 = vunpack.c.h.b16 %v2262
  %v2804 = vunpack.c.l.b16 %v2263
  %v2805 = vunpack.c.h.b16 %v2263
  %v2806 = vunpack.c.l.b16 %v2264
  %v2807 = vunpack.c.h.b16 %v2264
  %v2808 = vunpack.c.l.b16 %v2265
  %v2809 = vunpack.c.h.b16 %v2265
  %v2810 = vunpack.c.l.b16 %v2266
  %v2811 = vunpack.c.h.b16 %v2266
  %v2812 = vunpack.c.l.b16 %v2267
  %v2813 = vunpack.c.h.b16 %v2267
  %v2814 = vunpack.c.l.b16 %v2268
  %v2815 = vunpack.c.h.b16 %v2268
  %v2816 = vunpack.c.l.b16 %v2269
  %v2817 = vunpack.c.h.b16 %v2269
  %v2818 = vunpack.c.l.b16 %v2270
  %v2819 = vunpack.c.h.b16 %v2270
  %v2820 = vunpack.c.l.b16 %v2271
  %v2821 = vunpack.c.h.b16 %v2271
  %v2822 = vunpack.c.l.b16 %v2272
  %v2823 = vunpack.c.h.b16 %v2272
  %v2824 = vunpack.c.l.b16 %v2273
  %v2825 = vunpack.c.h.b16 %v2273
  %v2826 = vunpack.c.l.b16 %v2274
  %v2827 = vunpack.c.h.b16 %v2274
  %v2828 = vunpack.c.l.b16 %v2275
  %v2829 = vunpack.c.h.b16 %v2275
  %v2830 = vunpack.c.l.b16 %v2276
  %v2831 = vunpack.c.h.b16 %v2276
  %v2832 = vunpack.c.l.b16 %v2277
  %v2833 = vunpack.c.h.b16 %v2277
  %v2834 = vunpack.c.l.b16 %v2278
  %v2835 = vunpack.c.h.b16 %v2278
  %v2836 = vunpack.c.l.b16 %v2279
  %v2837 = vunpack.c.h.b16 %v2279
  %v2838 = vunpack.c.l.b16 %v2280
  %v2839 = vunpack.c.h.b16 %v2280
  %v2840 = vunpack.c.l.b16 %v2281
  %v2841 = vunpack.c.h.b16 %v2281
  %v2842 = vunpack.c.l.b16 %v2282
  %v2843 = vunpack.c.h.b16 %v2282
  %v2844 = vunpack.c.l.b16 %v2283
  %v2845 = vunpack.c.h.b16 %v2283
  %v2846 = vunpack.c.l.b16 %v2284
  %v2847 = vunpack.c.h.b16 %v2284
  %v2848 = vunpack.c.l.b16 %v2285
  %v2849 = vunpack.c.h.b16 %v2285
  %v2850 = vunpack.c.l.b16 %v2286
  %v2851 = vunpack.c.h.b16 %v2286
  %v2852 = vunpack.c.l.b16 %v2287
  %v2853 = vunpack.c.h.b16 %v2287
  %v2854 = vunpack.c.l.b16 %v2288
  %v2855 = vunpack.c.h.b16 %v2288
  %v2856 = vunpack.c.l.b16 %v2289
  %v2857 = vunpack.c.h.b16 %v2289
  %v2858 = vunpack.c.l.b16 %v2290
  %v2859 = vunpack.c.h.b16 %v2290
  %v2860 = vunpack.c.l.b16 %v2291
  %v2861 = vunpack.c.h.b16 %v2291
  %v2862 = vunpack.c.l.b16 %v2292
  %v2863 = vunpack.c.h.b16 %v2292
  %v2864 = vunpack.c.l.b16 %v2293
  %v2865 = vunpack.c.h.b16 %v2293
  %v2866 = vunpack.c.l.b16 %v2294
  %v2867 = vunpack.c.h.b16 %v2294
  %v2868 = vunpack.c.l.b16 %v2295
  %v2869 = vunpack.c.h.b16 %v2295
  %v2870 = vunpack.c.l.b16 %v2296
  %v2871 = vunpack.c.h.b16 %v2296
  %v2872 = vunpack.c.l.b16 %v2297
  %v2873 = vunpack.c.h.b16 %v2297
  %v2874 = vunpack.c.l.b16 %v2298
  %v2875 = vunpack.c.h.b16 %v2298
  %v2876 = vunpack.c.l.b16 %v2299
  %v2877 = vunpack.c.h.b16 %v2299
  %v2878 = vunpack.c.l.b16 %v2300
  %v2879 = vunpack.c.h.b16 %v2300
  %v2880 = vunpack.c.l.b16 %v2301
  %v2881 = vunpack.c.h.b16 %v2301
  %v2882 = vunpack.c.l.b16 %v2302
  %v2883 = vunpack.c.h.b16 %v2302
  %v2884 = vunpack.c.l.b16 %v2303
  %v2885 = vunpack.c.h.b16 %v2303
  %v2886 = vunpack.c.l.b16 %v2304
  %v2887 = vunpack.c.h.b16 %v2304
  %v2888 = vunpack.c.l.b16 %v2305
  %v2889 = vunpack.c.h.b16 %v2305
  %v2890 = vunpack.c.l.b16 %v2306
  %v2891 = vunpack.c.h.b16 %v2306
  %v2892 = vunpack.c.l.b16 %v2307
  %v2893 = vunpack.c.h.b16 %v2307
  %v2894 = vunpack.c.l.b16 %v2308
  %v2895 = vunpack.c.h.b16 %v2308
  %v2896 = vunpack.c.l.b16 %v2309
  %v2897 = vunpack.c.h.b16 %v2309
  %v2898 = vunpack.c.l.b16 %v2310
  %v2899 = vunpack.c.h.b16 %v2310
  %v2900 = vunpack.c.l.b16 %v2311
  %v2901 = vunpack.c.h.b16 %v2311
  %v2902 = vunpack.c.l.b16 %v2312
  %v2903 = vunpack.c.h.b16 %v2312
  %v2904 = vunpack.c.l.b16 %v2313
  %v2905 = vunpack.c.h.b16 %v2313
  %v2906 = vunpack.c.l.b16 %v2314
  %v2907 = vunpack.c.h.b16 %v2314
  %v2908 = vunpack.c.l.b16 %v2315
  %v2909 = vunpack.c.h.b16 %v2315
  %v2910 = vunpack.c.l.b16 %v2316
  %v2911 = vunpack.c.h.b16 %v2316
  %v2912 = vunpack.c.l.b16 %v2317
  %v2913 = vunpack.c.h.b16 %v2317
  %v2914 = vunpack.c.l.b16 %v2318
  %v2915 = vunpack.c.h.b16 %v2318
  %v2916 = vunpack.c.l.b16 %v2319
  %v2917 = vunpack.c.h.b16 %v2319
  %v2918 = vunpack.c.l.b16 %v2320
  %v2919 = vunpack.c.h.b16 %v2320
  %v2920 = vunpack.c.l.b16 %v2321
  %v2921 = vunpack.c.h.b16 %v2321
  %v2922 = vunpack.c.l.b16 %v2322
  %v2923 = vunpack.c.h.b16 %v2322
  %v2924 = vunpack.c.l.b16 %v2323
  %v2925 = vunpack.c.h.b16 %v2323
  %v2926 = vunpack.c.l.b16 %v2324
  %v2927 = vunpack.c.h.b16 %v2324
  %v2928 = vunpack.c.l.b16 %v2325
  %v2929 = vunpack.c.h.b16 %v2325
  %v2930 = vunpack.c.l.b16 %v2326
  %v2931 = vunpack.c.h.b16 %v2326
  %v2932 = vunpack.c.l.b16 %v2327
  %v2933 = vunpack.c.h.b16 %v2327
  %v2934 = vunpack.c.l.b16 %v2328
  %v2935 = vunpack.c.h.b16 %v2328
  %v2936 = vunpack.c.l.b16 %v2329
  %v2937 = vunpack.c.h.b16 %v2329
  %v2938 = vunpack.c.l.b16 %v2330
  %v2939 = vunpack.c.h.b16 %v2330
  %v2940 = vunpack.c.l.b16 %v2331
  %v2941 = vunpack.c.h.b16 %v2331
  %v2942 = vunpack.c.l.b16 %v2332
  %v2943 = vunpack.c.h.b16 %v2332
  %v2944 = vunpack.c.l.b16 %v2333
  %v2945 = vunpack.c.h.b16 %v2333
  %v2946 = vunpack.c.l.b16 %v2334
  %v2947 = vunpack.c.h.b16 %v2334
  %v2948 = vunpack.c.l.b16 %v2335
  %v2949 = vunpack.c.h.b16 %v2335
  %v2950 = vunpack.c.l.b16 %v2336
  %v2951 = vunpack.c.h.b16 %v2336
  %v2952 = vunpack.c.l.b16 %v2337
  %v2953 = vunpack.c.h.b16 %v2337
  %v2954 = vunpack.c.l.b16 %v2338
  %v2955 = vunpack.c.h.b16 %v2338
  %v2956 = vunpack.c.l.b16 %v2339
  %v2957 = vunpack.c.h.b16 %v2339
  %v2958 = vunpack.c.l.b16 %v2340
  %v2959 = vunpack.c.h.b16 %v2340
  %v2960 = vunpack.c.l.b16 %v2341
  %v2961 = vunpack.c.h.b16 %v2341
  %v2962 = vunpack.c.l.b16 %v2342
  %v2963 = vunpack.c.h.b16 %v2342
  %v2964 = vunpack.c.l.b16 %v2343
  %v2965 = vunpack.c.h.b16 %v2343
  %v2966 = vunpack.c.l.b16 %v2344
  %v2967 = vunpack.c.h.b16 %v2344
  %v2968 = vunpack.c.l.b16 %v2345
  %v2969 = vunpack.c.h.b16 %v2345
  %v2970 = vunpack.c.l.b16 %v2346
  %v2971 = vunpack.c.h.b16 %v2346
  %v2972 = vunpack.c.l.b16 %v2347
  %v2973 = vunpack.c.h.b16 %v2347
  %v2974 = vunpack.c.l.b16 %v2348
  %v2975 = vunpack.c.h.b16 %v2348
  %v2976 = vunpack.c.l.b16 %v2349
  %v2977 = vunpack.c.h.b16 %v2349
  %v2978 = vunpack.c.l.b16 %v2350
  %v2979 = vunpack.c.h.b16 %v2350
  %v2980 = vunpack.c.l.b16 %v2351
  %v2981 = vunpack.c.h.b16 %v2351
  %v2982 = vunpack.c.l.b16 %v2352
  %v2983 = vunpack.c.h.b16 %v2352
  %v2984 = vunpack.c.l.b16 %v2353
  %v2985 = vunpack.c.h.b16 %v2353
  %v2986 = vunpack.c.l.b16 %v2354
  %v2987 = vunpack.c.h.b16 %v2354
  %v2988 = vunpack.c.l.b16 %v2355
  %v2989 = vunpack.c.h.b16 %v2355
  %v2990 = vunpack.c.l.b16 %v2356
  %v2991 = vunpack.c.h.b16 %v2356
  %v2992 = vunpack.c.l.b16 %v2357
  %v2993 = vunpack.c.h.b16 %v2357
  %v2994 = vunpack.c.l.b16 %v2358
  %v2995 = vunpack.c.h.b16 %v2358
  %v2996 = vunpack.c.l.b16 %v2359
  %v2997 = vunpack.c.h.b16 %v2359
  %v2998 = vunpack.c.l.b16 %v2360
  %v2999 = vunpack.c.h.b16 %v2360
  %v3000 = vunpack.c.l.b16 %v2361
  %v3001 = vunpack.c.h.b16 %v2361
  %v3002 = vunpack.c.l.b16 %v2362
  %v3003 = vunpack.c.h.b16 %v2362
  %v3004 = vunpack.c.l.b16 %v2363
  %v3005 = vunpack.c.h.b16 %v2363
  %v3006 = vunpack.c.l.b16 %v2364
  %v3007 = vunpack.c.h.b16 %v2364
  %v3008 = vunpack.c.l.b16 %v2365
  %v3009 = vunpack.c.h.b16 %v2365
  %v3010 = vunpack.c.l.b16 %v2366
  %v3011 = vunpack.c.h.b16 %v2366
  %v3012 = vunpack.c.l.b16 %v2367
  %v3013 = vunpack.c.h.b16 %v2367
  %v3014 = vunpack.c.l.b16 %v2368
  %v3015 = vunpack.c.h.b16 %v2368
  %v3016 = vunpack.c.l.b16 %v2369
  %v3017 = vunpack.c.h.b16 %v2369
  %v3018 = vunpack.c.l.b16 %v2370
  %v3019 = vunpack.c.h.b16 %v2370
  %v3020 = vunpack.c.l.b16 %v2371
  %v3021 = vunpack.c.h.b16 %v2371
  %v3022 = vunpack.c.l.b16 %v2372
  %v3023 = vunpack.c.h.b16 %v2372
  %v3024 = vunpack.c.l.b16 %v2373
  %v3025 = vunpack.c.h.b16 %v2373
  %v3026 = vunpack.c.l.b16 %v2374
  %v3027 = vunpack.c.h.b16 %v2374
  %v3028 = vunpack.c.l.b16 %v2375
  %v3029 = vunpack.c.h.b16 %v2375
  %v3030 = vunpack.c.l.b16 %v2376
  %v3031 = vunpack.c.h.b16 %v2376
  %v3032 = vunpack.c.l.b16 %v2377
  %v3033 = vunpack.c.h.b16 %v2377
  %v3034 = vunpack.c.l.b16 %v2378
  %v3035 = vunpack.c.h.b16 %v2378
  %v3036 = vunpack.c.l.b16 %v2379
  %v3037 = vunpack.c.h.b16 %v2379
  %v3038 = vunpack.c.l.b16 %v2380
  %v3039 = vunpack.c.h.b16 %v2380
  %v3040 = vunpack.c.l.b16 %v2381
  %v3041 = vunpack.c.h.b16 %v2381
  %v3042 = vunpack.c.l.b16 %v2382
  %v3043 = vunpack.c.h.b16 %v2382
  %v3044 = vunpack.c.l.b16 %v2383
  %v3045 = vunpack.c.h.b16 %v2383
  %v3046 = vunpack.c.l.b16 %v2384
  %v3047 = vunpack.c.h.b16 %v2384
  %v3048 = vunpack.c.l.b16 %v2385
  %v3049 = vunpack.c.h.b16 %v2385
  %v3050 = vunpack.c.l.b16 %v2386
  %v3051 = vunpack.c.h.b16 %v2386
  %v3052 = vunpack.c.l.b16 %v2387
  %v3053 = vunpack.c.h.b16 %v2387
  %v3054 = vunpack.c.l.b16 %v2388
  %v3055 = vunpack.c.h.b16 %v2388
  %v3056 = vunpack.c.l.b16 %v2389
  %v3057 = vunpack.c.h.b16 %v2389
  %v3058 = vunpack.c.l.b16 %v2390
  %v3059 = vunpack.c.h.b16 %v2390
  %v3060 = vunpack.c.l.b16 %v2391
  %v3061 = vunpack.c.h.b16 %v2391
  %v3062 = vunpack.c.l.b16 %v2392
  %v3063 = vunpack.c.h.b16 %v2392
  %v3064 = vunpack.c.l.b16 %v2393
  %v3065 = vunpack.c.h.b16 %v2393
  %v3066 = vunpack.c.l.b16 %v2394
  %v3067 = vunpack.c.h.b16 %v2394
  %v3068 = vunpack.c.l.b16 %v2395
  %v3069 = vunpack.c.h.b16 %v2395
  %v3070 = vunpack.c.l.b16 %v2396
  %v3071 = vunpack.c.h.b16 %v2396
  %v3072 = vunpack.c.l.b16 %v2397
  %v3073 = vunpack.c.h.b16 %v2397
  %v3074 = vunpack.c.l.b16 %v2398
  %v3075 = vunpack.c.h.b16 %v2398
  %v3076 = vunpack.c.l.b16 %v2399
  %v3077 = vunpack.c.h.b16 %v2399
  %v3078 = vunpack.c.l.b16 %v2400
  %v3079 = vunpack.c.h.b16 %v2400
  %v3080 = vunpack.c.l.b16 %v2401
  %v3081 = vunpack.c.h.b16 %v2401
  %v3082 = vunpack.c.l.b16 %v2402
  %v3083 = vunpack.c.h.b16 %v2402
  %v3084 = vunpack.c.l.b16 %v2403
  %v3085 = vunpack.c.h.b16 %v2403
  %v3086 = vunpack.c.l.b16 %v2404
  %v3087 = vunpack.c.h.b16 %v2404
  %v3088 = vunpack.c.l.b16 %v2405
  %v3089 = vunpack.c.h.b16 %v2405
  %v3090 = vunpack.c.l.b16 %v2406
  %v3091 = vunpack.c.h.b16 %v2406
  %v3092 = vunpack.c.l.b16 %v2407
  %v3093 = vunpack.c.h.b16 %v2407
  %v3094 = vunpack.c.l.b16 %v2408
  %v3095 = vunpack.c.h.b16 %v2408
  %v3096 = vunpack.c.l.b16 %v2409
  %v3097 = vunpack.c.h.b16 %v2409
  %v3098 = vunpack.c.l.b16 %v2410
  %v3099 = vunpack.c.h.b16 %v2410
  %v3100 = vunpack.c.l.b16 %v2411
  %v3101 = vunpack.c.h.b16 %v2411
  %v3102 = vunpack.c.l.b16 %v2412
  %v3103 = vunpack.c.h.b16 %v2412
  %v3104 = vunpack.c.l.b16 %v2413
  %v3105 = vunpack.c.h.b16 %v2413
  %v3106 = vunpack.c.l.b16 %v2414
  %v3107 = vunpack.c.h.b16 %v2414
  %v3108 = vunpack.c.l.b16 %v2415
  %v3109 = vunpack.c.h.b16 %v2415
  %v3110 = vunpack.c.l.b16 %v2416
  %v3111 = vunpack.c.h.b16 %v2416
  %v3112 = vunpack.c.l.b16 %v2417
  %v3113 = vunpack.c.h.b16 %v2417
  %v3114 = vunpack.c.l.b16 %v2418
  %v3115 = vunpack.c.h.b16 %v2418
  %v3116 = vunpack.c.l.b16 %v2419
  %v3117 = vunpack.c.h.b16 %v2419
  %v3118 = vunpack.c.l.b16 %v2420
  %v3119 = vunpack.c.h.b16 %v2420
  %v3120 = vunpack.c.l.b16 %v2421
  %v3121 = vunpack.c.h.b16 %v2421
  %v3122 = vunpack.c.l.b16 %v2422
  %v3123 = vunpack.c.h.b16 %v2422
  %v3124 = vunpack.c.l.b16 %v2423
  %v3125 = vunpack.c.h.b16 %v2423
  %v3126 = vunpack.c.l.b16 %v2424
  %v3127 = vunpack.c.h.b16 %v2424
  %v3128 = vunpack.c.l.b16 %v2425
  %v3129 = vunpack.c.h.b16 %v2425
  %v3130 = vunpack.c.l.b16 %v2426
  %v3131 = vunpack.c.h.b16 %v2426
  %v3132 = vunpack.c.l.b16 %v2427
  %v3133 = vunpack.c.h.b16 %v2427
  %v3134 = vunpack.c.l.b16 %v2428
  %v3135 = vunpack.c.h.b16 %v2428
  %v3136 = vunpack.c.l.b16 %v2429
  %v3137 = vunpack.c.h.b16 %v2429
  %v3138 = vunpack.c.l.b16 %v2430
  %v3139 = vunpack.c.h.b16 %v2430
  %v3140 = vunpack.c.l.b16 %v2431
  %v3141 = vunpack.c.h.b16 %v2431
  %v3142 = vunpack.c.l.b16 %v2432
  %v3143 = vunpack.c.h.b16 %v2432
  %v3144 = vunpack.c.l.b16 %v2433
  %v3145 = vunpack.c.h.b16 %v2433
  %v3146 = vunpack.c.l.b16 %v2434
  %v3147 = vunpack.c.h.b16 %v2434
  %v3148 = vunpack.c.l.b16 %v2435
  %v3149 = vunpack.c.h.b16 %v2435
  %v3150 = vunpack.c.l.b16 %v2436
  %v3151 = vunpack.c.h.b16 %v2436
  %v3152 = vunpack.c.l.b16 %v2437
  %v3153 = vunpack.c.h.b16 %v2437
  %v3154 = vunpack.c.l.b16 %v2438
  %v3155 = vunpack.c.h.b16 %v2438
  %v3156 = vunpack.c.l.b16 %v2439
  %v3157 = vunpack.c.h.b16 %v2439
  %v3158 = vunpack.c.l.b16 %v2440
  %v3159 = vunpack.c.h.b16 %v2440
  %v3160 = vunpack.c.l.b16 %v2441
  %v3161 = vunpack.c.h.b16 %v2441
  %v3162 = vunpack.c.l.b16 %v2442
  %v3163 = vunpack.c.h.b16 %v2442
  %v3164 = vunpack.c.l.b16 %v2443
  %v3165 = vunpack.c.h.b16 %v2443
  %v3166 = vunpack.c.l.b16 %v2444
  %v3167 = vunpack.c.h.b16 %v2444
  %v3168 = vunpack.c.l.b16 %v2445
  %v3169 = vunpack.c.h.b16 %v2445
  %v3170 = vunpack.c.l.b16 %v2446
  %v3171 = vunpack.c.h.b16 %v2446
  %v3172 = vunpack.c.l.b16 %v2447
  %v3173 = vunpack.c.h.b16 %v2447
  %v3174 = vunpack.c.l.b16 %v2448
  %v3175 = vunpack.c.h.b16 %v2448
  %v3176 = vunpack.c.l.b16 %v2449
  %v3177 = vunpack.c.h.b16 %v2449
  %v3178 = vunpack.c.l.b16 %v2450
  %v3179 = vunpack.c.h.b16 %v2450
  %v3180 = vunpack.c.l.b16 %v2451
  %v3181 = vunpack.c.h.b16 %v2451
  %v3182 = vunpack.c.l.b16 %v2452
  %v3183 = vunpack.c.h.b16 %v2452
  %v3184 = vunpack.c.l.b16 %v2453
  %v3185 = vunpack.c.h.b16 %v2453
  %v3186 = vunpack.c.l.b16 %v2454
  %v3187 = vunpack.c.h.b16 %v2454
  %v3188 = vunpack.c.l.b16 %v2455
  %v3189 = vunpack.c.h.b16 %v2455
  %v3190 = vunpack.c.l.b16 %v2456
  %v3191 = vunpack.c.h.b16 %v2456
  %v3192 = vunpack.c.l.b16 %v2457
  %v3193 = vunpack.c.h.b16 %v2457
  %v3194 = vunpack.c.l.b16 %v2458
  %v3195 = vunpack.c.h.b16 %v2458
  %v3196 = vunpack.c.l.b16 %v2459
  %v3197 = vunpack.c.h.b16 %v2459
  %v3198 = vunpack.c.l.b16 %v2460
  %v3199 = vunpack.c.h.b16 %v2460
  %v3200 = vunpack.c.l.b16 %v2461
  %v3201 = vunpack.c.h.b16 %v2461
  %v3202 = vunpack.c.l.b16 %v2462
  %v3203 = vunpack.c.h.b16 %v2462
  %v3204 = vunpack.c.l.b16 %v2463
  %v3205 = vunpack.c.h.b16 %v2463
  %v3206 = vunpack.c.l.b16 %v2464
  %v3207 = vunpack.c.h.b16 %v2464
  %v3208 = vunpack.c.l.b16 %v2465
  %v3209 = vunpack.c.h.b16 %v2465
  %v3210 = vunpack.c.l.b16 %v2466
  %v3211 = vunpack.c.h.b16 %v2466
  %v3212 = vunpack.c.l.b16 %v2467
  %v3213 = vunpack.c.h.b16 %v2467
  %v3214 = vunpack.c.l.b16 %v2468
  %v3215 = vunpack.c.h.b16 %v2468
  %v3216 = vunpack.c.l.b16 %v2469
  %v3217 = vunpack.c.h.b16 %v2469
  %v3218 = vunpack.c.l.b16 %v2470
  %v3219 = vunpack.c.h.b16 %v2470
  %v3220 = vunpack.c.l.b16 %v2471
  %v3221 = vunpack.c.h.b16 %v2471
  %v3222 = vunpack.c.l.b16 %v2472
  %v3223 = vunpack.c.h.b16 %v2472
  %v3224 = vunpack.c.l.b16 %v2473
  %v3225 = vunpack.c.h.b16 %v2473
  %v3226 = vunpack.c.l.b16 %v2474
  %v3227 = vunpack.c.h.b16 %v2474
  %v3228 = vunpack.c.l.b16 %v2475
  %v3229 = vunpack.c.h.b16 %v2475
  %v3230 = vunpack.c.l.b16 %v2476
  %v3231 = vunpack.c.h.b16 %v2476
  %v3232 = vunpack.c.l.b16 %v2477
  %v3233 = vunpack.c.h.b16 %v2477
  %v3234 = vunpack.c.l.b16 %v2478
  %v3235 = vunpack.c.h.b16 %v2478
  %v3236 = vunpack.c.l.b16 %v2479
  %v3237 = vunpack.c.h.b16 %v2479
  %v3238 = vunpack.c.l.b16 %v2480
  %v3239 = vunpack.c.h.b16 %v2480
  %v3240 = vunpack.c.l.b16 %v2481
  %v3241 = vunpack.c.h.b16 %v2481
  %v3242 = vunpack.c.l.b16 %v2482
  %v3243 = vunpack.c.h.b16 %v2482
  %v3244 = vunpack.c.l.b16 %v2483
  %v3245 = vunpack.c.h.b16 %v2483
  %v3246 = vunpack.c.l.b16 %v2484
  %v3247 = vunpack.c.h.b16 %v2484
  %v3248 = vunpack.c.l.b16 %v2485
  %v3249 = vunpack.c.h.b16 %v2485
  %v3250 = vunpack.c.l.b16 %v2486
  %v3251 = vunpack.c.h.b16 %v2486
  %v3252 = vunpack.c.l.b16 %v2487
  %v3253 = vunpack.c.h.b16 %v2487
  %v3254 = vunpack.c.l.b16 %v2488
  %v3255 = vunpack.c.h.b16 %v2488
  %v3256 = vunpack.c.l.b16 %v2489
  %v3257 = vunpack.c.h.b16 %v2489
  %v3258 = vunpack.c.l.b16 %v2490
  %v3259 = vunpack.c.h.b16 %v2490
  %v3260 = vunpack.c.l.b16 %v2491
  %v3261 = vunpack.c.h.b16 %v2491
  %v3262 = vunpack.c.l.b16 %v2492
  %v3263 = vunpack.c.h.b16 %v2492
  %v3264 = vunpack.c.l.b16 %v2493
  %v3265 = vunpack.c.h.b16 %v2493
  %v3266 = vunpack.c.l.b16 %v2494
  %v3267 = vunpack.c.h.b16 %v2494
  %v3268 = vunpack.c.l.b16 %v2495
  %v3269 = vunpack.c.h.b16 %v2495
  %v3270 = vunpack.c.l.b16 %v2496
  %v3271 = vunpack.c.h.b16 %v2496
  %v3272 = vunpack.c.l.b16 %v2497
  %v3273 = vunpack.c.h.b16 %v2497
  %v3274 = vunpack.c.l.b16 %v2498
  %v3275 = vunpack.c.h.b16 %v2498
  %v3276 = vunpack.c.l.b16 %v2499
  %v3277 = vunpack.c.h.b16 %v2499
  %v3278 = vunpack.c.l.b16 %v2500
  %v3279 = vunpack.c.h.b16 %v2500
  %v3280 = vunpack.c.l.b16 %v2501
  %v3281 = vunpack.c.h.b16 %v2501
  %v3282 = vunpack.c.l.b16 %v2502
  %v3283 = vunpack.c.h.b16 %v2502
  %v3284 = vunpack.c.l.b16 %v2503
  %v3285 = vunpack.c.h.b16 %v2503
  %v3286 = vunpack.c.l.b16 %v2504
  %v3287 = vunpack.c.h.b16 %v2504
  %v3288 = vunpack.c.l.b16 %v2505
  %v3289 = vunpack.c.h.b16 %v2505
  %v3290 = vunpack.c.l.b16 %v2506
  %v3291 = vunpack.c.h.b16 %v2506
  %v3292 = vunpack.c.l.b16 %v2507
  %v3293 = vunpack.c.h.b16 %v2507
  %v3294 = vunpack.c.l.b16 %v2508
  %v3295 = vunpack.c.h.b16 %v2508
  %v3296 = vunpack.c.l.b16 %v2509
  %v3297 = vunpack.c.h.b16 %v2509
  %v3298 = vunpack.c.l.b16 %v2510
  %v3299 = vunpack.c.h.b16 %v2510
  %v3300 = vunpack.c.l.b16 %v2511
  %v3301 = vunpack.c.h.b16 %v2511
  %v3302 = vpack.c.b16 %v2794, %v2790
  %v3303 = vpack.c.b16 %v2795, %v2791
  %v3304 = vpack.c.b16 %v2796, %v2792
  %v3305 = vpack.c.b16 %v2797, %v2793
  %v3306 = vpack.c.b16 %v2802, %v2798
  %v3307 = vpack.c.b16 %v2803, %v2799
  %v3308 = vpack.c.b16 %v2804, %v2800
  %v3309 = vpack.c.b16 %v2805, %v2801
  %v3310 = vpack.c.b16 %v2810, %v2806
  %v3311 = vpack.c.b16 %v2811, %v2807
  %v3312 = vpack.c.b16 %v2812, %v2808
  %v3313 = vpack.c.b16 %v2813, %v2809
  %v3314 = vpack.c.b16 %v2818, %v2814
  %v3315 = vpack.c.b16 %v2819, %v2815
  %v3316 = vpack.c.b16 %v2820, %v2816
  %v3317 = vpack.c.b16 %v2821, %v2817
  %v3318 = vpack.c.b16 %v2826, %v2822
  %v3319 = vpack.c.b16 %v2827, %v2823
  %v3320 = vpack.c.b16 %v2828, %v2824
  %v3321 = vpack.c.b16 %v2829, %v2825
  %v3322 = vpack.c.b16 %v2834, %v2830
  %v3323 = vpack.c.b16 %v2835, %v2831
  %v3324 = vpack.c.b16 %v2836, %v2832
  %v3325 = vpack.c.b16 %v2837, %v2833
  %v3326 = vpack.c.b16 %v2842, %v2838
  %v3327 = vpack.c.b16 %v2843, %v2839
  %v3328 = vpack.c.b16 %v2844, %v2840
  %v3329 = vpack.c.b16 %v2845, %v2841
  %v3330 = vpack.c.b16 %v2850, %v2846
  %v3331 = vpack.c.b16 %v2851, %v2847
  %v3332 = vpack.c.b16 %v2852, %v2848
  %v3333 = vpack.c.b16 %v2853, %v2849
  %v3334 = vpack.c.b16 %v2858, %v2854
  %v3335 = vpack.c.b16 %v2859, %v2855
  %v3336 = vpack.c.b16 %v2860, %v2856
  %v3337 = vpack.c.b16 %v2861, %v2857
  %v3338 = vpack.c.b16 %v2866, %v2862
  %v3339 = vpack.c.b16 %v2867, %v2863
  %v3340 = vpack.c.b16 %v2868, %v2864
  %v3341 = vpack.c.b16 %v2869, %v2865
  %v3342 = vpack.c.b16 %v2874, %v2870
  %v3343 = vpack.c.b16 %v2875, %v2871
  %v3344 = vpack.c.b16 %v2876, %v2872
  %v3345 = vpack.c.b16 %v2877, %v2873
  %v3346 = vpack.c.b16 %v2882, %v2878
  %v3347 = vpack.c.b16 %v2883, %v2879
  %v3348 = vpack.c.b16 %v2884, %v2880
  %v3349 = vpack.c.b16 %v2885, %v2881
  %v3350 = vpack.c.b16 %v2890, %v2886
  %v3351 = vpack.c.b16 %v2891, %v2887
  %v3352 = vpack.c.b16 %v2892, %v2888
  %v3353 = vpack.c.b16 %v2893, %v2889
  %v3354 = vpack.c.b16 %v2898, %v2894
  %v3355 = vpack.c.b16 %v2899, %v2895
  %v3356 = vpack.c.b16 %v2900, %v2896
  %v3357 = vpack.c.b16 %v2901, %v2897
  %v3358 = vpack.c.b16 %v2906, %v2902
  %v3359 = vpack.c.b16 %v2907, %v2903
  %v3360 = vpack.c.b16 %v2908, %v2904
  %v3361 = vpack.c.b16 %v2909, %v2905
  %v3362 = vpack.c.b16 %v2914, %v2910
  %v3363 = vpack.c.b16 %v2915, %v2911
  %v3364 = vpack.c.b16 %v2916, %v2912
  %v3365 = vpack.c.b16 %v2917, %v2913
  %v3366 = vpack.c.b16 %v2922, %v2918
  %v3367 = vpack.c.b16 %v2923, %v2919
  %v3368 = vpack.c.b16 %v2924, %v2920
  %v3369 = vpack.c.b16 %v2925, %v2921
  %v3370 = vpack.c.b16 %v2930, %v2926
  %v3371 = vpack.c.b16 %v2931, %v2927
  %v3372 = vpack.c.b16 %v2932, %v2928
  %v3373 = vpack.c.b16 %v2933, %v2929
  %v3374 = vpack.c.b16 %v2938, %v2934
  %v3375 = vpack.c.b16 %v2939, %v2935
  %v3376 = vpack.c.b16 %v2940, %v2936
  %v3377 = vpack.c.b16 %v2941, %v2937
  %v3378 = vpack.c.b16 %v2946, %v2942
  %v3379 = vpack.c.b16 %v2947, %v2943
  %v3380 = vpack.c.b16 %v2948, %v2944
  %v3381 = vpack.c.b16 %v2949, %v2945
  %v3382 = vpack.c.b16 %v2954, %v2950
  %v3383 = vpack.c.b16 %v2955, %v2951
  %v3384 = vpack.c.b16 %v2956, %v2952
  %v3385 = vpack.c.b16 %v2957, %v2953
  %v3386 = vpack.c.b16 %v2962, %v2958
  %v3387 = vpack.c.b16 %v2963, %v2959
  %v3388 = vpack.c.b16 %v2964, %v2960
  %v3389 = vpack.c.b16 %v2965, %v2961
  %v3390 = vpack.c.b16 %v2970, %v2966
  %v3391 = vpack.c.b16 %v2971, %v2967
  %v3392 = vpack.c.b16 %v2972, %v2968
  %v3393 = vpack.c.b16 %v2973, %v2969
  %v3394 = vpack.c.b16 %v2978, %v2974
  %v3395 = vpack.c.b16 %v2979, %v2975
  %v3396 = vpack.c.b16 %v2980, %v2976
  %v3397 = vpack.c.b16 %v2981, %v2977
  %v3398 = vpack.c.b16 %v2986, %v2982
  %v3399 = vpack.c.b16 %v2987, %v2983
  %v3400 = vpack.c.b16 %v2988, %v2984
  %v3401 = vpack.c.b16 %v2989, %v2985
  %v3402 = vpack.c.b16 %v2994, %v2990
  %v3403 = vpack.c.b16 %v2995, %v2991
  %v3404 = vpack.c.b16 %v2996, %v2992
  %v3405 = vpack.c.b16 %v2997, %v2993
  %v3406 = vpack.c.b16 %v3002, %v2998
  %v3407 = vpack.c.b16 %v3003, %v2999
  %v3408 = vpack.c.b16 %v3004, %v3000
  %v3409 = vpack.c.b16 %v3005, %v3001
  %v3410 = vpack.c.b16 %v3010, %v3006
  %v3411 = vpack.c.b16 %v3011, %v3007
  %v3412 = vpack.c.b16 %v3012, %v3008
  %v3413 = vpack.c.b16 %v3013, %v3009
  %v3414 = vpack.c.b16 %v3018, %v3014
  %v3415 = vpack.c.b16 %v3019, %v3015
  %v3416 = vpack.c.b16 %v3020, %v3016
  %v3417 = vpack.c.b16 %v3021, %v3017
  %v3418 = vpack.c.b16 %v3026, %v3022
  %v3419 = vpack.c.b16 %v3027, %v3023
  %v3420 = vpack.c.b16 %v3028, %v3024
  %v3421 = vpack.c.b16 %v3029, %v3025
  %v3422 = vpack.c.b16 %v3034, %v3030
  %v3423 = vpack.c.b16 %v3035, %v3031
  %v3424 = vpack.c.b16 %v3036, %v3032
  %v3425 = vpack.c.b16 %v3037, %v3033
  %v3426 = vpack.c.b16 %v3042, %v3038
  %v3427 = vpack.c.b16 %v3043, %v3039
  %v3428 = vpack.c.b16 %v3044, %v3040
  %v3429 = vpack.c.b16 %v3045, %v3041
  %v3430 = vpack.c.b16 %v3050, %v3046
  %v3431 = vpack.c.b16 %v3051, %v3047
  %v3432 = vpack.c.b16 %v3052, %v3048
  %v3433 = vpack.c.b16 %v3053, %v3049
  %v3434 = vpack.c.b16 %v3058, %v3054
  %v3435 = vpack.c.b16 %v3059, %v3055
  %v3436 = vpack.c.b16 %v3060, %v3056
  %v3437 = vpack.c.b16 %v3061, %v3057
  %v3438 = vpack.c.b16 %v3066, %v3062
  %v3439 = vpack.c.b16 %v3067, %v3063
  %v3440 = vpack.c.b16 %v3068, %v3064
  %v3441 = vpack.c.b16 %v3069, %v3065
  %v3442 = vpack.c.b16 %v3074, %v3070
  %v3443 = vpack.c.b16 %v3075, %v3071
  %v3444 = vpack.c.b16 %v3076, %v3072
  %v3445 = vpack.c.b16 %v3077, %v3073
  %v3446 = vpack.c.b16 %v3082, %v3078
  %v3447 = vpack.c.b16 %v3083, %v3079
  %v3448 = vpack.c.b16 %v3084, %v3080
  %v3449 = vpack.c.b16 %v3085, %v3081
  %v3450 = vpack.c.b16 %v3090, %v3086
  %v3451 = vpack.c.b16 %v3091, %v3087
  %v3452 = vpack.c.b16 %v3092, %v3088
  %v3453 = vpack.c.b16 %v3093, %v3089
  %v3454 = vpack.c.b16 %v3098, %v3094
  %v3455 = vpack.c.b16 %v3099, %v3095
  %v3456 = vpack.c.b16 %v3100, %v3096
  %v3457 = vpack.c.b16 %v3101, %v3097
  %v3458 = vpack.c.b16 %v3106, %v3102
  %v3459 = vpack.c.b16 %v3107, %v3103
  %v3460 = vpack.c.b16 %v3108, %v3104
  %v3461 = vpack.c.b16 %v3109, %v3105
  %v3462 = vpack.c.b16 %v3114, %v3110
  %v3463 = vpack.c.b16 %v3115, %v3111
  %v3464 = vpack.c.b16 %v3116, %v3112
  %v3465 = vpack.c.b16 %v3117, %v3113
  %v3466 = vpack.c.b16 %v3122, %v3118
  %v3467 = vpack.c.b16 %v3123, %v3119
  %v3468 = vpack.c.b16 %v3124, %v3120
  %v3469 = vpack.c.b16 %v3125, %v3121
  %v3470 = vpack.c.b16 %v3130, %v3126
  %v3471 = vpack.c.b16 %v3131, %v3127
  %v3472 = vpack.c.b16 %v3132, %v3128
  %v3473 = vpack.c.b16 %v3133, %v3129
  %v3474 = vpack.c.b16 %v3138, %v3134
  %v3475 = vpack.c.b16 %v3139, %v3135
  %v3476 = vpack.c.b16 %v3140, %v3136
  %v3477 = vpack.c.b16 %v3141, %v3137
  %v3478 = vpack.c.b16 %v3146, %v3142
  %v3479 = vpack.c.b16 %v3147, %v3143
  %v3480 = vpack.c.b16 %v3148, %v3144
  %v3481 = vpack.c.b16 %v3149, %v3145
  %v3482 = vpack.c.b16 %v3154, %v3150
  %v3483 = vpack.c.b16 %v3155, %v3151
  %v3484 = vpack.c.b16 %v3156, %v3152
  %v3485 = vpack.c.b16 %v3157, %v3153
  %v3486 = vpack.c.b16 %v3162, %v3158
  %v3487 = vpack.c.b16 %v3163, %v3159
  %v3488 = vpack.c.b16 %v3164, %v3160
  %v3489 = vpack.c.b16 %v3165, %v3161
  %v3490 = vpack.c.b16 %v3170, %v3166
  %v3491 = vpack.c.b16 %v3171, %v3167
  %v3492 = vpack.c.b16 %v3172, %v3168
  %v3493 = vpack.c.b16 %v3173, %v3169
  %v3494 = vpack.c.b16 %v3178, %v3174
  %v3495 = vpack.c.b16 %v3179, %v3175
  %v3496 = vpack.c.b16 %v3180, %v3176
  %v3497 = vpack.c.b16 %v3181, %v3177
  %v3498 = vpack.c.b16 %v3186, %v3182
  %v3499 = vpack.c.b16 %v3187, %v3183
  %v3500 = vpack.c.b16 %v3188, %v3184
  %v3501 = vpack.c.b16 %v3189, %v3185
  %v3502 = vpack.c.b16 %v3194, %v3190
  %v3503 = vpack.c.b16 %v3195, %v3191
  %v3504 = vpack.c.b16 %v3196, %v3192
  %v3505 = vpack.c.b16 %v3197, %v3193
  %v3506 = vpack.c.b16 %v3202, %v3198
  %v3507 = vpack.c.b16 %v3203, %v3199
  %v3508 = vpack.c.b16 %v3204, %v3200
  %v3509 = vpack.c.b16 %v3205, %v3201
  %v3510 = vpack.c.b16 %v3210, %v3206
  %v3511 = vpack.c.b16 %v3211, %v3207
  %v3512 = vpack.c.b16 %v3212, %v3208
  %v3513 = vpack.c.b16 %v3213, %v3209
  %v3514 = vpack.c.b16 %v3218, %v3214
  %v3515 = vpack.c.b16 %v3219, %v3215
  %v3516 = vpack.c.b16 %v3220, %v3216
  %v3517 = vpack.c.b16 %v3221, %v3217
  %v3518 = vpack.c.b16 %v3226, %v3222
  %v3519 = vpack.c.b16 %v3227, %v3223
  %v3520 = vpack.c.b16 %v3228, %v3224
  %v3521 = vpack.c.b16 %v3229, %v3225
  %v3522 = vpack.c.b16 %v3234, %v3230
  %v3523 = vpack.c.b16 %v3235, %v3231
  %v3524 = vpack.c.b16 %v3236, %v3232
  %v3525 = vpack.c.b16 %v3237, %v3233
  %v3526 = vpack.c.b16 %v3242, %v3238
  %v3527 = vpack.c.b16 %v3243, %v3239
  %v3528 = vpack.c.b16 %v3244, %v3240
  %v3529 = vpack.c.b16 %v3245, %v3241
  %v3530 = vpack.c.b16 %v3250, %v3246
  %v3531 = vpack.c.b16 %v3251, %v3247
  %v3532 = vpack.c.b16 %v3252, %v3248
  %v3533 = vpack.c.b16 %v3253, %v3249
  %v3534 = vpack.c.b16 %v3258, %v3254
  %v3535 = vpack.c.b16 %v3259, %v3255
  %v3536 = vpack.c.b16 %v3260, %v3256
  %v3537 = vpack.c.b16 %v3261, %v3257
  %v3538 = vpack.c.b16 %v3266, %v3262
  %v3539 = vpack.c.b16 %v3267, %v3263
  %v3540 = vpack.c.b16 %v3268, %v3264
  %v3541 = vpack.c.b16 %v3269, %v3265
  %v3542 = vpack.c.b16 %v3274, %v3270
  %v3543 = vpack.c.b16 %v3275, %v3271
  %v3544 = vpack.c.b16 %v3276, %v3272
  %v3545 = vpack.c.b16 %v3277, %v3273
  %v3546 = vpack.c.b16 %v3282, %v3278
  %v3547 = vpack.c.b16 %v3283, %v3279
  %v3548 = vpack.c.b16 %v3284, %v3280
  %v3549 = vpack.c.b16 %v3285, %v3281
  %v3550 = vpack.c.b16 %v3290, %v3286
  %v3551 = vpack.c.b16 %v3291, %v3287
  %v3552 = vpack.c.b16 %v3292, %v3288
  %v3553 = vpack.c.b16 %v3293, %v3289
  %v3554 = vpack.c.b16 %v3298, %v3294
  %v3555 = vpack.c.b16 %v3299, %v3295
  %v3556 = vpack.c.b16 %v3300, %v3296
  %v3557 = vpack.c.b16 %v3301, %v3297
  %3814 = vmatprep.subr.bf16.mxu0 %v3303
  %3815 = vmatpush1.bf16.msra.mxu0 %v3302
  %3816 = vmatprep.subr.bf16.mxu0 %v3307
  %3817 = vmatpush1.bf16.msra.mxu0 %v3306
  %3818 = vmatprep.subr.bf16.mxu0 %v3311
  %3819 = vmatpush1.bf16.msra.mxu0 %v3310
  %3820 = vmatprep.subr.bf16.mxu0 %v3315
  %3821 = vmatpush1.bf16.msra.mxu0 %v3314
  %3822 = vmatprep.subr.bf16.mxu0 %v3319
  %3823 = vmatpush1.bf16.msra.mxu0 %v3318
  %3824 = vmatprep.subr.bf16.mxu0 %v3323
  %3825 = vmatpush1.bf16.msra.mxu0 %v3322
  %3826 = vmatprep.subr.bf16.mxu0 %v3327
  %3827 = vmatpush1.bf16.msra.mxu0 %v3326
  %3828 = vmatprep.subr.bf16.mxu0 %v3331
  %3829 = vmatpush1.bf16.msra.mxu0 %v3330
  %3830 = vmatprep.subr.bf16.mxu0 %v3335
  %3831 = vmatpush1.bf16.msra.mxu0 %v3334
  %3832 = vmatprep.subr.bf16.mxu0 %v3339
  %3833 = vmatpush1.bf16.msra.mxu0 %v3338
  %3834 = vmatprep.subr.bf16.mxu0 %v3343
  %3835 = vmatpush1.bf16.msra.mxu0 %v3342
  %3836 = vmatprep.subr.bf16.mxu0 %v3347
  %3837 = vmatpush1.bf16.msra.mxu0 %v3346
  %3838 = vmatprep.subr.bf16.mxu0 %v3351
  %3839 = vmatpush1.bf16.msra.mxu0 %v3350
  %3840 = vmatprep.subr.bf16.mxu0 %v3355
  %3841 = vmatpush1.bf16.msra.mxu0 %v3354
  %3842 = vmatprep.subr.bf16.mxu0 %v3359
  %3843 = vmatpush1.bf16.msra.mxu0 %v3358
  %3844 = vmatprep.subr.bf16.mxu0 %v3363
  %3845 = vmatpush1.bf16.msra.mxu0 %v3362
  %3846 = vmatprep.mubr.bf16.mxu0 %v2249
  %3847 = vmatmul.mubr.bf16.gmra.mrb[0].mxu0 %v2248
  %v3848 = vpop.f32.mrb[0].mxu0
  %v3849 = vadd.f32 %v2517, %v3848
  %v3850 = vpop.f32.mrb[0].mxu0
  %v3851 = vadd.f32 %v2521, %v3850
  %v3852 = vpop.f32.mrb[0].mxu0
  %v3853 = vpop.f32.mrb[0].mxu0
  %3854 = vdwg.mxu0
  %3855 = vmatprep.subr.bf16.mxu0 %v3367
  %3856 = vmatpush1.bf16.msra.mxu0 %v3366
  %3857 = vmatprep.subr.bf16.mxu0 %v3371
  %3858 = vmatpush1.bf16.msra.mxu0 %v3370
  %3859 = vmatprep.subr.bf16.mxu0 %v3375
  %3860 = vmatpush1.bf16.msra.mxu0 %v3374
  %3861 = vmatprep.subr.bf16.mxu0 %v3379
  %3862 = vmatpush1.bf16.msra.mxu0 %v3378
  %3863 = vmatprep.subr.bf16.mxu0 %v3383
  %3864 = vmatpush1.bf16.msra.mxu0 %v3382
  %3865 = vmatprep.subr.bf16.mxu0 %v3387
  %3866 = vmatpush1.bf16.msra.mxu0 %v3386
  %3867 = vmatprep.subr.bf16.mxu0 %v3391
  %3868 = vmatpush1.bf16.msra.mxu0 %v3390
  %3869 = vmatprep.subr.bf16.mxu0 %v3395
  %3870 = vmatpush1.bf16.msra.mxu0 %v3394
  %3871 = vmatprep.subr.bf16.mxu0 %v3399
  %3872 = vmatpush1.bf16.msra.mxu0 %v3398
  %3873 = vmatprep.subr.bf16.mxu0 %v3403
  %3874 = vmatpush1.bf16.msra.mxu0 %v3402
  %3875 = vmatprep.subr.bf16.mxu0 %v3407
  %3876 = vmatpush1.bf16.msra.mxu0 %v3406
  %3877 = vmatprep.subr.bf16.mxu0 %v3411
  %3878 = vmatpush1.bf16.msra.mxu0 %v3410
  %3879 = vmatprep.subr.bf16.mxu0 %v3415
  %3880 = vmatpush1.bf16.msra.mxu0 %v3414
  %3881 = vmatprep.subr.bf16.mxu0 %v3419
  %3882 = vmatpush1.bf16.msra.mxu0 %v3418
  %3883 = vmatprep.subr.bf16.mxu0 %v3423
  %3884 = vmatpush1.bf16.msra.mxu0 %v3422
  %3885 = vmatprep.subr.bf16.mxu0 %v3427
  %3886 = vmatpush1.bf16.msra.mxu0 %v3426
  %3887 = vmatprep.mubr.bf16.mxu0 %v2251
  %3888 = vmatmul.mubr.bf16.gmra.mrb[0].mxu0 %v2250
  %v3889 = vpop.f32.mrb[0].mxu0
  %v3890 = vadd.f32 %v3849, %v3889
  %v3891 = vpop.f32.mrb[0].mxu0
  %v3892 = vadd.f32 %v3851, %v3891
  %v3893 = vpop.f32.mrb[0].mxu0
  %v3894 = vpop.f32.mrb[0].mxu0
  %3895 = vdwg.mxu0
  %3896 = vmatprep.subr.bf16.mxu0 %v3431
  %3897 = vmatpush1.bf16.msra.mxu0 %v3430
  %3898 = vmatprep.subr.bf16.mxu0 %v3435
  %3899 = vmatpush1.bf16.msra.mxu0 %v3434
  %3900 = vmatprep.subr.bf16.mxu0 %v3439
  %3901 = vmatpush1.bf16.msra.mxu0 %v3438
  %3902 = vmatprep.subr.bf16.mxu0 %v3443
  %3903 = vmatpush1.bf16.msra.mxu0 %v3442
  %3904 = vmatprep.subr.bf16.mxu0 %v3447
  %3905 = vmatpush1.bf16.msra.mxu0 %v3446
  %3906 = vmatprep.subr.bf16.mxu0 %v3451
  %3907 = vmatpush1.bf16.msra.mxu0 %v3450
  %3908 = vmatprep.subr.bf16.mxu0 %v3455
  %3909 = vmatpush1.bf16.msra.mxu0 %v3454
  %3910 = vmatprep.subr.bf16.mxu0 %v3459
  %3911 = vmatpush1.bf16.msra.mxu0 %v3458
  %3912 = vmatprep.subr.bf16.mxu0 %v3463
  %3913 = vmatpush1.bf16.msra.mxu0 %v3462
  %3914 = vmatprep.subr.bf16.mxu0 %v3467
  %3915 = vmatpush1.bf16.msra.mxu0 %v3466
  %3916 = vmatprep.subr.bf16.mxu0 %v3471
  %3917 = vmatpush1.bf16.msra.mxu0 %v3470
  %3918 = vmatprep.subr.bf16.mxu0 %v3475
  %3919 = vmatpush1.bf16.msra.mxu0 %v3474
  %3920 = vmatprep.subr.bf16.mxu0 %v3479
  %3921 = vmatpush1.bf16.msra.mxu0 %v3478
  %3922 = vmatprep.subr.bf16.mxu0 %v3483
  %3923 = vmatpush1.bf16.msra.mxu0 %v3482
  %3924 = vmatprep.subr.bf16.mxu0 %v3487
  %3925 = vmatpush1.bf16.msra.mxu0 %v3486
  %3926 = vmatprep.subr.bf16.mxu0 %v3491
  %3927 = vmatpush1.bf16.msra.mxu0 %v3490
  %3928 = vmatprep.mubr.bf16.mxu0 %v2253
  %3929 = vmatmul.mubr.bf16.gmra.mrb[0].mxu0 %v2252
  %v3930 = vpop.f32.mrb[0].mxu0
  %v3931 = vadd.f32 %v3890, %v3930
  %v3932 = vpop.f32.mrb[0].mxu0
  %v3933 = vadd.f32 %v3892, %v3932
  %v3934 = vpop.f32.mrb[0].mxu0
  %v3935 = vpop.f32.mrb[0].mxu0
  %3936 = vdwg.mxu0
  %3937 = vmatprep.subr.bf16.mxu0 %v3495
  %3938 = vmatpush1.bf16.msra.mxu0 %v3494
  %3939 = vmatprep.subr.bf16.mxu0 %v3499
  %3940 = vmatpush1.bf16.msra.mxu0 %v3498
  %3941 = vmatprep.subr.bf16.mxu0 %v3503
  %3942 = vmatpush1.bf16.msra.mxu0 %v3502
  %3943 = vmatprep.subr.bf16.mxu0 %v3507
  %3944 = vmatpush1.bf16.msra.mxu0 %v3506
  %3945 = vmatprep.subr.bf16.mxu0 %v3511
  %3946 = vmatpush1.bf16.msra.mxu0 %v3510
  %3947 = vmatprep.subr.bf16.mxu0 %v3515
  %3948 = vmatpush1.bf16.msra.mxu0 %v3514
  %3949 = vmatprep.subr.bf16.mxu0 %v3519
  %3950 = vmatpush1.bf16.msra.mxu0 %v3518
  %3951 = vmatprep.subr.bf16.mxu0 %v3523
  %3952 = vmatpush1.bf16.msra.mxu0 %v3522
  %3953 = vmatprep.subr.bf16.mxu0 %v3527
  %3954 = vmatpush1.bf16.msra.mxu0 %v3526
  %3955 = vmatprep.subr.bf16.mxu0 %v3531
  %3956 = vmatpush1.bf16.msra.mxu0 %v3530
  %3957 = vmatprep.subr.bf16.mxu0 %v3535
  %3958 = vmatpush1.bf16.msra.mxu0 %v3534
  %3959 = vmatprep.subr.bf16.mxu0 %v3539
  %3960 = vmatpush1.bf16.msra.mxu0 %v3538
  %3961 = vmatprep.subr.bf16.mxu0 %v3543
  %3962 = vmatpush1.bf16.msra.mxu0 %v3542
  %3963 = vmatprep.subr.bf16.mxu0 %v3547
  %3964 = vmatpush1.bf16.msra.mxu0 %v3546
  %3965 = vmatprep.subr.bf16.mxu0 %v3551
  %3966 = vmatpush1.bf16.msra.mxu0 %v3550
  %3967 = vmatprep.subr.bf16.mxu0 %v3555
  %3968 = vmatpush1.bf16.msra.mxu0 %v3554
  %3969 = vmatprep.mubr.bf16.mxu0 %v2255
  %3970 = vmatmul.mubr.bf16.gmra.mrb[0].mxu0 %v2254
  %v3971 = vpop.f32.mrb[0].mxu0
  %v3972 = vadd.f32 %v3931, %v3971
  %v3973 = vpop.f32.mrb[0].mxu0
  %v3974 = vadd.f32 %v3933, %v3973
  %v3975 = vpop.f32.mrb[0].mxu0
  %v3976 = vpop.f32.mrb[0].mxu0
  %3977 = vdwg.mxu0
  %3978 = vmatprep.subr.bf16.mxu0 %v3305
  %3979 = vmatpush1.bf16.msra.mxu0 %v3304
  %3980 = vmatprep.subr.bf16.mxu0 %v3309
  %3981 = vmatpush1.bf16.msra.mxu0 %v3308
  %3982 = vmatprep.subr.bf16.mxu0 %v3313
  %3983 = vmatpush1.bf16.msra.mxu0 %v3312
  %3984 = vmatprep.subr.bf16.mxu0 %v3317
  %3985 = vmatpush1.bf16.msra.mxu0 %v3316
  %3986 = vmatprep.subr.bf16.mxu0 %v3321
  %3987 = vmatpush1.bf16.msra.mxu0 %v3320
  %3988 = vmatprep.subr.bf16.mxu0 %v3325
  %3989 = vmatpush1.bf16.msra.mxu0 %v3324
  %3990 = vmatprep.subr.bf16.mxu0 %v3329
  %3991 = vmatpush1.bf16.msra.mxu0 %v3328
  %3992 = vmatprep.subr.bf16.mxu0 %v3333
  %3993 = vmatpush1.bf16.msra.mxu0 %v3332
  %3994 = vmatprep.subr.bf16.mxu0 %v3337
  %3995 = vmatpush1.bf16.msra.mxu0 %v3336
  %3996 = vmatprep.subr.bf16.mxu0 %v3341
  %3997 = vmatpush1.bf16.msra.mxu0 %v3340
  %3998 = vmatprep.subr.bf16.mxu0 %v3345
  %3999 = vmatpush1.bf16.msra.mxu0 %v3344
  %4000 = vmatprep.subr.bf16.mxu0 %v3349
  %4001 = vmatpush1.bf16.msra.mxu0 %v3348
  %4002 = vmatprep.subr.bf16.mxu0 %v3353
  %4003 = vmatpush1.bf16.msra.mxu0 %v3352
  %4004 = vmatprep.subr.bf16.mxu0 %v3357
  %4005 = vmatpush1.bf16.msra.mxu0 %v3356
  %4006 = vmatprep.subr.bf16.mxu0 %v3361
  %4007 = vmatpush1.bf16.msra.mxu0 %v3360
  %4008 = vmatprep.subr.bf16.mxu0 %v3365
  %4009 = vmatpush1.bf16.msra.mxu0 %v3364
  %4010 = vmatprep.mubr.bf16.mxu0 %v2249
  %4011 = vmatmul.mubr.bf16.gmra.mrb[0].mxu0 %v2248
  %v4012 = vpop.f32.mrb[0].mxu0
  %v4013 = vadd.f32 %v2525, %v4012
  %v4014 = vpop.f32.mrb[0].mxu0
  %v4015 = vadd.f32 %v2529, %v4014
  %v4016 = vpop.f32.mrb[0].mxu0
  %v4017 = vpop.f32.mrb[0].mxu0
  %4018 = vdwg.mxu0
  %4019 = vmatprep.subr.bf16.mxu0 %v3369
  %4020 = vmatpush1.bf16.msra.mxu0 %v3368
  %4021 = vmatprep.subr.bf16.mxu0 %v3373
  %4022 = vmatpush1.bf16.msra.mxu0 %v3372
  %4023 = vmatprep.subr.bf16.mxu0 %v3377
  %4024 = vmatpush1.bf16.msra.mxu0 %v3376
  %4025 = vmatprep.subr.bf16.mxu0 %v3381
  %4026 = vmatpush1.bf16.msra.mxu0 %v3380
  %4027 = vmatprep.subr.bf16.mxu0 %v3385
  %4028 = vmatpush1.bf16.msra.mxu0 %v3384
  %4029 = vmatprep.subr.bf16.mxu0 %v3389
  %4030 = vmatpush1.bf16.msra.mxu0 %v3388
  %4031 = vmatprep.subr.bf16.mxu0 %v3393
  %4032 = vmatpush1.bf16.msra.mxu0 %v3392
  %4033 = vmatprep.subr.bf16.mxu0 %v3397
  %4034 = vmatpush1.bf16.msra.mxu0 %v3396
  %4035 = vmatprep.subr.bf16.mxu0 %v3401
  %4036 = vmatpush1.bf16.msra.mxu0 %v3400
  %4037 = vmatprep.subr.bf16.mxu0 %v3405
  %4038 = vmatpush1.bf16.msra.mxu0 %v3404
  %4039 = vmatprep.subr.bf16.mxu0 %v3409
  %4040 = vmatpush1.bf16.msra.mxu0 %v3408
  %4041 = vmatprep.subr.bf16.mxu0 %v3413
  %4042 = vmatpush1.bf16.msra.mxu0 %v3412
  %4043 = vmatprep.subr.bf16.mxu0 %v3417
  %4044 = vmatpush1.bf16.msra.mxu0 %v3416
  %4045 = vmatprep.subr.bf16.mxu0 %v3421
  %4046 = vmatpush1.bf16.msra.mxu0 %v3420
  %4047 = vmatprep.subr.bf16.mxu0 %v3425
  %4048 = vmatpush1.bf16.msra.mxu0 %v3424
  %4049 = vmatprep.subr.bf16.mxu0 %v3429
  %4050 = vmatpush1.bf16.msra.mxu0 %v3428
  %4051 = vmatprep.mubr.bf16.mxu0 %v2251
  %4052 = vmatmul.mubr.bf16.gmra.mrb[0].mxu0 %v2250
  %v4053 = vpop.f32.mrb[0].mxu0
  %v4054 = vadd.f32 %v4013, %v4053
  %v4055 = vpop.f32.mrb[0].mxu0
  %v4056 = vadd.f32 %v4015, %v4055
  %v4057 = vpop.f32.mrb[0].mxu0
  %v4058 = vpop.f32.mrb[0].mxu0
  %4059 = vdwg.mxu0
  %4060 = vmatprep.subr.bf16.mxu0 %v3433
  %4061 = vmatpush1.bf16.msra.mxu0 %v3432
  %4062 = vmatprep.subr.bf16.mxu0 %v3437
  %4063 = vmatpush1.bf16.msra.mxu0 %v3436
  %4064 = vmatprep.subr.bf16.mxu0 %v3441
  %4065 = vmatpush1.bf16.msra.mxu0 %v3440
  %4066 = vmatprep.subr.bf16.mxu0 %v3445
  %4067 = vmatpush1.bf16.msra.mxu0 %v3444
  %4068 = vmatprep.subr.bf16.mxu0 %v3449
  %4069 = vmatpush1.bf16.msra.mxu0 %v3448
  %4070 = vmatprep.subr.bf16.mxu0 %v3453
  %4071 = vmatpush1.bf16.msra.mxu0 %v3452
  %4072 = vmatprep.subr.bf16.mxu0 %v3457
  %4073 = vmatpush1.bf16.msra.mxu0 %v3456
  %4074 = vmatprep.subr.bf16.mxu0 %v3461
  %4075 = vmatpush1.bf16.msra.mxu0 %v3460
  %4076 = vmatprep.subr.bf16.mxu0 %v3465
  %4077 = vmatpush1.bf16.msra.mxu0 %v3464
  %4078 = vmatprep.subr.bf16.mxu0 %v3469
  %4079 = vmatpush1.bf16.msra.mxu0 %v3468
  %4080 = vmatprep.subr.bf16.mxu0 %v3473
  %4081 = vmatpush1.bf16.msra.mxu0 %v3472
  %4082 = vmatprep.subr.bf16.mxu0 %v3477
  %4083 = vmatpush1.bf16.msra.mxu0 %v3476
  %4084 = vmatprep.subr.bf16.mxu0 %v3481
  %4085 = vmatpush1.bf16.msra.mxu0 %v3480
  %4086 = vmatprep.subr.bf16.mxu0 %v3485
  %4087 = vmatpush1.bf16.msra.mxu0 %v3484
  %4088 = vmatprep.subr.bf16.mxu0 %v3489
  %4089 = vmatpush1.bf16.msra.mxu0 %v3488
  %4090 = vmatprep.subr.bf16.mxu0 %v3493
  %4091 = vmatpush1.bf16.msra.mxu0 %v3492
  %4092 = vmatprep.mubr.bf16.mxu0 %v2253
  %4093 = vmatmul.mubr.bf16.gmra.mrb[0].mxu0 %v2252
  %v4094 = vpop.f32.mrb[0].mxu0
  %v4095 = vadd.f32 %v4054, %v4094
  %v4096 = vpop.f32.mrb[0].mxu0
  %v4097 = vadd.f32 %v4056, %v4096
  %v4098 = vpop.f32.mrb[0].mxu0
  %v4099 = vpop.f32.mrb[0].mxu0
  %4100 = vdwg.mxu0
  %4101 = vmatprep.subr.bf16.mxu0 %v3497
  %4102 = vmatpush1.bf16.msra.mxu0 %v3496
  %4103 = vmatprep.subr.bf16.mxu0 %v3501
  %4104 = vmatpush1.bf16.msra.mxu0 %v3500
  %4105 = vmatprep.subr.bf16.mxu0 %v3505
  %4106 = vmatpush1.bf16.msra.mxu0 %v3504
  %4107 = vmatprep.subr.bf16.mxu0 %v3509
  %4108 = vmatpush1.bf16.msra.mxu0 %v3508
  %4109 = vmatprep.subr.bf16.mxu0 %v3513
  %4110 = vmatpush1.bf16.msra.mxu0 %v3512
  %4111 = vmatprep.subr.bf16.mxu0 %v3517
  %4112 = vmatpush1.bf16.msra.mxu0 %v3516
  %4113 = vmatprep.subr.bf16.mxu0 %v3521
  %4114 = vmatpush1.bf16.msra.mxu0 %v3520
  %4115 = vmatprep.subr.bf16.mxu0 %v3525
  %4116 = vmatpush1.bf16.msra.mxu0 %v3524
  %4117 = vmatprep.subr.bf16.mxu0 %v3529
  %4118 = vmatpush1.bf16.msra.mxu0 %v3528
  %4119 = vmatprep.subr.bf16.mxu0 %v3533
  %4120 = vmatpush1.bf16.msra.mxu0 %v3532
  %4121 = vmatprep.subr.bf16.mxu0 %v3537
  %4122 = vmatpush1.bf16.msra.mxu0 %v3536
  %4123 = vmatprep.subr.bf16.mxu0 %v3541
  %4124 = vmatpush1.bf16.msra.mxu0 %v3540
  %4125 = vmatprep.subr.bf16.mxu0 %v3545
  %4126 = vmatpush1.bf16.msra.mxu0 %v3544
  %4127 = vmatprep.subr.bf16.mxu0 %v3549
  %4128 = vmatpush1.bf16.msra.mxu0 %v3548
  %4129 = vmatprep.subr.bf16.mxu0 %v3553
  %4130 = vmatpush1.bf16.msra.mxu0 %v3552
  %4131 = vmatprep.subr.bf16.mxu0 %v3557
  %4132 = vmatpush1.bf16.msra.mxu0 %v3556
  %4133 = vmatprep.mubr.bf16.mxu0 %v2255
  %4134 = vmatmul.mubr.bf16.gmra.mrb[0].mxu0 %v2254
  %v4135 = vpop.f32.mrb[0].mxu0
  %v4136 = vadd.f32 %v4095, %v4135
  %v4137 = vpop.f32.mrb[0].mxu0
  %v4138 = vadd.f32 %v4097, %v4137
  %v4139 = vpop.f32.mrb[0].mxu0
  %v4140 = vpop.f32.mrb[0].mxu0
  %4141 = vdwg.mxu0
  %v4142 = vmax.f32 %v3972, 0.0
  %v4143 = vmax.f32 %v3974, 0.0
  %v4144 = vmax.f32 %v4136, 0.0
  %v4145 = vmax.f32 %v4138, 0.0
  %v4146 = vpack.c.bf16 %v4142, %v4142
  %v4147 = vpack.c.bf16 %v4143, %v4143
  %v4148 = vpack.c.bf16 %v4144, %v4144
  %v4149 = vpack.c.bf16 %v4145, %v4145
  %v4150 = vld [vmem:[%s9] sm:$0xff]
  %v4151 = vld [vmem:[%s9 + $0x8] sm:$0xff]
  %v4152 = vld [vmem:[%s9 + $0x10] sm:$0xff]
  %v4153 = vld [vmem:[%s9 + $0x18] sm:$0xff]
  %v4154 = vld [vmem:[%s9 + $0x20] sm:$0xff]
  %v4155 = vld [vmem:[%s9 + $0x28] sm:$0xff]
  %v4156 = vld [vmem:[%s9 + $0x30] sm:$0xff]
  %v4157 = vld [vmem:[%s9 + $0x38] sm:$0xff]
  %v4158 = vld [vmem:[%s9 + $0x40] sm:$0xff]
  %v4159 = vld [vmem:[%s9 + $0x48] sm:$0xff]
  %v4160 = vld [vmem:[%s9 + $0x50] sm:$0xff]
  %v4161 = vld [vmem:[%s9 + $0x58] sm:$0xff]
  %v4162 = vld [vmem:[%s9 + $0x60] sm:$0xff]
  %v4163 = vld [vmem:[%s9 + $0x68] sm:$0xff]
  %v4164 = vld [vmem:[%s9 + $0x70] sm:$0xff]
  %v4165 = vld [vmem:[%s9 + $0x78] sm:$0xff]
  %v4166 = vld [vmem:[%s9 + $0x80] sm:$0xff]
  %v4167 = vld [vmem:[%s9 + $0x88] sm:$0xff]
  %v4168 = vld [vmem:[%s9 + $0x90] sm:$0xff]
  %v4169 = vld [vmem:[%s9 + $0x98] sm:$0xff]
  %v4170 = vld [vmem:[%s9 + $0xa0] sm:$0xff]
  %v4171 = vld [vmem:[%s9 + $0xa8] sm:$0xff]
  %v4172 = vld [vmem:[%s9 + $0xb0] sm:$0xff]
  %v4173 = vld [vmem:[%s9 + $0xb8] sm:$0xff]
  %v4174 = vld [vmem:[%s9 + $0xc0] sm:$0xff]
  %v4175 = vld [vmem:[%s9 + $0xc8] sm:$0xff]
  %v4176 = vld [vmem:[%s9 + $0xd0] sm:$0xff]
  %v4177 = vld [vmem:[%s9 + $0xd8] sm:$0xff]
  %v4178 = vld [vmem:[%s9 + $0xe0] sm:$0xff]
  %v4179 = vld [vmem:[%s9 + $0xe8] sm:$0xff]
  %v4180 = vld [vmem:[%s9 + $0xf0] sm:$0xff]
  %v4181 = vld [vmem:[%s9 + $0xf8] sm:$0xff]
  %v4182 = vld [vmem:[%s9 + $0x100] sm:$0xff]
  %v4183 = vld [vmem:[%s9 + $0x108] sm:$0xff]
  %v4184 = vld [vmem:[%s9 + $0x110] sm:$0xff]
  %v4185 = vld [vmem:[%s9 + $0x118] sm:$0xff]
  %v4186 = vld [vmem:[%s9 + $0x120] sm:$0xff]
  %v4187 = vld [vmem:[%s9 + $0x128] sm:$0xff]
  %v4188 = vld [vmem:[%s9 + $0x130] sm:$0xff]
  %v4189 = vld [vmem:[%s9 + $0x138] sm:$0xff]
  %v4190 = vld [vmem:[%s9 + $0x140] sm:$0xff]
  %v4191 = vld [vmem:[%s9 + $0x148] sm:$0xff]
  %v4192 = vld [vmem:[%s9 + $0x150] sm:$0xff]
  %v4193 = vld [vmem:[%s9 + $0x158] sm:$0xff]
  %v4194 = vld [vmem:[%s9 + $0x160] sm:$0xff]
  %v4195 = vld [vmem:[%s9 + $0x168] sm:$0xff]
  %v4196 = vld [vmem:[%s9 + $0x170] sm:$0xff]
  %v4197 = vld [vmem:[%s9 + $0x178] sm:$0xff]
  %v4198 = vld [vmem:[%s9 + $0x180] sm:$0xff]
  %v4199 = vld [vmem:[%s9 + $0x188] sm:$0xff]
  %v4200 = vld [vmem:[%s9 + $0x190] sm:$0xff]
  %v4201 = vld [vmem:[%s9 + $0x198] sm:$0xff]
  %v4202 = vld [vmem:[%s9 + $0x1a0] sm:$0xff]
  %v4203 = vld [vmem:[%s9 + $0x1a8] sm:$0xff]
  %v4204 = vld [vmem:[%s9 + $0x1b0] sm:$0xff]
  %v4205 = vld [vmem:[%s9 + $0x1b8] sm:$0xff]
  %v4206 = vld [vmem:[%s9 + $0x1c0] sm:$0xff]
  %v4207 = vld [vmem:[%s9 + $0x1c8] sm:$0xff]
  %v4208 = vld [vmem:[%s9 + $0x1d0] sm:$0xff]
  %v4209 = vld [vmem:[%s9 + $0x1d8] sm:$0xff]
  %v4210 = vld [vmem:[%s9 + $0x1e0] sm:$0xff]
  %v4211 = vld [vmem:[%s9 + $0x1e8] sm:$0xff]
  %v4212 = vld [vmem:[%s9 + $0x1f0] sm:$0xff]
  %v4213 = vld [vmem:[%s9 + $0x1f8] sm:$0xff]
  %v4214 = vld [vmem:[%s10] sm:$0x3]
  %v4216 = vlaneseq
  %v4217 = vshrl.u32 %v4216, 7
  %v4218 = vsub.s32 0, %v4217
  %v4219 = vrot.slane %v4214, %v4218
  %v4220 = vlaneseq
  %v4221 = vshrl.u32 %v4220, 7
  %v4222 = vsub.s32 1, %v4221
  %v4223 = vrot.slane %v4214, %v4222
  %v4290 = vunpack.c.l.b16 %v4150
  %v4291 = vunpack.c.h.b16 %v4150
  %v4292 = vunpack.c.l.b16 %v4151
  %v4293 = vunpack.c.h.b16 %v4151
  %v4294 = vunpack.c.l.b16 %v4152
  %v4295 = vunpack.c.h.b16 %v4152
  %v4296 = vunpack.c.l.b16 %v4153
  %v4297 = vunpack.c.h.b16 %v4153
  %v4298 = vunpack.c.l.b16 %v4154
  %v4299 = vunpack.c.h.b16 %v4154
  %v4300 = vunpack.c.l.b16 %v4155
  %v4301 = vunpack.c.h.b16 %v4155
  %v4302 = vunpack.c.l.b16 %v4156
  %v4303 = vunpack.c.h.b16 %v4156
  %v4304 = vunpack.c.l.b16 %v4157
  %v4305 = vunpack.c.h.b16 %v4157
  %v4306 = vunpack.c.l.b16 %v4158
  %v4307 = vunpack.c.h.b16 %v4158
  %v4308 = vunpack.c.l.b16 %v4159
  %v4309 = vunpack.c.h.b16 %v4159
  %v4310 = vunpack.c.l.b16 %v4160
  %v4311 = vunpack.c.h.b16 %v4160
  %v4312 = vunpack.c.l.b16 %v4161
  %v4313 = vunpack.c.h.b16 %v4161
  %v4314 = vunpack.c.l.b16 %v4162
  %v4315 = vunpack.c.h.b16 %v4162
  %v4316 = vunpack.c.l.b16 %v4163
  %v4317 = vunpack.c.h.b16 %v4163
  %v4318 = vunpack.c.l.b16 %v4164
  %v4319 = vunpack.c.h.b16 %v4164
  %v4320 = vunpack.c.l.b16 %v4165
  %v4321 = vunpack.c.h.b16 %v4165
  %v4322 = vunpack.c.l.b16 %v4166
  %v4323 = vunpack.c.h.b16 %v4166
  %v4324 = vunpack.c.l.b16 %v4167
  %v4325 = vunpack.c.h.b16 %v4167
  %v4326 = vunpack.c.l.b16 %v4168
  %v4327 = vunpack.c.h.b16 %v4168
  %v4328 = vunpack.c.l.b16 %v4169
  %v4329 = vunpack.c.h.b16 %v4169
  %v4330 = vunpack.c.l.b16 %v4170
  %v4331 = vunpack.c.h.b16 %v4170
  %v4332 = vunpack.c.l.b16 %v4171
  %v4333 = vunpack.c.h.b16 %v4171
  %v4334 = vunpack.c.l.b16 %v4172
  %v4335 = vunpack.c.h.b16 %v4172
  %v4336 = vunpack.c.l.b16 %v4173
  %v4337 = vunpack.c.h.b16 %v4173
  %v4338 = vunpack.c.l.b16 %v4174
  %v4339 = vunpack.c.h.b16 %v4174
  %v4340 = vunpack.c.l.b16 %v4175
  %v4341 = vunpack.c.h.b16 %v4175
  %v4342 = vunpack.c.l.b16 %v4176
  %v4343 = vunpack.c.h.b16 %v4176
  %v4344 = vunpack.c.l.b16 %v4177
  %v4345 = vunpack.c.h.b16 %v4177
  %v4346 = vunpack.c.l.b16 %v4178
  %v4347 = vunpack.c.h.b16 %v4178
  %v4348 = vunpack.c.l.b16 %v4179
  %v4349 = vunpack.c.h.b16 %v4179
  %v4350 = vunpack.c.l.b16 %v4180
  %v4351 = vunpack.c.h.b16 %v4180
  %v4352 = vunpack.c.l.b16 %v4181
  %v4353 = vunpack.c.h.b16 %v4181
  %v4354 = vunpack.c.l.b16 %v4182
  %v4355 = vunpack.c.h.b16 %v4182
  %v4356 = vunpack.c.l.b16 %v4183
  %v4357 = vunpack.c.h.b16 %v4183
  %v4358 = vunpack.c.l.b16 %v4184
  %v4359 = vunpack.c.h.b16 %v4184
  %v4360 = vunpack.c.l.b16 %v4185
  %v4361 = vunpack.c.h.b16 %v4185
  %v4362 = vunpack.c.l.b16 %v4186
  %v4363 = vunpack.c.h.b16 %v4186
  %v4364 = vunpack.c.l.b16 %v4187
  %v4365 = vunpack.c.h.b16 %v4187
  %v4366 = vunpack.c.l.b16 %v4188
  %v4367 = vunpack.c.h.b16 %v4188
  %v4368 = vunpack.c.l.b16 %v4189
  %v4369 = vunpack.c.h.b16 %v4189
  %v4370 = vunpack.c.l.b16 %v4190
  %v4371 = vunpack.c.h.b16 %v4190
  %v4372 = vunpack.c.l.b16 %v4191
  %v4373 = vunpack.c.h.b16 %v4191
  %v4374 = vunpack.c.l.b16 %v4192
  %v4375 = vunpack.c.h.b16 %v4192
  %v4376 = vunpack.c.l.b16 %v4193
  %v4377 = vunpack.c.h.b16 %v4193
  %v4378 = vunpack.c.l.b16 %v4194
  %v4379 = vunpack.c.h.b16 %v4194
  %v4380 = vunpack.c.l.b16 %v4195
  %v4381 = vunpack.c.h.b16 %v4195
  %v4382 = vunpack.c.l.b16 %v4196
  %v4383 = vunpack.c.h.b16 %v4196
  %v4384 = vunpack.c.l.b16 %v4197
  %v4385 = vunpack.c.h.b16 %v4197
  %v4386 = vunpack.c.l.b16 %v4198
  %v4387 = vunpack.c.h.b16 %v4198
  %v4388 = vunpack.c.l.b16 %v4199
  %v4389 = vunpack.c.h.b16 %v4199
  %v4390 = vunpack.c.l.b16 %v4200
  %v4391 = vunpack.c.h.b16 %v4200
  %v4392 = vunpack.c.l.b16 %v4201
  %v4393 = vunpack.c.h.b16 %v4201
  %v4394 = vunpack.c.l.b16 %v4202
  %v4395 = vunpack.c.h.b16 %v4202
  %v4396 = vunpack.c.l.b16 %v4203
  %v4397 = vunpack.c.h.b16 %v4203
  %v4398 = vunpack.c.l.b16 %v4204
  %v4399 = vunpack.c.h.b16 %v4204
  %v4400 = vunpack.c.l.b16 %v4205
  %v4401 = vunpack.c.h.b16 %v4205
  %v4402 = vunpack.c.l.b16 %v4206
  %v4403 = vunpack.c.h.b16 %v4206
  %v4404 = vunpack.c.l.b16 %v4207
  %v4405 = vunpack.c.h.b16 %v4207
  %v4406 = vunpack.c.l.b16 %v4208
  %v4407 = vunpack.c.h.b16 %v4208
  %v4408 = vunpack.c.l.b16 %v4209
  %v4409 = vunpack.c.h.b16 %v4209
  %v4410 = vunpack.c.l.b16 %v4210
  %v4411 = vunpack.c.h.b16 %v4210
  %v4412 = vunpack.c.l.b16 %v4211
  %v4413 = vunpack.c.h.b16 %v4211
  %v4414 = vunpack.c.l.b16 %v4212
  %v4415 = vunpack.c.h.b16 %v4212
  %v4416 = vunpack.c.l.b16 %v4213
  %v4417 = vunpack.c.h.b16 %v4213
  %v4418 = vpack.c.b16 %v4292, %v4290
  %v4419 = vpack.c.b16 %v4293, %v4291
  %v4420 = vpack.c.b16 %v4296, %v4294
  %v4421 = vpack.c.b16 %v4297, %v4295
  %v4422 = vpack.c.b16 %v4300, %v4298
  %v4423 = vpack.c.b16 %v4301, %v4299
  %v4424 = vpack.c.b16 %v4304, %v4302
  %v4425 = vpack.c.b16 %v4305, %v4303
  %v4426 = vpack.c.b16 %v4308, %v4306
  %v4427 = vpack.c.b16 %v4309, %v4307
  %v4428 = vpack.c.b16 %v4312, %v4310
  %v4429 = vpack.c.b16 %v4313, %v4311
  %v4430 = vpack.c.b16 %v4316, %v4314
  %v4431 = vpack.c.b16 %v4317, %v4315
  %v4432 = vpack.c.b16 %v4320, %v4318
  %v4433 = vpack.c.b16 %v4321, %v4319
  %v4434 = vpack.c.b16 %v4324, %v4322
  %v4435 = vpack.c.b16 %v4325, %v4323
  %v4436 = vpack.c.b16 %v4328, %v4326
  %v4437 = vpack.c.b16 %v4329, %v4327
  %v4438 = vpack.c.b16 %v4332, %v4330
  %v4439 = vpack.c.b16 %v4333, %v4331
  %v4440 = vpack.c.b16 %v4336, %v4334
  %v4441 = vpack.c.b16 %v4337, %v4335
  %v4442 = vpack.c.b16 %v4340, %v4338
  %v4443 = vpack.c.b16 %v4341, %v4339
  %v4444 = vpack.c.b16 %v4344, %v4342
  %v4445 = vpack.c.b16 %v4345, %v4343
  %v4446 = vpack.c.b16 %v4348, %v4346
  %v4447 = vpack.c.b16 %v4349, %v4347
  %v4448 = vpack.c.b16 %v4352, %v4350
  %v4449 = vpack.c.b16 %v4353, %v4351
  %v4450 = vpack.c.b16 %v4356, %v4354
  %v4451 = vpack.c.b16 %v4357, %v4355
  %v4452 = vpack.c.b16 %v4360, %v4358
  %v4453 = vpack.c.b16 %v4361, %v4359
  %v4454 = vpack.c.b16 %v4364, %v4362
  %v4455 = vpack.c.b16 %v4365, %v4363
  %v4456 = vpack.c.b16 %v4368, %v4366
  %v4457 = vpack.c.b16 %v4369, %v4367
  %v4458 = vpack.c.b16 %v4372, %v4370
  %v4459 = vpack.c.b16 %v4373, %v4371
  %v4460 = vpack.c.b16 %v4376, %v4374
  %v4461 = vpack.c.b16 %v4377, %v4375
  %v4462 = vpack.c.b16 %v4380, %v4378
  %v4463 = vpack.c.b16 %v4381, %v4379
  %v4464 = vpack.c.b16 %v4384, %v4382
  %v4465 = vpack.c.b16 %v4385, %v4383
  %v4466 = vpack.c.b16 %v4388, %v4386
  %v4467 = vpack.c.b16 %v4389, %v4387
  %v4468 = vpack.c.b16 %v4392, %v4390
  %v4469 = vpack.c.b16 %v4393, %v4391
  %v4470 = vpack.c.b16 %v4396, %v4394
  %v4471 = vpack.c.b16 %v4397, %v4395
  %v4472 = vpack.c.b16 %v4400, %v4398
  %v4473 = vpack.c.b16 %v4401, %v4399
  %v4474 = vpack.c.b16 %v4404, %v4402
  %v4475 = vpack.c.b16 %v4405, %v4403
  %v4476 = vpack.c.b16 %v4408, %v4406
  %v4477 = vpack.c.b16 %v4409, %v4407
  %v4478 = vpack.c.b16 %v4412, %v4410
  %v4479 = vpack.c.b16 %v4413, %v4411
  %v4480 = vpack.c.b16 %v4416, %v4414
  %v4481 = vpack.c.b16 %v4417, %v4415
  %4546 = vmatprep.subr.bf16.mxu0 %v4419
  %4547 = vmatpush1.bf16.msra.mxu0 %v4418
  %4548 = vmatprep.subr.bf16.mxu0 %v4421
  %4549 = vmatpush1.bf16.msra.mxu0 %v4420
  %4550 = vmatprep.subr.bf16.mxu0 %v4423
  %4551 = vmatpush1.bf16.msra.mxu0 %v4422
  %4552 = vmatprep.subr.bf16.mxu0 %v4425
  %4553 = vmatpush1.bf16.msra.mxu0 %v4424
  %4554 = vmatprep.subr.bf16.mxu0 %v4427
  %4555 = vmatpush1.bf16.msra.mxu0 %v4426
  %4556 = vmatprep.subr.bf16.mxu0 %v4429
  %4557 = vmatpush1.bf16.msra.mxu0 %v4428
  %4558 = vmatprep.subr.bf16.mxu0 %v4431
  %4559 = vmatpush1.bf16.msra.mxu0 %v4430
  %4560 = vmatprep.subr.bf16.mxu0 %v4433
  %4561 = vmatpush1.bf16.msra.mxu0 %v4432
  %4562 = vmatprep.subr.bf16.mxu0 %v4435
  %4563 = vmatpush1.bf16.msra.mxu0 %v4434
  %4564 = vmatprep.subr.bf16.mxu0 %v4437
  %4565 = vmatpush1.bf16.msra.mxu0 %v4436
  %4566 = vmatprep.subr.bf16.mxu0 %v4439
  %4567 = vmatpush1.bf16.msra.mxu0 %v4438
  %4568 = vmatprep.subr.bf16.mxu0 %v4441
  %4569 = vmatpush1.bf16.msra.mxu0 %v4440
  %4570 = vmatprep.subr.bf16.mxu0 %v4443
  %4571 = vmatpush1.bf16.msra.mxu0 %v4442
  %4572 = vmatprep.subr.bf16.mxu0 %v4445
  %4573 = vmatpush1.bf16.msra.mxu0 %v4444
  %4574 = vmatprep.subr.bf16.mxu0 %v4447
  %4575 = vmatpush1.bf16.msra.mxu0 %v4446
  %4576 = vmatprep.subr.bf16.mxu0 %v4449
  %4577 = vmatpush1.bf16.msra.mxu0 %v4448
  %4578 = vmatprep.mubr.bf16.mxu0 %v4147
  %4579 = vmatmul.mubr.bf16.gmra.mrb[0].mxu0 %v4146
  %v4580 = vpop.f32.mrb[0].mxu0
  %v4581 = vadd.f32 %v4219, %v4580
  %v4582 = vpop.f32.mrb[0].mxu0
  %v4583 = vadd.f32 %v4223, %v4582
  %v4584 = vpop.f32.mrb[0].mxu0
  %v4585 = vpop.f32.mrb[0].mxu0
  %4586 = vdwg.mxu0
  %4587 = vmatprep.subr.bf16.mxu0 %v4451
  %4588 = vmatpush1.bf16.msra.mxu0 %v4450
  %4589 = vmatprep.subr.bf16.mxu0 %v4453
  %4590 = vmatpush1.bf16.msra.mxu0 %v4452
  %4591 = vmatprep.subr.bf16.mxu0 %v4455
  %4592 = vmatpush1.bf16.msra.mxu0 %v4454
  %4593 = vmatprep.subr.bf16.mxu0 %v4457
  %4594 = vmatpush1.bf16.msra.mxu0 %v4456
  %4595 = vmatprep.subr.bf16.mxu0 %v4459
  %4596 = vmatpush1.bf16.msra.mxu0 %v4458
  %4597 = vmatprep.subr.bf16.mxu0 %v4461
  %4598 = vmatpush1.bf16.msra.mxu0 %v4460
  %4599 = vmatprep.subr.bf16.mxu0 %v4463
  %4600 = vmatpush1.bf16.msra.mxu0 %v4462
  %4601 = vmatprep.subr.bf16.mxu0 %v4465
  %4602 = vmatpush1.bf16.msra.mxu0 %v4464
  %4603 = vmatprep.subr.bf16.mxu0 %v4467
  %4604 = vmatpush1.bf16.msra.mxu0 %v4466
  %4605 = vmatprep.subr.bf16.mxu0 %v4469
  %4606 = vmatpush1.bf16.msra.mxu0 %v4468
  %4607 = vmatprep.subr.bf16.mxu0 %v4471
  %4608 = vmatpush1.bf16.msra.mxu0 %v4470
  %4609 = vmatprep.subr.bf16.mxu0 %v4473
  %4610 = vmatpush1.bf16.msra.mxu0 %v4472
  %4611 = vmatprep.subr.bf16.mxu0 %v4475
  %4612 = vmatpush1.bf16.msra.mxu0 %v4474
  %4613 = vmatprep.subr.bf16.mxu0 %v4477
  %4614 = vmatpush1.bf16.msra.mxu0 %v4476
  %4615 = vmatprep.subr.bf16.mxu0 %v4479
  %4616 = vmatpush1.bf16.msra.mxu0 %v4478
  %4617 = vmatprep.subr.bf16.mxu0 %v4481
  %4618 = vmatpush1.bf16.msra.mxu0 %v4480
  %4619 = vmatprep.mubr.bf16.mxu0 %v4149
  %4620 = vmatmul.mubr.bf16.gmra.mrb[0].mxu0 %v4148
  %v4621 = vpop.f32.mrb[0].mxu0
  %v4622 = vadd.f32 %v4581, %v4621
  %v4623 = vpop.f32.mrb[0].mxu0
  %v4624 = vadd.f32 %v4583, %v4623
  %v4625 = vpop.f32.mrb[0].mxu0
  %v4626 = vpop.f32.mrb[0].mxu0
  %4627 = vdwg.mxu0
  %v4628 = vmax.f32 %v4622, 0.0
  %v4629 = vmax.f32 %v4624, 0.0
  %v4630 = vpack.c.bf16 %v4628, %v4628
  %v4631 = vpack.c.bf16 %v4629, %v4629
  %v4632 = vld [vmem:[%s11] sm:$0xf]
  %v4633 = vld [vmem:[%s11 + $0x4] sm:$0xf]
  %v4634 = vld [vmem:[%s11 + $0x8] sm:$0xf]
  %v4635 = vld [vmem:[%s11 + $0xc] sm:$0xf]
  %v4636 = vld [vmem:[%s11 + $0x10] sm:$0xf]
  %v4637 = vld [vmem:[%s11 + $0x14] sm:$0xf]
  %v4638 = vld [vmem:[%s11 + $0x18] sm:$0xf]
  %v4639 = vld [vmem:[%s11 + $0x1c] sm:$0xf]
  %v4640 = vld [vmem:[%s11 + $0x20] sm:$0xf]
  %v4641 = vld [vmem:[%s11 + $0x24] sm:$0xf]
  %v4642 = vld [vmem:[%s11 + $0x28] sm:$0xf]
  %v4643 = vld [vmem:[%s11 + $0x2c] sm:$0xf]
  %v4644 = vld [vmem:[%s11 + $0x30] sm:$0xf]
  %v4645 = vld [vmem:[%s11 + $0x34] sm:$0xf]
  %v4646 = vld [vmem:[%s11 + $0x38] sm:$0xf]
  %v4647 = vld [vmem:[%s11 + $0x3c] sm:$0xf]
  %v4648 = vld [vmem:[%s11 + $0x40] sm:$0xf]
  %v4649 = vld [vmem:[%s11 + $0x44] sm:$0xf]
  %v4650 = vld [vmem:[%s11 + $0x48] sm:$0xf]
  %v4651 = vld [vmem:[%s11 + $0x4c] sm:$0xf]
  %v4652 = vld [vmem:[%s11 + $0x50] sm:$0xf]
  %v4653 = vld [vmem:[%s11 + $0x54] sm:$0xf]
  %v4654 = vld [vmem:[%s11 + $0x58] sm:$0xf]
  %v4655 = vld [vmem:[%s11 + $0x5c] sm:$0xf]
  %v4656 = vld [vmem:[%s11 + $0x60] sm:$0xf]
  %v4657 = vld [vmem:[%s11 + $0x64] sm:$0xf]
  %v4658 = vld [vmem:[%s11 + $0x68] sm:$0xf]
  %v4659 = vld [vmem:[%s11 + $0x6c] sm:$0xf]
  %v4660 = vld [vmem:[%s11 + $0x70] sm:$0xf]
  %v4661 = vld [vmem:[%s11 + $0x74] sm:$0xf]
  %v4662 = vld [vmem:[%s11 + $0x78] sm:$0xf]
  %v4663 = vld [vmem:[%s11 + $0x7c] sm:$0xf]
  %v4664 = vld [vmem:[%s12] sm:$0x1]
  %v4666 = vlaneseq
  %v4667 = vshrl.u32 %v4666, 7
  %v4668 = vsub.s32 0, %v4667
  %v4669 = vrot.slane %v4664, %v4668
  %v4703 = vunpack.c.l.b16 %v4632
  %v4704 = vunpack.c.l.b16 %v4633
  %v4705 = vunpack.c.l.b16 %v4634
  %v4706 = vunpack.c.l.b16 %v4635
  %v4707 = vunpack.c.l.b16 %v4636
  %v4708 = vunpack.c.l.b16 %v4637
  %v4709 = vunpack.c.l.b16 %v4638
  %v4710 = vunpack.c.l.b16 %v4639
  %v4711 = vunpack.c.l.b16 %v4640
  %v4712 = vunpack.c.l.b16 %v4641
  %v4713 = vunpack.c.l.b16 %v4642
  %v4714 = vunpack.c.l.b16 %v4643
  %v4715 = vunpack.c.l.b16 %v4644
  %v4716 = vunpack.c.l.b16 %v4645
  %v4717 = vunpack.c.l.b16 %v4646
  %v4718 = vunpack.c.l.b16 %v4647
  %v4719 = vunpack.c.l.b16 %v4648
  %v4720 = vunpack.c.l.b16 %v4649
  %v4721 = vunpack.c.l.b16 %v4650
  %v4722 = vunpack.c.l.b16 %v4651
  %v4723 = vunpack.c.l.b16 %v4652
  %v4724 = vunpack.c.l.b16 %v4653
  %v4725 = vunpack.c.l.b16 %v4654
  %v4726 = vunpack.c.l.b16 %v4655
  %v4727 = vunpack.c.l.b16 %v4656
  %v4728 = vunpack.c.l.b16 %v4657
  %v4729 = vunpack.c.l.b16 %v4658
  %v4730 = vunpack.c.l.b16 %v4659
  %v4731 = vunpack.c.l.b16 %v4660
  %v4732 = vunpack.c.l.b16 %v4661
  %v4733 = vunpack.c.l.b16 %v4662
  %v4734 = vunpack.c.l.b16 %v4663
  %v4735 = vpack.c.b16 %v4704, %v4703
  %v4736 = vpack.c.b16 %v4706, %v4705
  %v4737 = vpack.c.b16 %v4708, %v4707
  %v4738 = vpack.c.b16 %v4710, %v4709
  %v4739 = vpack.c.b16 %v4712, %v4711
  %v4740 = vpack.c.b16 %v4714, %v4713
  %v4741 = vpack.c.b16 %v4716, %v4715
  %v4742 = vpack.c.b16 %v4718, %v4717
  %v4743 = vpack.c.b16 %v4720, %v4719
  %v4744 = vpack.c.b16 %v4722, %v4721
  %v4745 = vpack.c.b16 %v4724, %v4723
  %v4746 = vpack.c.b16 %v4726, %v4725
  %v4747 = vpack.c.b16 %v4728, %v4727
  %v4748 = vpack.c.b16 %v4730, %v4729
  %v4749 = vpack.c.b16 %v4732, %v4731
  %v4750 = vpack.c.b16 %v4734, %v4733
  %4767 = vmatprep.subr.bf16.mxu0 0
  %4768 = vmatpush1.bf16.msra.mxu0 %v4735
  %4769 = vmatprep.subr.bf16.mxu0 0
  %4770 = vmatpush1.bf16.msra.mxu0 %v4736
  %4771 = vmatprep.subr.bf16.mxu0 0
  %4772 = vmatpush1.bf16.msra.mxu0 %v4737
  %4773 = vmatprep.subr.bf16.mxu0 0
  %4774 = vmatpush1.bf16.msra.mxu0 %v4738
  %4775 = vmatprep.subr.bf16.mxu0 0
  %4776 = vmatpush1.bf16.msra.mxu0 %v4739
  %4777 = vmatprep.subr.bf16.mxu0 0
  %4778 = vmatpush1.bf16.msra.mxu0 %v4740
  %4779 = vmatprep.subr.bf16.mxu0 0
  %4780 = vmatpush1.bf16.msra.mxu0 %v4741
  %4781 = vmatprep.subr.bf16.mxu0 0
  %4782 = vmatpush1.bf16.msra.mxu0 %v4742
  %4783 = vmatprep.subr.bf16.mxu0 0
  %4784 = vmatpush1.bf16.msra.mxu0 %v4743
  %4785 = vmatprep.subr.bf16.mxu0 0
  %4786 = vmatpush1.bf16.msra.mxu0 %v4744
  %4787 = vmatprep.subr.bf16.mxu0 0
  %4788 = vmatpush1.bf16.msra.mxu0 %v4745
  %4789 = vmatprep.subr.bf16.mxu0 0
  %4790 = vmatpush1.bf16.msra.mxu0 %v4746
  %4791 = vmatprep.subr.bf16.mxu0 0
  %4792 = vmatpush1.bf16.msra.mxu0 %v4747
  %4793 = vmatprep.subr.bf16.mxu0 0
  %4794 = vmatpush1.bf16.msra.mxu0 %v4748
  %4795 = vmatprep.subr.bf16.mxu0 0
  %4796 = vmatpush1.bf16.msra.mxu0 %v4749
  %4797 = vmatprep.subr.bf16.mxu0 0
  %4798 = vmatpush1.bf16.msra.mxu0 %v4750
  %4799 = vmatprep.mubr.bf16.mxu0 %v4631
  %4800 = vmatmul.mubr.bf16.gmra.mrb[0].mxu0 %v4630
  %v4801 = vpop.f32.mrb[0].mxu0
  %v4802 = vadd.f32 %v4669, %v4801
  %v4803 = vpop.f32.mrb[0].mxu0
  %v4804 = vpop.f32.mrb[0].mxu0
  %v4805 = vpop.f32.mrb[0].mxu0
  %4806 = vdwg.mxu0
  %v4807 = vmax.f32 %v4802, 0.0
  %v4808 = vpack.c.bf16 %v4807, %v4807
  %v4809 = vld [vmem:[%s13] sm:$0xf]
  %v4810 = vld [vmem:[%s13 + $0x4] sm:$0xf]
  %v4811 = vld [vmem:[%s13 + $0x8] sm:$0xf]
  %v4812 = vld [vmem:[%s13 + $0xc] sm:$0xf]
  %v4813 = vld [vmem:[%s13 + $0x10] sm:$0xf]
  %v4814 = vld [vmem:[%s13 + $0x14] sm:$0xf]
  %v4815 = vld [vmem:[%s13 + $0x18] sm:$0xf]
  %v4816 = vld [vmem:[%s13 + $0x1c] sm:$0xf]
  %v4817 = vld [vmem:[%s14] sm:$0x1]
  %v4819 = vlaneseq
  %v4820 = vshrl.u32 %v4819, 7
  %v4821 = vsub.s32 0, %v4820
  %v4822 = vrot.slane %v4817, %v4821
  %v4832 = vunpack.c.l.b16 %v4809
  %v4833 = vunpack.c.l.b16 %v4810
  %v4834 = vunpack.c.l.b16 %v4811
  %v4835 = vunpack.c.l.b16 %v4812
  %v4836 = vunpack.c.l.b16 %v4813
  %v4837 = vunpack.c.l.b16 %v4814
  %v4838 = vunpack.c.l.b16 %v4815
  %v4839 = vunpack.c.l.b16 %v4816
  %v4840 = vpack.c.b16 %v4833, %v4832
  %v4841 = vpack.c.b16 %v4835, %v4834
  %v4842 = vpack.c.b16 %v4837, %v4836
  %v4843 = vpack.c.b16 %v4839, %v4838
  %v4849 = vsel %vm240, %v4808, 0
  %4851 = vmatprep.subr.bf16.mxu0 0
  %4852 = vmatpush1.bf16.msra.mxu0 %v4840
  %4853 = vmatprep.subr.bf16.mxu0 0
  %4854 = vmatpush1.bf16.msra.mxu0 %v4841
  %4855 = vmatprep.subr.bf16.mxu0 0
  %4856 = vmatpush1.bf16.msra.mxu0 %v4842
  %4857 = vmatprep.subr.bf16.mxu0 0
  %4858 = vmatpush1.bf16.msra.mxu0 %v4843
  %4859 = vmatprep.subr.bf16.mxu0 0
  %4860 = vmatpush1.bf16.msra.mxu0 0
  %4861 = vmatprep.subr.bf16.mxu0 0
  %4862 = vmatpush1.bf16.msra.mxu0 0
  %4863 = vmatprep.subr.bf16.mxu0 0
  %4864 = vmatpush1.bf16.msra.mxu0 0
  %4865 = vmatprep.subr.bf16.mxu0 0
  %4866 = vmatpush1.bf16.msra.mxu0 0
  %4867 = vmatprep.subr.bf16.mxu0 0
  %4868 = vmatpush1.bf16.msra.mxu0 0
  %4869 = vmatprep.subr.bf16.mxu0 0
  %4870 = vmatpush1.bf16.msra.mxu0 0
  %4871 = vmatprep.subr.bf16.mxu0 0
  %4872 = vmatpush1.bf16.msra.mxu0 0
  %4873 = vmatprep.subr.bf16.mxu0 0
  %4874 = vmatpush1.bf16.msra.mxu0 0
  %4875 = vmatprep.subr.bf16.mxu0 0
  %4876 = vmatpush1.bf16.msra.mxu0 0
  %4877 = vmatprep.subr.bf16.mxu0 0
  %4878 = vmatpush1.bf16.msra.mxu0 0
  %4879 = vmatprep.subr.bf16.mxu0 0
  %4880 = vmatpush1.bf16.msra.mxu0 0
  %4881 = vmatprep.subr.bf16.mxu0 0
  %4882 = vmatpush1.bf16.msra.mxu0 0
  %4883 = vmatprep.mubr.bf16.mxu0 0
  %4884 = vmatmul.mubr.bf16.gmra.mrb[0].mxu0 %v4849
  %v4885 = vpop.f32.mrb[0].mxu0
  %v4886 = vadd.f32 %v4822, %v4885
  %v4887 = vpop.f32.mrb[0].mxu0
  %v4888 = vpop.f32.mrb[0].mxu0
  %v4889 = vpop.f32.mrb[0].mxu0
  %4890 = vdwg.mxu0
  %4891 = vst [vmem:[%s15] sm:$0xff] %v4886
  // Predicated region
  $region62: #{dqn3_forward.1} parent=0 // pred_check
    _
  $region63: #{dqn3_forward.1} parent=0 // pred_check_branch
    %4893 = sbr.rel (0) target = $region65
  $region64: #{dqn3_forward.1} parent=0 // pred_region
    _
  $region65: #{dqn3_forward.1} parent=0 // pred_fallthru
    _
  // Predicated region
  $region66: #{dqn3_forward.1} parent=0 // pred_check
    _
  $region67: #{dqn3_forward.1} parent=0 // pred_check_branch
    %4895 = sbr.rel (0) target = $region69
  $region68: #{dqn3_forward.1} parent=0 // pred_region
    _
  $region69: #{dqn3_forward.1} parent=0 // pred_fallthru
    _

</llo_original>
